<compile_context>
chip_gen: v5e
topology: v5e:2x2
jax: 0.10.0
libtpu: 0.0.40
codegen_flags: <defaults>
</compile_context>

<pallas_src>
import jax
import jax.numpy as jnp
from jax import lax
from jax.experimental import pallas as pl
from jax.experimental.pallas import tpu as pltpu


def _round_up(x, m):
    return ((x + m - 1) // m) * m


def _cdiv(a, b):
    return -(-a // b)


# ---------------------------------------------------------------------------
# Hardware / sizing helpers (host-side, best-effort).
# ---------------------------------------------------------------------------
def _vmem_capacity_bytes():
    try:
        return int(pltpu.get_tpu_info().vmem_capacity_bytes)
    except Exception:
        return 64 * 1024 * 1024  # conservative (v7x per-TC VMEM)


def _dual_tensorcore():
    """True on chips exposing two TensorCores per device (v4 / v5p / v7x)."""
    try:
        kind = jax.devices()[0].device_kind.lower()
    except Exception:
        return False
    return any(tag in kind for tag in ("v4", "v5p", "7"))


def _plan_tiles(B, T, Ep, Hp, L, weight_bytes):
    """Pick batch block BB, padded batch Bp, time chunk TC, padded T, vmem limit."""
    dual = _dual_tensorcore()
    cap = _vmem_capacity_bytes()
    budget = min(int(cap * 0.75), 100 * 1024 * 1024)
    G = 4 * Hp

    # Batch block: as large as possible (1 block on single-TC chips, 2 on
    # dual-TC chips), capped at the MXU height. 16-row multiple so bf16 blocks
    # are full native tiles.
    Bp0 = _round_up(max(B, 1), 16)
    n_blocks = max(2 if dual else 1, _cdiv(Bp0, 256))
    BB = min(_round_up(_cdiv(Bp0, n_blocks), 16), 256)
    n_blocks = _cdiv(Bp0, BB)
    Bp = n_blocks * BB

    # Weights/biases are double-buffered by default (constant index map so they
    # are only DMA'd once, but two buffers are allocated).
    w_resident = 2 * weight_bytes

    def resident(tc):
        x_blk = tc * BB * Ep * 2 * 2            # bf16 input block, double-buffered
        gx = tc * BB * G * 2                    # bf16 hoisted-gates scratch
        seq = tc * BB * Hp * 2                  # bf16 inter-layer sequence scratch
        outs = 2 * L * BB * Hp * 4 * 2          # f32 h/c output blocks
        return x_blk + gx + seq + outs + w_resident

    # Time chunk: start at full T, halve until the residents fit the budget.
    TC = max(T, 1)
    while TC > 8 and resident(TC) > budget:
        TC = _cdiv(TC, 2)
    Tp = _cdiv(T, TC) * TC

    vmem_limit = resident(TC)
    vmem_limit = vmem_limit + vmem_limit // 4 + (4 << 20)   # 25% + 4 MiB headroom
    vmem_limit = max(vmem_limit, 32 << 20)
    vmem_limit = min(vmem_limit, max(cap - (2 << 20), 16 << 20), 100 << 20)
    return BB, Bp, TC, Tp, int(vmem_limit)


# ---------------------------------------------------------------------------
# Fused multi-layer LSTM kernel (all layers, one batch block, one time chunk).
# ---------------------------------------------------------------------------
def _make_encoder_lstm_kernel(n_layers, T_total, TC, BB, Hp, G, needs_guard, unroll):
    """Ref order:
      x_ref (TC, BB, Ep) bf16,
      wih_0..wih_{L-1} (D_in_pad, G) bf16,
      whh_0..whh_{L-1} (Hp, G)      bf16,
      b_0..b_{L-1}     (1, G)       f32,
      h_out (L, BB, Hp) f32, c_out (L, BB, Hp) f32   (resident carry over T axis),
      gx_buf (TC, BB, G) bf16 scratch, seq_buf (TC, BB, Hp) bf16 scratch.
    """
    L = n_layers

    def _sigmoid(x):
        # sigmoid(x) = 0.5 * tanh(0.5 * x) + 0.5 : one EUP tanh + VPU fma
        return 0.5 * jnp.tanh(0.5 * x) + 0.5

    def kernel(*refs):
        x_ref = refs[0]
        wih_refs = refs[1:1 + L]
        whh_refs = refs[1 + L:1 + 2 * L]
        b_refs = refs[1 + 2 * L:1 + 3 * L]
        h_out_ref = refs[1 + 3 * L]
        c_out_ref = refs[2 + 3 * L]
        gx_buf = refs[3 + 3 * L]
        seq_buf = refs[4 + 3 * L]

        tc_idx = pl.program_id(1)
        chunk_base = tc_idx * TC

        # New batch block: zero-init the h/c carry (the output blocks are
        # resident in VMEM across the whole inner T-chunk axis).
        @pl.when(tc_idx == 0)
        def _():
            h_out_ref[...] = jnp.zeros_like(h_out_ref)
            c_out_ref[...] = jnp.zeros_like(c_out_ref)

        for l in range(L):
            # ---- Phase 1 (non-recurrent): hoisted x-path matmul for the chunk
            if l == 0:
                xs = x_ref[...]                    # (TC, BB, Ep) bf16
            else:
                xs = seq_buf[...]                  # (TC, BB, Hp) bf16
            d_in = xs.shape[-1]
            gx = jnp.dot(xs.reshape(TC * BB, d_in), wih_refs[l][...],
                         preferred_element_type=jnp.float32)
            gx_buf[...] = gx.reshape(TC, BB, G).astype(jnp.bfloat16)

            # ---- Phase 2 (recurrent): only h @ W_hh + gate math per step ----
            whh = whh_refs[l][...]                 # (Hp, G) bf16
            bias = b_refs[l][...]                  # (1, G)  f32 (f32 add in-step)
            write_seq = l < L - 1                  # last layer's sequence unused

            def step(t, carry):
                h, c = carry                       # (BB, Hp) f32
                gates = (gx_buf[t].astype(jnp.float32) + bias +
                         jnp.dot(h.astype(jnp.bfloat16), whh,
                                 preferred_element_type=jnp.float32))
                # Hp is a multiple of 128 -> lane-aligned gate slices.
                i_g = _sigmoid(gates[:, 0 * Hp:1 * Hp])
                f_g = _sigmoid(gates[:, 1 * Hp:2 * Hp])
                g_g = jnp.tanh(gates[:, 2 * Hp:3 * Hp])
                o_g = _sigmoid(gates[:, 3 * Hp:4 * Hp])
                c_new = f_g * c + i_g * g_g
                h_new = o_g * jnp.tanh(c_new)
                if needs_guard:
                    valid = (chunk_base + t) < T_total
                    c_new = jnp.where(valid, c_new, c)
                    h_new = jnp.where(valid, h_new, h)
                if write_seq:
                    seq_buf[t] = h_new.astype(jnp.bfloat16)
                return (h_new, c_new)

            h0 = h_out_ref[l]                      # carry from previous chunk
            c0 = c_out_ref[l]
            h_fin, c_fin = lax.fori_loop(0, TC, step, (h0, c0), unroll=unroll)
            h_out_ref[l] = h_fin
            c_out_ref[l] = c_fin

    return kernel


def _run_encoder_lstm(x_p, wihs, whhs, biases, n_layers, T, TC, BB, Hp, vmem_limit):
    """x_p: (Tp, Bp, Ep) bf16 padded time-major input. Returns (h, c): (L, Bp, Hp) f32."""
    Tp, Bp, Ep = x_p.shape
    G = 4 * Hp
    L = n_layers
    grid = (Bp // BB, Tp // TC)
    needs_guard = (Tp != T)
    # Moderate unroll: enough for scheduler overlap, small enough to avoid
    # vreg spills once BB is large.
    unroll = min(TC, 8) if BB <= 64 else min(TC, 2)

    kernel = _make_encoder_lstm_kernel(L, T, TC, BB, Hp, G, needs_guard, unroll)

    const_map = lambda b, t: (0, 0)
    in_specs = [pl.BlockSpec((TC, BB, Ep), lambda b, t: (t, b, 0))]
    for l in range(L):
        d_in_p = wihs[l].shape[0]
        in_specs.append(pl.BlockSpec((d_in_p, G), const_map))
    for _ in range(L):
        in_specs.append(pl.BlockSpec((Hp, G), const_map))
    for _ in range(L):
        in_specs.append(pl.BlockSpec((1, G), const_map))
    # TODO(synk): single-buffer the grid-invariant weight blocks once
    # pipeline_mode=pl.Buffered(1) is exercised in CI (reclaims a few MiB VMEM).

    out_specs = (
        pl.BlockSpec((L, BB, Hp), lambda b, t: (0, b, 0)),   # constant along T ->
        pl.BlockSpec((L, BB, Hp), lambda b, t: (0, b, 0)),   # resident h/c carry
    )
    out_shape = (
        jax.ShapeDtypeStruct((L, Bp, Hp), jnp.float32),
        jax.ShapeDtypeStruct((L, Bp, Hp), jnp.float32),
    )

    grid_spec = pltpu.PrefetchScalarGridSpec(
        num_scalar_prefetch=0,
        grid=grid,
        in_specs=in_specs,
        out_specs=out_specs,
        scratch_shapes=[
            pltpu.VMEM((TC, BB, G), jnp.bfloat16),    # hoisted gates_x (one chunk)
            pltpu.VMEM((TC, BB, Hp), jnp.bfloat16),   # inter-layer sequence (one chunk)
        ],
    )

    h_out, c_out = pl.pallas_call(
        kernel,
        out_shape=out_shape,
        grid_spec=grid_spec,
        compiler_params=pltpu.CompilerParams(
            dimension_semantics=("parallel", "arbitrary"),  # batch blocks // cores,
            vmem_limit_bytes=vmem_limit,                    # T-chunks carried serially
        ),
    )(x_p, *wihs, *whhs, *biases)
    return h_out, c_out


# ---------------------------------------------------------------------------
# Parameter init (PyTorch layout) and one-time packing to kernel layout.
# ---------------------------------------------------------------------------
def init_encoder_params(key, input_dim, emb_dim, hid_dim, n_layers):
    params = {}
    k_emb, key = jax.random.split(key)
    emb = jax.random.normal(k_emb, (input_dim, emb_dim), jnp.float32)
    emb = emb.at[0].set(0.0)  # padding_idx=0 row is zeroed at init in PyTorch
    params["embedding"] = emb

    bound = 1.0 / jnp.sqrt(hid_dim)  # PyTorch LSTM uniform(-1/sqrt(H), 1/sqrt(H))
    for layer in range(n_layers):
        d_in = emb_dim if layer == 0 else hid_dim
        keys = jax.random.split(jax.random.fold_in(key, layer), 4)
        params[f"w_ih_l{layer}"] = jax.random.uniform(
            keys[0], (4 * hid_dim, d_in), jnp.float32, -bound, bound)
        params[f"w_hh_l{layer}"] = jax.random.uniform(
            keys[1], (4 * hid_dim, hid_dim), jnp.float32, -bound, bound)
        params[f"b_ih_l{layer}"] = jax.random.uniform(
            keys[2], (4 * hid_dim,), jnp.float32, -bound, bound)
        params[f"b_hh_l{layer}"] = jax.random.uniform(
            keys[3], (4 * hid_dim,), jnp.float32, -bound, bound)
    return params


def pack_lstm_params(params, n_layers, emb_dim, hid_dim):
    """One-time transform: transpose, pad to lane-aligned gate blocks, cast to bf16.

    Gate k of layer l occupies columns [k*Hp, k*Hp + H) of a (D_in_pad, 4*Hp)
    weight; padded rows/cols are zero so padded lanes of h/c stay exactly zero.
    """
    H = hid_dim
    Hp = _round_up(hid_dim, 128)
    Ep = _round_up(emb_dim, 128)
    G = 4 * Hp
    wihs, whhs, biases = [], [], []
    for l in range(n_layers):
        d_in = emb_dim if l == 0 else hid_dim
        Dp = Ep if l == 0 else Hp
        w_ih = params[f"w_ih_l{l}"]                       # (4H, d_in)
        w_hh = params[f"w_hh_l{l}"]                       # (4H, H)
        b = params[f"b_ih_l{l}"] + params[f"b_hh_l{l}"]   # (4H,)
        wih_p = jnp.zeros((Dp, G), jnp.float32)
        whh_p = jnp.zeros((Hp, G), jnp.float32)
        b_p = jnp.zeros((1, G), jnp.float32)
        for k in range(4):  # PyTorch gate order [i, f, g, o]
            wih_p = wih_p.at[:d_in, k * Hp:k * Hp + H].set(w_ih[k * H:(k + 1) * H, :].T)
            whh_p = whh_p.at[:H, k * Hp:k * Hp + H].set(w_hh[k * H:(k + 1) * H, :].T)
            b_p = b_p.at[0, k * Hp:k * Hp + H].set(b[k * H:(k + 1) * H])
        wihs.append(wih_p.astype(jnp.bfloat16))
        whhs.append(whh_p.astype(jnp.bfloat16))
        biases.append(b_p)
    return {"wihs": wihs, "whhs": whhs, "biases": biases, "Hp": Hp, "Ep": Ep}


# ---------------------------------------------------------------------------
# Encoder forward: embedding + fused n_layers LSTM, returns (hidden, cell).
# ---------------------------------------------------------------------------
def encoder_forward(src, params, packed, n_layers, emb_dim, hid_dim):
    """src: (B, T) int32 token ids. Returns (hidden, cell), each (n_layers, B, H)."""
    B, T = src.shape
    Hp, Ep = packed["Hp"], packed["Ep"]
    wihs, whhs, biases = packed["wihs"], packed["whhs"], packed["biases"]

    weight_bytes = sum(int(w.size) * w.dtype.itemsize
                       for w in (wihs + whhs + biases))
    BB, Bp, TC, Tp, vmem_limit = _plan_tiles(B, T, Ep, Hp, n_layers, weight_bytes)

    # Embedding gather, time-major transpose, pad and cast to bf16 in one buffer.
    # TODO(synk): gather token rows inside the kernel (pl.Element row-gather with
    # scalar-prefetched ids) to avoid this extra HBM round trip.
    embedded = jnp.take(params["embedding"], src, axis=0)          # (B, T, E)
    x = jnp.transpose(embedded, (1, 0, 2)).astype(jnp.bfloat16)    # (T, B, E)
    x_p = jnp.zeros((Tp, Bp, Ep), jnp.bfloat16).at[:T, :B, :emb_dim].set(x)

    h_out, c_out = _run_encoder_lstm(
        x_p, wihs, whhs, biases, n_layers, T, TC, BB, Hp, vmem_limit)

    hidden = h_out[:, :B, :hid_dim]
    cell = c_out[:, :B, :hid_dim]
    # TODO(synk): inter-layer dropout in nn.LSTM is training-only; eval-mode
    # forward (no dropout) is implemented here.
    return hidden, cell


# ---------------------------------------------------------------------------
# Pure-JAX reference (f32) for correctness checking.
# ---------------------------------------------------------------------------
def encoder_reference(src, params, n_layers, hid_dim):
    H = hid_dim
    x = jnp.take(params["embedding"], src, axis=0)   # (B, T, E)
    B, T, _ = x.shape
    x = jnp.transpose(x, (1, 0, 2))                  # (T, B, E)
    hiddens, cells = [], []
    for l in range(n_layers):
        w_ih = params[f"w_ih_l{l}"]
        w_hh = params[f"w_hh_l{l}"]
        b = params[f"b_ih_l{l}"] + params[f"b_hh_l{l}"]
        h = jnp.zeros((B, H), jnp.float32)
        c = jnp.zeros((B, H), jnp.float32)
        outs = []
        for t in range(T):
            g = x[t] @ w_ih.T + h @ w_hh.T + b
            i_g = jax.nn.sigmoid(g[:, 0:H])
            f_g = jax.nn.sigmoid(g[:, H:2 * H])
            g_g = jnp.tanh(g[:, 2 * H:3 * H])
            o_g = jax.nn.sigmoid(g[:, 3 * H:4 * H])
            c = f_g * c + i_g * g_g
            h = o_g * jnp.tanh(c)
            outs.append(h)
        x = jnp.stack(outs, 0)
        hiddens.append(h)
        cells.append(c)
    return jnp.stack(hiddens, 0), jnp.stack(cells, 0)


if __name__ == "__main__":
    INPUT_DIM = 20    # vocab size
    EMB_DIM = 16
    HID_DIM = 32
    N_LAYERS = 2
    BATCH = 2
    SEQ = 8

    key = jax.random.PRNGKey(0)
    k_params, k_src = jax.random.split(key)
    params = init_encoder_params(k_params, INPUT_DIM, EMB_DIM, HID_DIM, N_LAYERS)
    packed = pack_lstm_params(params, N_LAYERS, EMB_DIM, HID_DIM)  # once, not per call
    src = jax.random.randint(k_src, (BATCH, SEQ), 0, INPUT_DIM, dtype=jnp.int32)

    hidden, cell = encoder_forward(src, params, packed, N_LAYERS, EMB_DIM, HID_DIM)
    jax.block_until_ready((hidden, cell))

    assert hidden.shape == (N_LAYERS, BATCH, HID_DIM)
    assert cell.shape == (N_LAYERS, BATCH, HID_DIM)

    # Check against pure-f32 reference (bf16 weights / inputs / gate scratch on
    # the MXU path -> loose tolerance).
    h_ref, c_ref = encoder_reference(src, params, N_LAYERS, HID_DIM)
    assert jnp.allclose(hidden, h_ref, atol=6e-2, rtol=6e-2), "hidden mismatch"
    assert jnp.allclose(cell, c_ref, atol=6e-2, rtol=6e-2), "cell mismatch"

    print("KERNEL_OK")
</pallas_src>

<mosaic_0001>
module attributes {stable_mosaic.version = 11 : i64} {
  func.func @kernel(%arg0: i32, %arg1: i32, %arg2: memref<8x16x128xbf16, #tpu.memory_space<vmem>>, %arg3: memref<128x512xbf16, #tpu.memory_space<vmem>>, %arg4: memref<128x512xbf16, #tpu.memory_space<vmem>>, %arg5: memref<128x512xbf16, #tpu.memory_space<vmem>>, %arg6: memref<128x512xbf16, #tpu.memory_space<vmem>>, %arg7: memref<1x512xf32, #tpu.memory_space<vmem>>, %arg8: memref<1x512xf32, #tpu.memory_space<vmem>>, %arg9: memref<2x16x128xf32, #tpu.memory_space<vmem>>, %arg10: memref<2x16x128xf32, #tpu.memory_space<vmem>>, %arg11: memref<8x16x512xbf16, #tpu.memory_space<vmem>>, %arg12: memref<8x16x128xbf16, #tpu.memory_space<vmem>>) attributes {dimension_semantics = [#tpu.dimension_semantics<parallel>, #tpu.dimension_semantics<arbitrary>], iteration_bounds = array<i64: 1, 1>, scalar_prefetch = 0 : i64, scratch_operands = 2 : i64, tpu.core_type = #tpu.core_type<tc>, window_params = [{transform_indices = @transform_0, window_bounds = array<i64: 8, 16, 128>}, {pipeline_mode = #tpu.pipeline_mode<synchronous>, transform_indices = @transform_1, window_bounds = array<i64: 128, 512>}, {pipeline_mode = #tpu.pipeline_mode<synchronous>, transform_indices = @transform_2, window_bounds = array<i64: 128, 512>}, {pipeline_mode = #tpu.pipeline_mode<synchronous>, transform_indices = @transform_3, window_bounds = array<i64: 128, 512>}, {pipeline_mode = #tpu.pipeline_mode<synchronous>, transform_indices = @transform_4, window_bounds = array<i64: 128, 512>}, {pipeline_mode = #tpu.pipeline_mode<synchronous>, transform_indices = @transform_5, window_bounds = array<i64: 1, 512>}, {pipeline_mode = #tpu.pipeline_mode<synchronous>, transform_indices = @transform_6, window_bounds = array<i64: 1, 512>}, {transform_indices = @transform_7, window_bounds = array<i64: 2, 16, 128>}, {transform_indices = @transform_8, window_bounds = array<i64: 2, 16, 128>}]} {
    %c0_i32 = arith.constant 0 : i32
    %0 = arith.cmpi eq, %arg1, %c0_i32 : i32
    %1 = arith.extui %0 : i1 to i32
    %c0_i32_0 = arith.constant 0 : i32
    %2 = arith.cmpi ne, %1, %c0_i32_0 : i32
    scf.if %2 {
      %cst_266 = arith.constant 0.000000e+00 : f32
      %721 = vector.broadcast %cst_266 : f32 to vector<2x16x128xf32>
      %c0_267 = arith.constant 0 : index
      %c0_268 = arith.constant 0 : index
      %c0_269 = arith.constant 0 : index
      %722 = vector.load %arg9[%c0_267, %c0_268, %c0_269] : memref<2x16x128xf32, #tpu.memory_space<vmem>>, vector<2x16x128xf32>
      tpu.vector_store %arg9[%c0_267, %c0_268, %c0_269], %721 {strides = array<i32>} : memref<2x16x128xf32, #tpu.memory_space<vmem>>, vector<2x16x128xf32>,
      %cst_270 = arith.constant 0.000000e+00 : f32
      %723 = vector.broadcast %cst_270 : f32 to vector<2x16x128xf32>
      %c0_271 = arith.constant 0 : index
      %c0_272 = arith.constant 0 : index
      %c0_273 = arith.constant 0 : index
      %724 = vector.load %arg10[%c0_271, %c0_272, %c0_273] : memref<2x16x128xf32, #tpu.memory_space<vmem>>, vector<2x16x128xf32>
      tpu.vector_store %arg10[%c0_271, %c0_272, %c0_273], %723 {strides = array<i32>} : memref<2x16x128xf32, #tpu.memory_space<vmem>>, vector<2x16x128xf32>,
    } else {
    }
    %c0 = arith.constant 0 : index
    %c0_1 = arith.constant 0 : index
    %c0_2 = arith.constant 0 : index
    %3 = vector.load %arg2[%c0, %c0_1, %c0_2] : memref<8x16x128xbf16, #tpu.memory_space<vmem>>, vector<8x16x128xbf16>
    %4 = vector.shape_cast %3 : vector<8x16x128xbf16> to vector<128x128xbf16>
    %c0_3 = arith.constant 0 : index
    %c0_4 = arith.constant 0 : index
    %5 = vector.load %arg3[%c0_3, %c0_4] : memref<128x512xbf16, #tpu.memory_space<vmem>>, vector<128x512xbf16>
    %cst = arith.constant dense<0.000000e+00> : vector<128x512xf32>
    %6 = tpu.matmul %4, %5, %cst {dimension_numbers = #tpu.dot_dimension_numbers<[1], [0], [0], [1], [0, 0, 1, 1], [], []>} : vector<128x128xbf16>, vector<128x512xbf16>, vector<128x512xf32> -> vector<128x512xf32>
    %7 = vector.shape_cast %6 : vector<128x512xf32> to vector<8x16x512xf32>
    %8 = arith.truncf %7 : vector<8x16x512xf32> to vector<8x16x512xbf16>
    %c0_5 = arith.constant 0 : index
    %c0_6 = arith.constant 0 : index
    %c0_7 = arith.constant 0 : index
    %9 = vector.load %arg11[%c0_5, %c0_6, %c0_7] : memref<8x16x512xbf16, #tpu.memory_space<vmem>>, vector<8x16x512xbf16>
    tpu.vector_store %arg11[%c0_5, %c0_6, %c0_7], %8 {strides = array<i32>} : memref<8x16x512xbf16, #tpu.memory_space<vmem>>, vector<8x16x512xbf16>,
    %c0_8 = arith.constant 0 : index
    %c0_9 = arith.constant 0 : index
    %10 = vector.load %arg5[%c0_8, %c0_9] : memref<128x512xbf16, #tpu.memory_space<vmem>>, vector<128x512xbf16>
    %c0_10 = arith.constant 0 : index
    %c0_11 = arith.constant 0 : index
    %11 = vector.load %arg7[%c0_10, %c0_11] : memref<1x512xf32, #tpu.memory_space<vmem>>, vector<1x512xf32>
    %c0_12 = arith.constant 0 : index
    %c0_13 = arith.constant 0 : index
    %c0_14 = arith.constant 0 : index
    %12 = vector.load %arg9[%c0_12, %c0_13, %c0_14] : memref<2x16x128xf32, #tpu.memory_space<vmem>>, vector<1x16x128xf32>
    %13 = vector.shape_cast %12 : vector<1x16x128xf32> to vector<16x128xf32>
    %c0_15 = arith.constant 0 : index
    %c0_16 = arith.constant 0 : index
    %c0_17 = arith.constant 0 : index
    %14 = vector.load %arg10[%c0_15, %c0_16, %c0_17] : memref<2x16x128xf32, #tpu.memory_space<vmem>>, vector<1x16x128xf32>
    %15 = vector.shape_cast %14 : vector<1x16x128xf32> to vector<16x128xf32>
    %c0_i32_18 = arith.constant 0 : i32
    %16 = arith.index_cast %c0_i32_18 : i32 to index
    %c0_19 = arith.constant 0 : index
    %c0_20 = arith.constant 0 : index
    %17 = vector.load %arg11[%16, %c0_19, %c0_20] : memref<8x16x512xbf16, #tpu.memory_space<vmem>>, vector<1x16x512xbf16>
    %18 = vector.shape_cast %17 : vector<1x16x512xbf16> to vector<16x512xbf16>
    %19 = arith.extf %18 : vector<16x512xbf16> to vector<16x512xf32>
    %20 = vector.broadcast %11 : vector<1x512xf32> to vector<16x512xf32>
    %21 = arith.addf %19, %20 : vector<16x512xf32>
    %22 = arith.truncf %13 : vector<16x128xf32> to vector<16x128xbf16>
    %cst_21 = arith.constant dense<0.000000e+00> : vector<16x512xf32>
    %23 = tpu.matmul %22, %10, %cst_21 {dimension_numbers = #tpu.dot_dimension_numbers<[1], [0], [0], [1], [0, 0, 1, 1], [], []>} : vector<16x128xbf16>, vector<128x512xbf16>, vector<16x512xf32> -> vector<16x512xf32>
    %24 = arith.addf %21, %23 : vector<16x512xf32>
    %25 = vector.extract_strided_slice %24 {offsets = [0, 0], sizes = [16, 128], strides = [1, 1]} : vector<16x512xf32> to vector<16x128xf32>
    %cst_22 = arith.constant 5.000000e-01 : f32
    %26 = vector.broadcast %cst_22 : f32 to vector<16x128xf32>
    %27 = arith.mulf %26, %25 : vector<16x128xf32>
    %28 = math.tanh %27 : vector<16x128xf32>
    %cst_23 = arith.constant 5.000000e-01 : f32
    %29 = vector.broadcast %cst_23 : f32 to vector<16x128xf32>
    %30 = arith.mulf %29, %28 : vector<16x128xf32>
    %cst_24 = arith.constant 5.000000e-01 : f32
    %31 = vector.broadcast %cst_24 : f32 to vector<16x128xf32>
    %32 = arith.addf %30, %31 : vector<16x128xf32>
    %33 = vector.extract_strided_slice %24 {offsets = [0, 128], sizes = [16, 128], strides = [1, 1]} : vector<16x512xf32> to vector<16x128xf32>
    %cst_25 = arith.constant 5.000000e-01 : f32
    %34 = vector.broadcast %cst_25 : f32 to vector<16x128xf32>
    %35 = arith.mulf %34, %33 : vector<16x128xf32>
    %36 = math.tanh %35 : vector<16x128xf32>
    %cst_26 = arith.constant 5.000000e-01 : f32
    %37 = vector.broadcast %cst_26 : f32 to vector<16x128xf32>
    %38 = arith.mulf %37, %36 : vector<16x128xf32>
    %cst_27 = arith.constant 5.000000e-01 : f32
    %39 = vector.broadcast %cst_27 : f32 to vector<16x128xf32>
    %40 = arith.addf %38, %39 : vector<16x128xf32>
    %41 = vector.extract_strided_slice %24 {offsets = [0, 256], sizes = [16, 128], strides = [1, 1]} : vector<16x512xf32> to vector<16x128xf32>
    %42 = math.tanh %41 : vector<16x128xf32>
    %43 = vector.extract_strided_slice %24 {offsets = [0, 384], sizes = [16, 128], strides = [1, 1]} : vector<16x512xf32> to vector<16x128xf32>
    %cst_28 = arith.constant 5.000000e-01 : f32
    %44 = vector.broadcast %cst_28 : f32 to vector<16x128xf32>
    %45 = arith.mulf %44, %43 : vector<16x128xf32>
    %46 = math.tanh %45 : vector<16x128xf32>
    %cst_29 = arith.constant 5.000000e-01 : f32
    %47 = vector.broadcast %cst_29 : f32 to vector<16x128xf32>
    %48 = arith.mulf %47, %46 : vector<16x128xf32>
    %cst_30 = arith.constant 5.000000e-01 : f32
    %49 = vector.broadcast %cst_30 : f32 to vector<16x128xf32>
    %50 = arith.addf %48, %49 : vector<16x128xf32>
    %51 = arith.mulf %40, %15 : vector<16x128xf32>
    %52 = arith.mulf %32, %42 : vector<16x128xf32>
    %53 = arith.addf %51, %52 : vector<16x128xf32>
    %54 = math.tanh %53 : vector<16x128xf32>
    %55 = arith.mulf %50, %54 : vector<16x128xf32>
    %56 = arith.truncf %55 : vector<16x128xf32> to vector<16x128xbf16>
    %57 = arith.index_cast %c0_i32_18 : i32 to index
    %c0_31 = arith.constant 0 : index
    %c0_32 = arith.constant 0 : index
    %58 = vector.load %arg12[%57, %c0_31, %c0_32] : memref<8x16x128xbf16, #tpu.memory_space<vmem>>, vector<1x16x128xbf16>
    %59 = vector.shape_cast %58 : vector<1x16x128xbf16> to vector<16x128xbf16>
    %60 = vector.shape_cast %56 : vector<16x128xbf16> to vector<1x16x128xbf16>
    tpu.vector_store %arg12[%57, %c0_31, %c0_32], %60 {strides = array<i32>} : memref<8x16x128xbf16, #tpu.memory_space<vmem>>, vector<1x16x128xbf16>,
    %c1_i32 = arith.constant 1 : i32
    %61 = arith.index_cast %c1_i32 : i32 to index
    %c0_33 = arith.constant 0 : index
    %c0_34 = arith.constant 0 : index
    %62 = vector.load %arg11[%61, %c0_33, %c0_34] : memref<8x16x512xbf16, #tpu.memory_space<vmem>>, vector<1x16x512xbf16>
    %63 = vector.shape_cast %62 : vector<1x16x512xbf16> to vector<16x512xbf16>
    %64 = arith.extf %63 : vector<16x512xbf16> to vector<16x512xf32>
    %65 = vector.broadcast %11 : vector<1x512xf32> to vector<16x512xf32>
    %66 = arith.addf %64, %65 : vector<16x512xf32>
    %67 = arith.truncf %55 : vector<16x128xf32> to vector<16x128xbf16>
    %cst_35 = arith.constant dense<0.000000e+00> : vector<16x512xf32>
    %68 = tpu.matmul %67, %10, %cst_35 {dimension_numbers = #tpu.dot_dimension_numbers<[1], [0], [0], [1], [0, 0, 1, 1], [], []>} : vector<16x128xbf16>, vector<128x512xbf16>, vector<16x512xf32> -> vector<16x512xf32>
    %69 = arith.addf %66, %68 : vector<16x512xf32>
    %70 = vector.extract_strided_slice %69 {offsets = [0, 0], sizes = [16, 128], strides = [1, 1]} : vector<16x512xf32> to vector<16x128xf32>
    %cst_36 = arith.constant 5.000000e-01 : f32
    %71 = vector.broadcast %cst_36 : f32 to vector<16x128xf32>
    %72 = arith.mulf %71, %70 : vector<16x128xf32>
    %73 = math.tanh %72 : vector<16x128xf32>
    %cst_37 = arith.constant 5.000000e-01 : f32
    %74 = vector.broadcast %cst_37 : f32 to vector<16x128xf32>
    %75 = arith.mulf %74, %73 : vector<16x128xf32>
    %cst_38 = arith.constant 5.000000e-01 : f32
    %76 = vector.broadcast %cst_38 : f32 to vector<16x128xf32>
    %77 = arith.addf %75, %76 : vector<16x128xf32>
    %78 = vector.extract_strided_slice %69 {offsets = [0, 128], sizes = [16, 128], strides = [1, 1]} : vector<16x512xf32> to vector<16x128xf32>
    %cst_39 = arith.constant 5.000000e-01 : f32
    %79 = vector.broadcast %cst_39 : f32 to vector<16x128xf32>
    %80 = arith.mulf %79, %78 : vector<16x128xf32>
    %81 = math.tanh %80 : vector<16x128xf32>
    %cst_40 = arith.constant 5.000000e-01 : f32
    %82 = vector.broadcast %cst_40 : f32 to vector<16x128xf32>
    %83 = arith.mulf %82, %81 : vector<16x128xf32>
    %cst_41 = arith.constant 5.000000e-01 : f32
    %84 = vector.broadcast %cst_41 : f32 to vector<16x128xf32>
    %85 = arith.addf %83, %84 : vector<16x128xf32>
    %86 = vector.extract_strided_slice %69 {offsets = [0, 256], sizes = [16, 128], strides = [1, 1]} : vector<16x512xf32> to vector<16x128xf32>
    %87 = math.tanh %86 : vector<16x128xf32>
    %88 = vector.extract_strided_slice %69 {offsets = [0, 384], sizes = [16, 128], strides = [1, 1]} : vector<16x512xf32> to vector<16x128xf32>
    %cst_42 = arith.constant 5.000000e-01 : f32
    %89 = vector.broadcast %cst_42 : f32 to vector<16x128xf32>
    %90 = arith.mulf %89, %88 : vector<16x128xf32>
    %91 = math.tanh %90 : vector<16x128xf32>
    %cst_43 = arith.constant 5.000000e-01 : f32
    %92 = vector.broadcast %cst_43 : f32 to vector<16x128xf32>
    %93 = arith.mulf %92, %91 : vector<16x128xf32>
    %cst_44 = arith.constant 5.000000e-01 : f32
    %94 = vector.broadcast %cst_44 : f32 to vector<16x128xf32>
    %95 = arith.addf %93, %94 : vector<16x128xf32>
    %96 = arith.mulf %85, %53 : vector<16x128xf32>
    %97 = arith.mulf %77, %87 : vector<16x128xf32>
    %98 = arith.addf %96, %97 : vector<16x128xf32>
    %99 = math.tanh %98 : vector<16x128xf32>
    %100 = arith.mulf %95, %99 : vector<16x128xf32>
    %101 = arith.truncf %100 : vector<16x128xf32> to vector<16x128xbf16>
    %102 = arith.index_cast %c1_i32 : i32 to index
    %c0_45 = arith.constant 0 : index
    %c0_46 = arith.constant 0 : index
    %103 = vector.load %arg12[%102, %c0_45, %c0_46] : memref<8x16x128xbf16, #tpu.memory_space<vmem>>, vector<1x16x128xbf16>
    %104 = vector.shape_cast %103 : vector<1x16x128xbf16> to vector<16x128xbf16>
    %105 = vector.shape_cast %101 : vector<16x128xbf16> to vector<1x16x128xbf16>
    tpu.vector_store %arg12[%102, %c0_45, %c0_46], %105 {strides = array<i32>} : memref<8x16x128xbf16, #tpu.memory_space<vmem>>, vector<1x16x128xbf16>,
    %c2_i32 = arith.constant 2 : i32
    %106 = arith.index_cast %c2_i32 : i32 to index
    %c0_47 = arith.constant 0 : index
    %c0_48 = arith.constant 0 : index
    %107 = vector.load %arg11[%106, %c0_47, %c0_48] : memref<8x16x512xbf16, #tpu.memory_space<vmem>>, vector<1x16x512xbf16>
    %108 = vector.shape_cast %107 : vector<1x16x512xbf16> to vector<16x512xbf16>
    %109 = arith.extf %108 : vector<16x512xbf16> to vector<16x512xf32>
    %110 = vector.broadcast %11 : vector<1x512xf32> to vector<16x512xf32>
    %111 = arith.addf %109, %110 : vector<16x512xf32>
    %112 = arith.truncf %100 : vector<16x128xf32> to vector<16x128xbf16>
    %cst_49 = arith.constant dense<0.000000e+00> : vector<16x512xf32>
    %113 = tpu.matmul %112, %10, %cst_49 {dimension_numbers = #tpu.dot_dimension_numbers<[1], [0], [0], [1], [0, 0, 1, 1], [], []>} : vector<16x128xbf16>, vector<128x512xbf16>, vector<16x512xf32> -> vector<16x512xf32>
    %114 = arith.addf %111, %113 : vector<16x512xf32>
    %115 = vector.extract_strided_slice %114 {offsets = [0, 0], sizes = [16, 128], strides = [1, 1]} : vector<16x512xf32> to vector<16x128xf32>
    %cst_50 = arith.constant 5.000000e-01 : f32
    %116 = vector.broadcast %cst_50 : f32 to vector<16x128xf32>
    %117 = arith.mulf %116, %115 : vector<16x128xf32>
    %118 = math.tanh %117 : vector<16x128xf32>
    %cst_51 = arith.constant 5.000000e-01 : f32
    %119 = vector.broadcast %cst_51 : f32 to vector<16x128xf32>
    %120 = arith.mulf %119, %118 : vector<16x128xf32>
    %cst_52 = arith.constant 5.000000e-01 : f32
    %121 = vector.broadcast %cst_52 : f32 to vector<16x128xf32>
    %122 = arith.addf %120, %121 : vector<16x128xf32>
    %123 = vector.extract_strided_slice %114 {offsets = [0, 128], sizes = [16, 128], strides = [1, 1]} : vector<16x512xf32> to vector<16x128xf32>
    %cst_53 = arith.constant 5.000000e-01 : f32
    %124 = vector.broadcast %cst_53 : f32 to vector<16x128xf32>
    %125 = arith.mulf %124, %123 : vector<16x128xf32>
    %126 = math.tanh %125 : vector<16x128xf32>
    %cst_54 = arith.constant 5.000000e-01 : f32
    %127 = vector.broadcast %cst_54 : f32 to vector<16x128xf32>
    %128 = arith.mulf %127, %126 : vector<16x128xf32>
    %cst_55 = arith.constant 5.000000e-01 : f32
    %129 = vector.broadcast %cst_55 : f32 to vector<16x128xf32>
    %130 = arith.addf %128, %129 : vector<16x128xf32>
    %131 = vector.extract_strided_slice %114 {offsets = [0, 256], sizes = [16, 128], strides = [1, 1]} : vector<16x512xf32> to vector<16x128xf32>
    %132 = math.tanh %131 : vector<16x128xf32>
    %133 = vector.extract_strided_slice %114 {offsets = [0, 384], sizes = [16, 128], strides = [1, 1]} : vector<16x512xf32> to vector<16x128xf32>
    %cst_56 = arith.constant 5.000000e-01 : f32
    %134 = vector.broadcast %cst_56 : f32 to vector<16x128xf32>
    %135 = arith.mulf %134, %133 : vector<16x128xf32>
    %136 = math.tanh %135 : vector<16x128xf32>
    %cst_57 = arith.constant 5.000000e-01 : f32
    %137 = vector.broadcast %cst_57 : f32 to vector<16x128xf32>
    %138 = arith.mulf %137, %136 : vector<16x128xf32>
    %cst_58 = arith.constant 5.000000e-01 : f32
    %139 = vector.broadcast %cst_58 : f32 to vector<16x128xf32>
    %140 = arith.addf %138, %139 : vector<16x128xf32>
    %141 = arith.mulf %130, %98 : vector<16x128xf32>
    %142 = arith.mulf %122, %132 : vector<16x128xf32>
    %143 = arith.addf %141, %142 : vector<16x128xf32>
    %144 = math.tanh %143 : vector<16x128xf32>
    %145 = arith.mulf %140, %144 : vector<16x128xf32>
    %146 = arith.truncf %145 : vector<16x128xf32> to vector<16x128xbf16>
    %147 = arith.index_cast %c2_i32 : i32 to index
    %c0_59 = arith.constant 0 : index
    %c0_60 = arith.constant 0 : index
    %148 = vector.load %arg12[%147, %c0_59, %c0_60] : memref<8x16x128xbf16, #tpu.memory_space<vmem>>, vector<1x16x128xbf16>
    %149 = vector.shape_cast %148 : vector<1x16x128xbf16> to vector<16x128xbf16>
    %150 = vector.shape_cast %146 : vector<16x128xbf16> to vector<1x16x128xbf16>
    tpu.vector_store %arg12[%147, %c0_59, %c0_60], %150 {strides = array<i32>} : memref<8x16x128xbf16, #tpu.memory_space<vmem>>, vector<1x16x128xbf16>,
    %c3_i32 = arith.constant 3 : i32
    %151 = arith.index_cast %c3_i32 : i32 to index
    %c0_61 = arith.constant 0 : index
    %c0_62 = arith.constant 0 : index
    %152 = vector.load %arg11[%151, %c0_61, %c0_62] : memref<8x16x512xbf16, #tpu.memory_space<vmem>>, vector<1x16x512xbf16>
    %153 = vector.shape_cast %152 : vector<1x16x512xbf16> to vector<16x512xbf16>
    %154 = arith.extf %153 : vector<16x512xbf16> to vector<16x512xf32>
    %155 = vector.broadcast %11 : vector<1x512xf32> to vector<16x512xf32>
    %156 = arith.addf %154, %155 : vector<16x512xf32>
    %157 = arith.truncf %145 : vector<16x128xf32> to vector<16x128xbf16>
    %cst_63 = arith.constant dense<0.000000e+00> : vector<16x512xf32>
    %158 = tpu.matmul %157, %10, %cst_63 {dimension_numbers = #tpu.dot_dimension_numbers<[1], [0], [0], [1], [0, 0, 1, 1], [], []>} : vector<16x128xbf16>, vector<128x512xbf16>, vector<16x512xf32> -> vector<16x512xf32>
    %159 = arith.addf %156, %158 : vector<16x512xf32>
    %160 = vector.extract_strided_slice %159 {offsets = [0, 0], sizes = [16, 128], strides = [1, 1]} : vector<16x512xf32> to vector<16x128xf32>
    %cst_64 = arith.constant 5.000000e-01 : f32
    %161 = vector.broadcast %cst_64 : f32 to vector<16x128xf32>
    %162 = arith.mulf %161, %160 : vector<16x128xf32>
    %163 = math.tanh %162 : vector<16x128xf32>
    %cst_65 = arith.constant 5.000000e-01 : f32
    %164 = vector.broadcast %cst_65 : f32 to vector<16x128xf32>
    %165 = arith.mulf %164, %163 : vector<16x128xf32>
    %cst_66 = arith.constant 5.000000e-01 : f32
    %166 = vector.broadcast %cst_66 : f32 to vector<16x128xf32>
    %167 = arith.addf %165, %166 : vector<16x128xf32>
    %168 = vector.extract_strided_slice %159 {offsets = [0, 128], sizes = [16, 128], strides = [1, 1]} : vector<16x512xf32> to vector<16x128xf32>
    %cst_67 = arith.constant 5.000000e-01 : f32
    %169 = vector.broadcast %cst_67 : f32 to vector<16x128xf32>
    %170 = arith.mulf %169, %168 : vector<16x128xf32>
    %171 = math.tanh %170 : vector<16x128xf32>
    %cst_68 = arith.constant 5.000000e-01 : f32
    %172 = vector.broadcast %cst_68 : f32 to vector<16x128xf32>
    %173 = arith.mulf %172, %171 : vector<16x128xf32>
    %cst_69 = arith.constant 5.000000e-01 : f32
    %174 = vector.broadcast %cst_69 : f32 to vector<16x128xf32>
    %175 = arith.addf %173, %174 : vector<16x128xf32>
    %176 = vector.extract_strided_slice %159 {offsets = [0, 256], sizes = [16, 128], strides = [1, 1]} : vector<16x512xf32> to vector<16x128xf32>
    %177 = math.tanh %176 : vector<16x128xf32>
    %178 = vector.extract_strided_slice %159 {offsets = [0, 384], sizes = [16, 128], strides = [1, 1]} : vector<16x512xf32> to vector<16x128xf32>
    %cst_70 = arith.constant 5.000000e-01 : f32
    %179 = vector.broadcast %cst_70 : f32 to vector<16x128xf32>
    %180 = arith.mulf %179, %178 : vector<16x128xf32>
    %181 = math.tanh %180 : vector<16x128xf32>
    %cst_71 = arith.constant 5.000000e-01 : f32
    %182 = vector.broadcast %cst_71 : f32 to vector<16x128xf32>
    %183 = arith.mulf %182, %181 : vector<16x128xf32>
    %cst_72 = arith.constant 5.000000e-01 : f32
    %184 = vector.broadcast %cst_72 : f32 to vector<16x128xf32>
    %185 = arith.addf %183, %184 : vector<16x128xf32>
    %186 = arith.mulf %175, %143 : vector<16x128xf32>
    %187 = arith.mulf %167, %177 : vector<16x128xf32>
    %188 = arith.addf %186, %187 : vector<16x128xf32>
    %189 = math.tanh %188 : vector<16x128xf32>
    %190 = arith.mulf %185, %189 : vector<16x128xf32>
    %191 = arith.truncf %190 : vector<16x128xf32> to vector<16x128xbf16>
    %192 = arith.index_cast %c3_i32 : i32 to index
    %c0_73 = arith.constant 0 : index
    %c0_74 = arith.constant 0 : index
    %193 = vector.load %arg12[%192, %c0_73, %c0_74] : memref<8x16x128xbf16, #tpu.memory_space<vmem>>, vector<1x16x128xbf16>
    %194 = vector.shape_cast %193 : vector<1x16x128xbf16> to vector<16x128xbf16>
    %195 = vector.shape_cast %191 : vector<16x128xbf16> to vector<1x16x128xbf16>
    tpu.vector_store %arg12[%192, %c0_73, %c0_74], %195 {strides = array<i32>} : memref<8x16x128xbf16, #tpu.memory_space<vmem>>, vector<1x16x128xbf16>,
    %c4_i32 = arith.constant 4 : i32
    %196 = arith.index_cast %c4_i32 : i32 to index
    %c0_75 = arith.constant 0 : index
    %c0_76 = arith.constant 0 : index
    %197 = vector.load %arg11[%196, %c0_75, %c0_76] : memref<8x16x512xbf16, #tpu.memory_space<vmem>>, vector<1x16x512xbf16>
    %198 = vector.shape_cast %197 : vector<1x16x512xbf16> to vector<16x512xbf16>
    %199 = arith.extf %198 : vector<16x512xbf16> to vector<16x512xf32>
    %200 = vector.broadcast %11 : vector<1x512xf32> to vector<16x512xf32>
    %201 = arith.addf %199, %200 : vector<16x512xf32>
    %202 = arith.truncf %190 : vector<16x128xf32> to vector<16x128xbf16>
    %cst_77 = arith.constant dense<0.000000e+00> : vector<16x512xf32>
    %203 = tpu.matmul %202, %10, %cst_77 {dimension_numbers = #tpu.dot_dimension_numbers<[1], [0], [0], [1], [0, 0, 1, 1], [], []>} : vector<16x128xbf16>, vector<128x512xbf16>, vector<16x512xf32> -> vector<16x512xf32>
    %204 = arith.addf %201, %203 : vector<16x512xf32>
    %205 = vector.extract_strided_slice %204 {offsets = [0, 0], sizes = [16, 128], strides = [1, 1]} : vector<16x512xf32> to vector<16x128xf32>
    %cst_78 = arith.constant 5.000000e-01 : f32
    %206 = vector.broadcast %cst_78 : f32 to vector<16x128xf32>
    %207 = arith.mulf %206, %205 : vector<16x128xf32>
    %208 = math.tanh %207 : vector<16x128xf32>
    %cst_79 = arith.constant 5.000000e-01 : f32
    %209 = vector.broadcast %cst_79 : f32 to vector<16x128xf32>
    %210 = arith.mulf %209, %208 : vector<16x128xf32>
    %cst_80 = arith.constant 5.000000e-01 : f32
    %211 = vector.broadcast %cst_80 : f32 to vector<16x128xf32>
    %212 = arith.addf %210, %211 : vector<16x128xf32>
    %213 = vector.extract_strided_slice %204 {offsets = [0, 128], sizes = [16, 128], strides = [1, 1]} : vector<16x512xf32> to vector<16x128xf32>
    %cst_81 = arith.constant 5.000000e-01 : f32
    %214 = vector.broadcast %cst_81 : f32 to vector<16x128xf32>
    %215 = arith.mulf %214, %213 : vector<16x128xf32>
    %216 = math.tanh %215 : vector<16x128xf32>
    %cst_82 = arith.constant 5.000000e-01 : f32
    %217 = vector.broadcast %cst_82 : f32 to vector<16x128xf32>
    %218 = arith.mulf %217, %216 : vector<16x128xf32>
    %cst_83 = arith.constant 5.000000e-01 : f32
    %219 = vector.broadcast %cst_83 : f32 to vector<16x128xf32>
    %220 = arith.addf %218, %219 : vector<16x128xf32>
    %221 = vector.extract_strided_slice %204 {offsets = [0, 256], sizes = [16, 128], strides = [1, 1]} : vector<16x512xf32> to vector<16x128xf32>
    %222 = math.tanh %221 : vector<16x128xf32>
    %223 = vector.extract_strided_slice %204 {offsets = [0, 384], sizes = [16, 128], strides = [1, 1]} : vector<16x512xf32> to vector<16x128xf32>
    %cst_84 = arith.constant 5.000000e-01 : f32
    %224 = vector.broadcast %cst_84 : f32 to vector<16x128xf32>
    %225 = arith.mulf %224, %223 : vector<16x128xf32>
    %226 = math.tanh %225 : vector<16x128xf32>
    %cst_85 = arith.constant 5.000000e-01 : f32
    %227 = vector.broadcast %cst_85 : f32 to vector<16x128xf32>
    %228 = arith.mulf %227, %226 : vector<16x128xf32>
    %cst_86 = arith.constant 5.000000e-01 : f32
    %229 = vector.broadcast %cst_86 : f32 to vector<16x128xf32>
    %230 = arith.addf %228, %229 : vector<16x128xf32>
    %231 = arith.mulf %220, %188 : vector<16x128xf32>
    %232 = arith.mulf %212, %222 : vector<16x128xf32>
    %233 = arith.addf %231, %232 : vector<16x128xf32>
    %234 = math.tanh %233 : vector<16x128xf32>
    %235 = arith.mulf %230, %234 : vector<16x128xf32>
    %236 = arith.truncf %235 : vector<16x128xf32> to vector<16x128xbf16>
    %237 = arith.index_cast %c4_i32 : i32 to index
    %c0_87 = arith.constant 0 : index
    %c0_88 = arith.constant 0 : index
    %238 = vector.load %arg12[%237, %c0_87, %c0_88] : memref<8x16x128xbf16, #tpu.memory_space<vmem>>, vector<1x16x128xbf16>
    %239 = vector.shape_cast %238 : vector<1x16x128xbf16> to vector<16x128xbf16>
    %240 = vector.shape_cast %236 : vector<16x128xbf16> to vector<1x16x128xbf16>
    tpu.vector_store %arg12[%237, %c0_87, %c0_88], %240 {strides = array<i32>} : memref<8x16x128xbf16, #tpu.memory_space<vmem>>, vector<1x16x128xbf16>,
    %c5_i32 = arith.constant 5 : i32
    %241 = arith.index_cast %c5_i32 : i32 to index
    %c0_89 = arith.constant 0 : index
    %c0_90 = arith.constant 0 : index
    %242 = vector.load %arg11[%241, %c0_89, %c0_90] : memref<8x16x512xbf16, #tpu.memory_space<vmem>>, vector<1x16x512xbf16>
    %243 = vector.shape_cast %242 : vector<1x16x512xbf16> to vector<16x512xbf16>
    %244 = arith.extf %243 : vector<16x512xbf16> to vector<16x512xf32>
    %245 = vector.broadcast %11 : vector<1x512xf32> to vector<16x512xf32>
    %246 = arith.addf %244, %245 : vector<16x512xf32>
    %247 = arith.truncf %235 : vector<16x128xf32> to vector<16x128xbf16>
    %cst_91 = arith.constant dense<0.000000e+00> : vector<16x512xf32>
    %248 = tpu.matmul %247, %10, %cst_91 {dimension_numbers = #tpu.dot_dimension_numbers<[1], [0], [0], [1], [0, 0, 1, 1], [], []>} : vector<16x128xbf16>, vector<128x512xbf16>, vector<16x512xf32> -> vector<16x512xf32>
    %249 = arith.addf %246, %248 : vector<16x512xf32>
    %250 = vector.extract_strided_slice %249 {offsets = [0, 0], sizes = [16, 128], strides = [1, 1]} : vector<16x512xf32> to vector<16x128xf32>
    %cst_92 = arith.constant 5.000000e-01 : f32
    %251 = vector.broadcast %cst_92 : f32 to vector<16x128xf32>
    %252 = arith.mulf %251, %250 : vector<16x128xf32>
    %253 = math.tanh %252 : vector<16x128xf32>
    %cst_93 = arith.constant 5.000000e-01 : f32
    %254 = vector.broadcast %cst_93 : f32 to vector<16x128xf32>
    %255 = arith.mulf %254, %253 : vector<16x128xf32>
    %cst_94 = arith.constant 5.000000e-01 : f32
    %256 = vector.broadcast %cst_94 : f32 to vector<16x128xf32>
    %257 = arith.addf %255, %256 : vector<16x128xf32>
    %258 = vector.extract_strided_slice %249 {offsets = [0, 128], sizes = [16, 128], strides = [1, 1]} : vector<16x512xf32> to vector<16x128xf32>
    %cst_95 = arith.constant 5.000000e-01 : f32
    %259 = vector.broadcast %cst_95 : f32 to vector<16x128xf32>
    %260 = arith.mulf %259, %258 : vector<16x128xf32>
    %261 = math.tanh %260 : vector<16x128xf32>
    %cst_96 = arith.constant 5.000000e-01 : f32
    %262 = vector.broadcast %cst_96 : f32 to vector<16x128xf32>
    %263 = arith.mulf %262, %261 : vector<16x128xf32>
    %cst_97 = arith.constant 5.000000e-01 : f32
    %264 = vector.broadcast %cst_97 : f32 to vector<16x128xf32>
    %265 = arith.addf %263, %264 : vector<16x128xf32>
    %266 = vector.extract_strided_slice %249 {offsets = [0, 256], sizes = [16, 128], strides = [1, 1]} : vector<16x512xf32> to vector<16x128xf32>
    %267 = math.tanh %266 : vector<16x128xf32>
    %268 = vector.extract_strided_slice %249 {offsets = [0, 384], sizes = [16, 128], strides = [1, 1]} : vector<16x512xf32> to vector<16x128xf32>
    %cst_98 = arith.constant 5.000000e-01 : f32
    %269 = vector.broadcast %cst_98 : f32 to vector<16x128xf32>
    %270 = arith.mulf %269, %268 : vector<16x128xf32>
    %271 = math.tanh %270 : vector<16x128xf32>
    %cst_99 = arith.constant 5.000000e-01 : f32
    %272 = vector.broadcast %cst_99 : f32 to vector<16x128xf32>
    %273 = arith.mulf %272, %271 : vector<16x128xf32>
    %cst_100 = arith.constant 5.000000e-01 : f32
    %274 = vector.broadcast %cst_100 : f32 to vector<16x128xf32>
    %275 = arith.addf %273, %274 : vector<16x128xf32>
    %276 = arith.mulf %265, %233 : vector<16x128xf32>
    %277 = arith.mulf %257, %267 : vector<16x128xf32>
    %278 = arith.addf %276, %277 : vector<16x128xf32>
    %279 = math.tanh %278 : vector<16x128xf32>
    %280 = arith.mulf %275, %279 : vector<16x128xf32>
    %281 = arith.truncf %280 : vector<16x128xf32> to vector<16x128xbf16>
    %282 = arith.index_cast %c5_i32 : i32 to index
    %c0_101 = arith.constant 0 : index
    %c0_102 = arith.constant 0 : index
    %283 = vector.load %arg12[%282, %c0_101, %c0_102] : memref<8x16x128xbf16, #tpu.memory_space<vmem>>, vector<1x16x128xbf16>
    %284 = vector.shape_cast %283 : vector<1x16x128xbf16> to vector<16x128xbf16>
    %285 = vector.shape_cast %281 : vector<16x128xbf16> to vector<1x16x128xbf16>
    tpu.vector_store %arg12[%282, %c0_101, %c0_102], %285 {strides = array<i32>} : memref<8x16x128xbf16, #tpu.memory_space<vmem>>, vector<1x16x128xbf16>,
    %c6_i32 = arith.constant 6 : i32
    %286 = arith.index_cast %c6_i32 : i32 to index
    %c0_103 = arith.constant 0 : index
    %c0_104 = arith.constant 0 : index
    %287 = vector.load %arg11[%286, %c0_103, %c0_104] : memref<8x16x512xbf16, #tpu.memory_space<vmem>>, vector<1x16x512xbf16>
    %288 = vector.shape_cast %287 : vector<1x16x512xbf16> to vector<16x512xbf16>
    %289 = arith.extf %288 : vector<16x512xbf16> to vector<16x512xf32>
    %290 = vector.broadcast %11 : vector<1x512xf32> to vector<16x512xf32>
    %291 = arith.addf %289, %290 : vector<16x512xf32>
    %292 = arith.truncf %280 : vector<16x128xf32> to vector<16x128xbf16>
    %cst_105 = arith.constant dense<0.000000e+00> : vector<16x512xf32>
    %293 = tpu.matmul %292, %10, %cst_105 {dimension_numbers = #tpu.dot_dimension_numbers<[1], [0], [0], [1], [0, 0, 1, 1], [], []>} : vector<16x128xbf16>, vector<128x512xbf16>, vector<16x512xf32> -> vector<16x512xf32>
    %294 = arith.addf %291, %293 : vector<16x512xf32>
    %295 = vector.extract_strided_slice %294 {offsets = [0, 0], sizes = [16, 128], strides = [1, 1]} : vector<16x512xf32> to vector<16x128xf32>
    %cst_106 = arith.constant 5.000000e-01 : f32
    %296 = vector.broadcast %cst_106 : f32 to vector<16x128xf32>
    %297 = arith.mulf %296, %295 : vector<16x128xf32>
    %298 = math.tanh %297 : vector<16x128xf32>
    %cst_107 = arith.constant 5.000000e-01 : f32
    %299 = vector.broadcast %cst_107 : f32 to vector<16x128xf32>
    %300 = arith.mulf %299, %298 : vector<16x128xf32>
    %cst_108 = arith.constant 5.000000e-01 : f32
    %301 = vector.broadcast %cst_108 : f32 to vector<16x128xf32>
    %302 = arith.addf %300, %301 : vector<16x128xf32>
    %303 = vector.extract_strided_slice %294 {offsets = [0, 128], sizes = [16, 128], strides = [1, 1]} : vector<16x512xf32> to vector<16x128xf32>
    %cst_109 = arith.constant 5.000000e-01 : f32
    %304 = vector.broadcast %cst_109 : f32 to vector<16x128xf32>
    %305 = arith.mulf %304, %303 : vector<16x128xf32>
    %306 = math.tanh %305 : vector<16x128xf32>
    %cst_110 = arith.constant 5.000000e-01 : f32
    %307 = vector.broadcast %cst_110 : f32 to vector<16x128xf32>
    %308 = arith.mulf %307, %306 : vector<16x128xf32>
    %cst_111 = arith.constant 5.000000e-01 : f32
    %309 = vector.broadcast %cst_111 : f32 to vector<16x128xf32>
    %310 = arith.addf %308, %309 : vector<16x128xf32>
    %311 = vector.extract_strided_slice %294 {offsets = [0, 256], sizes = [16, 128], strides = [1, 1]} : vector<16x512xf32> to vector<16x128xf32>
    %312 = math.tanh %311 : vector<16x128xf32>
    %313 = vector.extract_strided_slice %294 {offsets = [0, 384], sizes = [16, 128], strides = [1, 1]} : vector<16x512xf32> to vector<16x128xf32>
    %cst_112 = arith.constant 5.000000e-01 : f32
    %314 = vector.broadcast %cst_112 : f32 to vector<16x128xf32>
    %315 = arith.mulf %314, %313 : vector<16x128xf32>
    %316 = math.tanh %315 : vector<16x128xf32>
    %cst_113 = arith.constant 5.000000e-01 : f32
    %317 = vector.broadcast %cst_113 : f32 to vector<16x128xf32>
    %318 = arith.mulf %317, %316 : vector<16x128xf32>
    %cst_114 = arith.constant 5.000000e-01 : f32
    %319 = vector.broadcast %cst_114 : f32 to vector<16x128xf32>
    %320 = arith.addf %318, %319 : vector<16x128xf32>
    %321 = arith.mulf %310, %278 : vector<16x128xf32>
    %322 = arith.mulf %302, %312 : vector<16x128xf32>
    %323 = arith.addf %321, %322 : vector<16x128xf32>
    %324 = math.tanh %323 : vector<16x128xf32>
    %325 = arith.mulf %320, %324 : vector<16x128xf32>
    %326 = arith.truncf %325 : vector<16x128xf32> to vector<16x128xbf16>
    %327 = arith.index_cast %c6_i32 : i32 to index
    %c0_115 = arith.constant 0 : index
    %c0_116 = arith.constant 0 : index
    %328 = vector.load %arg12[%327, %c0_115, %c0_116] : memref<8x16x128xbf16, #tpu.memory_space<vmem>>, vector<1x16x128xbf16>
    %329 = vector.shape_cast %328 : vector<1x16x128xbf16> to vector<16x128xbf16>
    %330 = vector.shape_cast %326 : vector<16x128xbf16> to vector<1x16x128xbf16>
    tpu.vector_store %arg12[%327, %c0_115, %c0_116], %330 {strides = array<i32>} : memref<8x16x128xbf16, #tpu.memory_space<vmem>>, vector<1x16x128xbf16>,
    %c7_i32 = arith.constant 7 : i32
    %331 = arith.index_cast %c7_i32 : i32 to index
    %c0_117 = arith.constant 0 : index
    %c0_118 = arith.constant 0 : index
    %332 = vector.load %arg11[%331, %c0_117, %c0_118] : memref<8x16x512xbf16, #tpu.memory_space<vmem>>, vector<1x16x512xbf16>
    %333 = vector.shape_cast %332 : vector<1x16x512xbf16> to vector<16x512xbf16>
    %334 = arith.extf %333 : vector<16x512xbf16> to vector<16x512xf32>
    %335 = vector.broadcast %11 : vector<1x512xf32> to vector<16x512xf32>
    %336 = arith.addf %334, %335 : vector<16x512xf32>
    %337 = arith.truncf %325 : vector<16x128xf32> to vector<16x128xbf16>
    %cst_119 = arith.constant dense<0.000000e+00> : vector<16x512xf32>
    %338 = tpu.matmul %337, %10, %cst_119 {dimension_numbers = #tpu.dot_dimension_numbers<[1], [0], [0], [1], [0, 0, 1, 1], [], []>} : vector<16x128xbf16>, vector<128x512xbf16>, vector<16x512xf32> -> vector<16x512xf32>
    %339 = arith.addf %336, %338 : vector<16x512xf32>
    %340 = vector.extract_strided_slice %339 {offsets = [0, 0], sizes = [16, 128], strides = [1, 1]} : vector<16x512xf32> to vector<16x128xf32>
    %cst_120 = arith.constant 5.000000e-01 : f32
    %341 = vector.broadcast %cst_120 : f32 to vector<16x128xf32>
    %342 = arith.mulf %341, %340 : vector<16x128xf32>
    %343 = math.tanh %342 : vector<16x128xf32>
    %cst_121 = arith.constant 5.000000e-01 : f32
    %344 = vector.broadcast %cst_121 : f32 to vector<16x128xf32>
    %345 = arith.mulf %344, %343 : vector<16x128xf32>
    %cst_122 = arith.constant 5.000000e-01 : f32
    %346 = vector.broadcast %cst_122 : f32 to vector<16x128xf32>
    %347 = arith.addf %345, %346 : vector<16x128xf32>
    %348 = vector.extract_strided_slice %339 {offsets = [0, 128], sizes = [16, 128], strides = [1, 1]} : vector<16x512xf32> to vector<16x128xf32>
    %cst_123 = arith.constant 5.000000e-01 : f32
    %349 = vector.broadcast %cst_123 : f32 to vector<16x128xf32>
    %350 = arith.mulf %349, %348 : vector<16x128xf32>
    %351 = math.tanh %350 : vector<16x128xf32>
    %cst_124 = arith.constant 5.000000e-01 : f32
    %352 = vector.broadcast %cst_124 : f32 to vector<16x128xf32>
    %353 = arith.mulf %352, %351 : vector<16x128xf32>
    %cst_125 = arith.constant 5.000000e-01 : f32
    %354 = vector.broadcast %cst_125 : f32 to vector<16x128xf32>
    %355 = arith.addf %353, %354 : vector<16x128xf32>
    %356 = vector.extract_strided_slice %339 {offsets = [0, 256], sizes = [16, 128], strides = [1, 1]} : vector<16x512xf32> to vector<16x128xf32>
    %357 = math.tanh %356 : vector<16x128xf32>
    %358 = vector.extract_strided_slice %339 {offsets = [0, 384], sizes = [16, 128], strides = [1, 1]} : vector<16x512xf32> to vector<16x128xf32>
    %cst_126 = arith.constant 5.000000e-01 : f32
    %359 = vector.broadcast %cst_126 : f32 to vector<16x128xf32>
    %360 = arith.mulf %359, %358 : vector<16x128xf32>
    %361 = math.tanh %360 : vector<16x128xf32>
    %cst_127 = arith.constant 5.000000e-01 : f32
    %362 = vector.broadcast %cst_127 : f32 to vector<16x128xf32>
    %363 = arith.mulf %362, %361 : vector<16x128xf32>
    %cst_128 = arith.constant 5.000000e-01 : f32
    %364 = vector.broadcast %cst_128 : f32 to vector<16x128xf32>
    %365 = arith.addf %363, %364 : vector<16x128xf32>
    %366 = arith.mulf %355, %323 : vector<16x128xf32>
    %367 = arith.mulf %347, %357 : vector<16x128xf32>
    %368 = arith.addf %366, %367 : vector<16x128xf32>
    %369 = math.tanh %368 : vector<16x128xf32>
    %370 = arith.mulf %365, %369 : vector<16x128xf32>
    %371 = arith.truncf %370 : vector<16x128xf32> to vector<16x128xbf16>
    %372 = arith.index_cast %c7_i32 : i32 to index
    %c0_129 = arith.constant 0 : index
    %c0_130 = arith.constant 0 : index
    %373 = vector.load %arg12[%372, %c0_129, %c0_130] : memref<8x16x128xbf16, #tpu.memory_space<vmem>>, vector<1x16x128xbf16>
    %374 = vector.shape_cast %373 : vector<1x16x128xbf16> to vector<16x128xbf16>
    %375 = vector.shape_cast %371 : vector<16x128xbf16> to vector<1x16x128xbf16>
    tpu.vector_store %arg12[%372, %c0_129, %c0_130], %375 {strides = array<i32>} : memref<8x16x128xbf16, #tpu.memory_space<vmem>>, vector<1x16x128xbf16>,
    %c8_i32 = arith.constant 8 : i32
    %c0_131 = arith.constant 0 : index
    %c0_132 = arith.constant 0 : index
    %c0_133 = arith.constant 0 : index
    %376 = vector.load %arg9[%c0_131, %c0_132, %c0_133] : memref<2x16x128xf32, #tpu.memory_space<vmem>>, vector<1x16x128xf32>
    %377 = vector.shape_cast %376 : vector<1x16x128xf32> to vector<16x128xf32>
    %378 = vector.shape_cast %370 : vector<16x128xf32> to vector<1x16x128xf32>
    tpu.vector_store %arg9[%c0_131, %c0_132, %c0_133], %378 {strides = array<i32>} : memref<2x16x128xf32, #tpu.memory_space<vmem>>, vector<1x16x128xf32>,
    %c0_134 = arith.constant 0 : index
    %c0_135 = arith.constant 0 : index
    %c0_136 = arith.constant 0 : index
    %379 = vector.load %arg10[%c0_134, %c0_135, %c0_136] : memref<2x16x128xf32, #tpu.memory_space<vmem>>, vector<1x16x128xf32>
    %380 = vector.shape_cast %379 : vector<1x16x128xf32> to vector<16x128xf32>
    %381 = vector.shape_cast %368 : vector<16x128xf32> to vector<1x16x128xf32>
    tpu.vector_store %arg10[%c0_134, %c0_135, %c0_136], %381 {strides = array<i32>} : memref<2x16x128xf32, #tpu.memory_space<vmem>>, vector<1x16x128xf32>,
    %c0_137 = arith.constant 0 : index
    %c0_138 = arith.constant 0 : index
    %c0_139 = arith.constant 0 : index
    %382 = vector.load %arg12[%c0_137, %c0_138, %c0_139] : memref<8x16x128xbf16, #tpu.memory_space<vmem>>, vector<8x16x128xbf16>
    %383 = vector.shape_cast %382 : vector<8x16x128xbf16> to vector<128x128xbf16>
    %c0_140 = arith.constant 0 : index
    %c0_141 = arith.constant 0 : index
    %384 = vector.load %arg4[%c0_140, %c0_141] : memref<128x512xbf16, #tpu.memory_space<vmem>>, vector<128x512xbf16>
    %cst_142 = arith.constant dense<0.000000e+00> : vector<128x512xf32>
    %385 = tpu.matmul %383, %384, %cst_142 {dimension_numbers = #tpu.dot_dimension_numbers<[1], [0], [0], [1], [0, 0, 1, 1], [], []>} : vector<128x128xbf16>, vector<128x512xbf16>, vector<128x512xf32> -> vector<128x512xf32>
    %386 = vector.shape_cast %385 : vector<128x512xf32> to vector<8x16x512xf32>
    %387 = arith.truncf %386 : vector<8x16x512xf32> to vector<8x16x512xbf16>
    %c0_143 = arith.constant 0 : index
    %c0_144 = arith.constant 0 : index
    %c0_145 = arith.constant 0 : index
    %388 = vector.load %arg11[%c0_143, %c0_144, %c0_145] : memref<8x16x512xbf16, #tpu.memory_space<vmem>>, vector<8x16x512xbf16>
    tpu.vector_store %arg11[%c0_143, %c0_144, %c0_145], %387 {strides = array<i32>} : memref<8x16x512xbf16, #tpu.memory_space<vmem>>, vector<8x16x512xbf16>,
    %c0_146 = arith.constant 0 : index
    %c0_147 = arith.constant 0 : index
    %389 = vector.load %arg6[%c0_146, %c0_147] : memref<128x512xbf16, #tpu.memory_space<vmem>>, vector<128x512xbf16>
    %c0_148 = arith.constant 0 : index
    %c0_149 = arith.constant 0 : index
    %390 = vector.load %arg8[%c0_148, %c0_149] : memref<1x512xf32, #tpu.memory_space<vmem>>, vector<1x512xf32>
    %c1 = arith.constant 1 : index
    %c0_150 = arith.constant 0 : index
    %c0_151 = arith.constant 0 : index
    %391 = vector.load %arg9[%c1, %c0_150, %c0_151] : memref<2x16x128xf32, #tpu.memory_space<vmem>>, vector<1x16x128xf32>
    %392 = vector.shape_cast %391 : vector<1x16x128xf32> to vector<16x128xf32>
    %c1_152 = arith.constant 1 : index
    %c0_153 = arith.constant 0 : index
    %c0_154 = arith.constant 0 : index
    %393 = vector.load %arg10[%c1_152, %c0_153, %c0_154] : memref<2x16x128xf32, #tpu.memory_space<vmem>>, vector<1x16x128xf32>
    %394 = vector.shape_cast %393 : vector<1x16x128xf32> to vector<16x128xf32>
    %c0_i32_155 = arith.constant 0 : i32
    %395 = arith.index_cast %c0_i32_155 : i32 to index
    %c0_156 = arith.constant 0 : index
    %c0_157 = arith.constant 0 : index
    %396 = vector.load %arg11[%395, %c0_156, %c0_157] : memref<8x16x512xbf16, #tpu.memory_space<vmem>>, vector<1x16x512xbf16>
    %397 = vector.shape_cast %396 : vector<1x16x512xbf16> to vector<16x512xbf16>
    %398 = arith.extf %397 : vector<16x512xbf16> to vector<16x512xf32>
    %399 = vector.broadcast %390 : vector<1x512xf32> to vector<16x512xf32>
    %400 = arith.addf %398, %399 : vector<16x512xf32>
    %401 = arith.truncf %392 : vector<16x128xf32> to vector<16x128xbf16>
    %cst_158 = arith.constant dense<0.000000e+00> : vector<16x512xf32>
    %402 = tpu.matmul %401, %389, %cst_158 {dimension_numbers = #tpu.dot_dimension_numbers<[1], [0], [0], [1], [0, 0, 1, 1], [], []>} : vector<16x128xbf16>, vector<128x512xbf16>, vector<16x512xf32> -> vector<16x512xf32>
    %403 = arith.addf %400, %402 : vector<16x512xf32>
    %404 = vector.extract_strided_slice %403 {offsets = [0, 0], sizes = [16, 128], strides = [1, 1]} : vector<16x512xf32> to vector<16x128xf32>
    %cst_159 = arith.constant 5.000000e-01 : f32
    %405 = vector.broadcast %cst_159 : f32 to vector<16x128xf32>
    %406 = arith.mulf %405, %404 : vector<16x128xf32>
    %407 = math.tanh %406 : vector<16x128xf32>
    %cst_160 = arith.constant 5.000000e-01 : f32
    %408 = vector.broadcast %cst_160 : f32 to vector<16x128xf32>
    %409 = arith.mulf %408, %407 : vector<16x128xf32>
    %cst_161 = arith.constant 5.000000e-01 : f32
    %410 = vector.broadcast %cst_161 : f32 to vector<16x128xf32>
    %411 = arith.addf %409, %410 : vector<16x128xf32>
    %412 = vector.extract_strided_slice %403 {offsets = [0, 128], sizes = [16, 128], strides = [1, 1]} : vector<16x512xf32> to vector<16x128xf32>
    %cst_162 = arith.constant 5.000000e-01 : f32
    %413 = vector.broadcast %cst_162 : f32 to vector<16x128xf32>
    %414 = arith.mulf %413, %412 : vector<16x128xf32>
    %415 = math.tanh %414 : vector<16x128xf32>
    %cst_163 = arith.constant 5.000000e-01 : f32
    %416 = vector.broadcast %cst_163 : f32 to vector<16x128xf32>
    %417 = arith.mulf %416, %415 : vector<16x128xf32>
    %cst_164 = arith.constant 5.000000e-01 : f32
    %418 = vector.broadcast %cst_164 : f32 to vector<16x128xf32>
    %419 = arith.addf %417, %418 : vector<16x128xf32>
    %420 = vector.extract_strided_slice %403 {offsets = [0, 256], sizes = [16, 128], strides = [1, 1]} : vector<16x512xf32> to vector<16x128xf32>
    %421 = math.tanh %420 : vector<16x128xf32>
    %422 = vector.extract_strided_slice %403 {offsets = [0, 384], sizes = [16, 128], strides = [1, 1]} : vector<16x512xf32> to vector<16x128xf32>
    %cst_165 = arith.constant 5.000000e-01 : f32
    %423 = vector.broadcast %cst_165 : f32 to vector<16x128xf32>
    %424 = arith.mulf %423, %422 : vector<16x128xf32>
    %425 = math.tanh %424 : vector<16x128xf32>
    %cst_166 = arith.constant 5.000000e-01 : f32
    %426 = vector.broadcast %cst_166 : f32 to vector<16x128xf32>
    %427 = arith.mulf %426, %425 : vector<16x128xf32>
    %cst_167 = arith.constant 5.000000e-01 : f32
    %428 = vector.broadcast %cst_167 : f32 to vector<16x128xf32>
    %429 = arith.addf %427, %428 : vector<16x128xf32>
    %430 = arith.mulf %419, %394 : vector<16x128xf32>
    %431 = arith.mulf %411, %421 : vector<16x128xf32>
    %432 = arith.addf %430, %431 : vector<16x128xf32>
    %433 = math.tanh %432 : vector<16x128xf32>
    %434 = arith.mulf %429, %433 : vector<16x128xf32>
    %c1_i32_168 = arith.constant 1 : i32
    %435 = arith.index_cast %c1_i32_168 : i32 to index
    %c0_169 = arith.constant 0 : index
    %c0_170 = arith.constant 0 : index
    %436 = vector.load %arg11[%435, %c0_169, %c0_170] : memref<8x16x512xbf16, #tpu.memory_space<vmem>>, vector<1x16x512xbf16>
    %437 = vector.shape_cast %436 : vector<1x16x512xbf16> to vector<16x512xbf16>
    %438 = arith.extf %437 : vector<16x512xbf16> to vector<16x512xf32>
    %439 = vector.broadcast %390 : vector<1x512xf32> to vector<16x512xf32>
    %440 = arith.addf %438, %439 : vector<16x512xf32>
    %441 = arith.truncf %434 : vector<16x128xf32> to vector<16x128xbf16>
    %cst_171 = arith.constant dense<0.000000e+00> : vector<16x512xf32>
    %442 = tpu.matmul %441, %389, %cst_171 {dimension_numbers = #tpu.dot_dimension_numbers<[1], [0], [0], [1], [0, 0, 1, 1], [], []>} : vector<16x128xbf16>, vector<128x512xbf16>, vector<16x512xf32> -> vector<16x512xf32>
    %443 = arith.addf %440, %442 : vector<16x512xf32>
    %444 = vector.extract_strided_slice %443 {offsets = [0, 0], sizes = [16, 128], strides = [1, 1]} : vector<16x512xf32> to vector<16x128xf32>
    %cst_172 = arith.constant 5.000000e-01 : f32
    %445 = vector.broadcast %cst_172 : f32 to vector<16x128xf32>
    %446 = arith.mulf %445, %444 : vector<16x128xf32>
    %447 = math.tanh %446 : vector<16x128xf32>
    %cst_173 = arith.constant 5.000000e-01 : f32
    %448 = vector.broadcast %cst_173 : f32 to vector<16x128xf32>
    %449 = arith.mulf %448, %447 : vector<16x128xf32>
    %cst_174 = arith.constant 5.000000e-01 : f32
    %450 = vector.broadcast %cst_174 : f32 to vector<16x128xf32>
    %451 = arith.addf %449, %450 : vector<16x128xf32>
    %452 = vector.extract_strided_slice %443 {offsets = [0, 128], sizes = [16, 128], strides = [1, 1]} : vector<16x512xf32> to vector<16x128xf32>
    %cst_175 = arith.constant 5.000000e-01 : f32
    %453 = vector.broadcast %cst_175 : f32 to vector<16x128xf32>
    %454 = arith.mulf %453, %452 : vector<16x128xf32>
    %455 = math.tanh %454 : vector<16x128xf32>
    %cst_176 = arith.constant 5.000000e-01 : f32
    %456 = vector.broadcast %cst_176 : f32 to vector<16x128xf32>
    %457 = arith.mulf %456, %455 : vector<16x128xf32>
    %cst_177 = arith.constant 5.000000e-01 : f32
    %458 = vector.broadcast %cst_177 : f32 to vector<16x128xf32>
    %459 = arith.addf %457, %458 : vector<16x128xf32>
    %460 = vector.extract_strided_slice %443 {offsets = [0, 256], sizes = [16, 128], strides = [1, 1]} : vector<16x512xf32> to vector<16x128xf32>
    %461 = math.tanh %460 : vector<16x128xf32>
    %462 = vector.extract_strided_slice %443 {offsets = [0, 384], sizes = [16, 128], strides = [1, 1]} : vector<16x512xf32> to vector<16x128xf32>
    %cst_178 = arith.constant 5.000000e-01 : f32
    %463 = vector.broadcast %cst_178 : f32 to vector<16x128xf32>
    %464 = arith.mulf %463, %462 : vector<16x128xf32>
    %465 = math.tanh %464 : vector<16x128xf32>
    %cst_179 = arith.constant 5.000000e-01 : f32
    %466 = vector.broadcast %cst_179 : f32 to vector<16x128xf32>
    %467 = arith.mulf %466, %465 : vector<16x128xf32>
    %cst_180 = arith.constant 5.000000e-01 : f32
    %468 = vector.broadcast %cst_180 : f32 to vector<16x128xf32>
    %469 = arith.addf %467, %468 : vector<16x128xf32>
    %470 = arith.mulf %459, %432 : vector<16x128xf32>
    %471 = arith.mulf %451, %461 : vector<16x128xf32>
    %472 = arith.addf %470, %471 : vector<16x128xf32>
    %473 = math.tanh %472 : vector<16x128xf32>
    %474 = arith.mulf %469, %473 : vector<16x128xf32>
    %c2_i32_181 = arith.constant 2 : i32
    %475 = arith.index_cast %c2_i32_181 : i32 to index
    %c0_182 = arith.constant 0 : index
    %c0_183 = arith.constant 0 : index
    %476 = vector.load %arg11[%475, %c0_182, %c0_183] : memref<8x16x512xbf16, #tpu.memory_space<vmem>>, vector<1x16x512xbf16>
    %477 = vector.shape_cast %476 : vector<1x16x512xbf16> to vector<16x512xbf16>
    %478 = arith.extf %477 : vector<16x512xbf16> to vector<16x512xf32>
    %479 = vector.broadcast %390 : vector<1x512xf32> to vector<16x512xf32>
    %480 = arith.addf %478, %479 : vector<16x512xf32>
    %481 = arith.truncf %474 : vector<16x128xf32> to vector<16x128xbf16>
    %cst_184 = arith.constant dense<0.000000e+00> : vector<16x512xf32>
    %482 = tpu.matmul %481, %389, %cst_184 {dimension_numbers = #tpu.dot_dimension_numbers<[1], [0], [0], [1], [0, 0, 1, 1], [], []>} : vector<16x128xbf16>, vector<128x512xbf16>, vector<16x512xf32> -> vector<16x512xf32>
    %483 = arith.addf %480, %482 : vector<16x512xf32>
    %484 = vector.extract_strided_slice %483 {offsets = [0, 0], sizes = [16, 128], strides = [1, 1]} : vector<16x512xf32> to vector<16x128xf32>
    %cst_185 = arith.constant 5.000000e-01 : f32
    %485 = vector.broadcast %cst_185 : f32 to vector<16x128xf32>
    %486 = arith.mulf %485, %484 : vector<16x128xf32>
    %487 = math.tanh %486 : vector<16x128xf32>
    %cst_186 = arith.constant 5.000000e-01 : f32
    %488 = vector.broadcast %cst_186 : f32 to vector<16x128xf32>
    %489 = arith.mulf %488, %487 : vector<16x128xf32>
    %cst_187 = arith.constant 5.000000e-01 : f32
    %490 = vector.broadcast %cst_187 : f32 to vector<16x128xf32>
    %491 = arith.addf %489, %490 : vector<16x128xf32>
    %492 = vector.extract_strided_slice %483 {offsets = [0, 128], sizes = [16, 128], strides = [1, 1]} : vector<16x512xf32> to vector<16x128xf32>
    %cst_188 = arith.constant 5.000000e-01 : f32
    %493 = vector.broadcast %cst_188 : f32 to vector<16x128xf32>
    %494 = arith.mulf %493, %492 : vector<16x128xf32>
    %495 = math.tanh %494 : vector<16x128xf32>
    %cst_189 = arith.constant 5.000000e-01 : f32
    %496 = vector.broadcast %cst_189 : f32 to vector<16x128xf32>
    %497 = arith.mulf %496, %495 : vector<16x128xf32>
    %cst_190 = arith.constant 5.000000e-01 : f32
    %498 = vector.broadcast %cst_190 : f32 to vector<16x128xf32>
    %499 = arith.addf %497, %498 : vector<16x128xf32>
    %500 = vector.extract_strided_slice %483 {offsets = [0, 256], sizes = [16, 128], strides = [1, 1]} : vector<16x512xf32> to vector<16x128xf32>
    %501 = math.tanh %500 : vector<16x128xf32>
    %502 = vector.extract_strided_slice %483 {offsets = [0, 384], sizes = [16, 128], strides = [1, 1]} : vector<16x512xf32> to vector<16x128xf32>
    %cst_191 = arith.constant 5.000000e-01 : f32
    %503 = vector.broadcast %cst_191 : f32 to vector<16x128xf32>
    %504 = arith.mulf %503, %502 : vector<16x128xf32>
    %505 = math.tanh %504 : vector<16x128xf32>
    %cst_192 = arith.constant 5.000000e-01 : f32
    %506 = vector.broadcast %cst_192 : f32 to vector<16x128xf32>
    %507 = arith.mulf %506, %505 : vector<16x128xf32>
    %cst_193 = arith.constant 5.000000e-01 : f32
    %508 = vector.broadcast %cst_193 : f32 to vector<16x128xf32>
    %509 = arith.addf %507, %508 : vector<16x128xf32>
    %510 = arith.mulf %499, %472 : vector<16x128xf32>
    %511 = arith.mulf %491, %501 : vector<16x128xf32>
    %512 = arith.addf %510, %511 : vector<16x128xf32>
    %513 = math.tanh %512 : vector<16x128xf32>
    %514 = arith.mulf %509, %513 : vector<16x128xf32>
    %c3_i32_194 = arith.constant 3 : i32
    %515 = arith.index_cast %c3_i32_194 : i32 to index
    %c0_195 = arith.constant 0 : index
    %c0_196 = arith.constant 0 : index
    %516 = vector.load %arg11[%515, %c0_195, %c0_196] : memref<8x16x512xbf16, #tpu.memory_space<vmem>>, vector<1x16x512xbf16>
    %517 = vector.shape_cast %516 : vector<1x16x512xbf16> to vector<16x512xbf16>
    %518 = arith.extf %517 : vector<16x512xbf16> to vector<16x512xf32>
    %519 = vector.broadcast %390 : vector<1x512xf32> to vector<16x512xf32>
    %520 = arith.addf %518, %519 : vector<16x512xf32>
    %521 = arith.truncf %514 : vector<16x128xf32> to vector<16x128xbf16>
    %cst_197 = arith.constant dense<0.000000e+00> : vector<16x512xf32>
    %522 = tpu.matmul %521, %389, %cst_197 {dimension_numbers = #tpu.dot_dimension_numbers<[1], [0], [0], [1], [0, 0, 1, 1], [], []>} : vector<16x128xbf16>, vector<128x512xbf16>, vector<16x512xf32> -> vector<16x512xf32>
    %523 = arith.addf %520, %522 : vector<16x512xf32>
    %524 = vector.extract_strided_slice %523 {offsets = [0, 0], sizes = [16, 128], strides = [1, 1]} : vector<16x512xf32> to vector<16x128xf32>
    %cst_198 = arith.constant 5.000000e-01 : f32
    %525 = vector.broadcast %cst_198 : f32 to vector<16x128xf32>
    %526 = arith.mulf %525, %524 : vector<16x128xf32>
    %527 = math.tanh %526 : vector<16x128xf32>
    %cst_199 = arith.constant 5.000000e-01 : f32
    %528 = vector.broadcast %cst_199 : f32 to vector<16x128xf32>
    %529 = arith.mulf %528, %527 : vector<16x128xf32>
    %cst_200 = arith.constant 5.000000e-01 : f32
    %530 = vector.broadcast %cst_200 : f32 to vector<16x128xf32>
    %531 = arith.addf %529, %530 : vector<16x128xf32>
    %532 = vector.extract_strided_slice %523 {offsets = [0, 128], sizes = [16, 128], strides = [1, 1]} : vector<16x512xf32> to vector<16x128xf32>
    %cst_201 = arith.constant 5.000000e-01 : f32
    %533 = vector.broadcast %cst_201 : f32 to vector<16x128xf32>
    %534 = arith.mulf %533, %532 : vector<16x128xf32>
    %535 = math.tanh %534 : vector<16x128xf32>
    %cst_202 = arith.constant 5.000000e-01 : f32
    %536 = vector.broadcast %cst_202 : f32 to vector<16x128xf32>
    %537 = arith.mulf %536, %535 : vector<16x128xf32>
    %cst_203 = arith.constant 5.000000e-01 : f32
    %538 = vector.broadcast %cst_203 : f32 to vector<16x128xf32>
    %539 = arith.addf %537, %538 : vector<16x128xf32>
    %540 = vector.extract_strided_slice %523 {offsets = [0, 256], sizes = [16, 128], strides = [1, 1]} : vector<16x512xf32> to vector<16x128xf32>
    %541 = math.tanh %540 : vector<16x128xf32>
    %542 = vector.extract_strided_slice %523 {offsets = [0, 384], sizes = [16, 128], strides = [1, 1]} : vector<16x512xf32> to vector<16x128xf32>
    %cst_204 = arith.constant 5.000000e-01 : f32
    %543 = vector.broadcast %cst_204 : f32 to vector<16x128xf32>
    %544 = arith.mulf %543, %542 : vector<16x128xf32>
    %545 = math.tanh %544 : vector<16x128xf32>
    %cst_205 = arith.constant 5.000000e-01 : f32
    %546 = vector.broadcast %cst_205 : f32 to vector<16x128xf32>
    %547 = arith.mulf %546, %545 : vector<16x128xf32>
    %cst_206 = arith.constant 5.000000e-01 : f32
    %548 = vector.broadcast %cst_206 : f32 to vector<16x128xf32>
    %549 = arith.addf %547, %548 : vector<16x128xf32>
    %550 = arith.mulf %539, %512 : vector<16x128xf32>
    %551 = arith.mulf %531, %541 : vector<16x128xf32>
    %552 = arith.addf %550, %551 : vector<16x128xf32>
    %553 = math.tanh %552 : vector<16x128xf32>
    %554 = arith.mulf %549, %553 : vector<16x128xf32>
    %c4_i32_207 = arith.constant 4 : i32
    %555 = arith.index_cast %c4_i32_207 : i32 to index
    %c0_208 = arith.constant 0 : index
    %c0_209 = arith.constant 0 : index
    %556 = vector.load %arg11[%555, %c0_208, %c0_209] : memref<8x16x512xbf16, #tpu.memory_space<vmem>>, vector<1x16x512xbf16>
    %557 = vector.shape_cast %556 : vector<1x16x512xbf16> to vector<16x512xbf16>
    %558 = arith.extf %557 : vector<16x512xbf16> to vector<16x512xf32>
    %559 = vector.broadcast %390 : vector<1x512xf32> to vector<16x512xf32>
    %560 = arith.addf %558, %559 : vector<16x512xf32>
    %561 = arith.truncf %554 : vector<16x128xf32> to vector<16x128xbf16>
    %cst_210 = arith.constant dense<0.000000e+00> : vector<16x512xf32>
    %562 = tpu.matmul %561, %389, %cst_210 {dimension_numbers = #tpu.dot_dimension_numbers<[1], [0], [0], [1], [0, 0, 1, 1], [], []>} : vector<16x128xbf16>, vector<128x512xbf16>, vector<16x512xf32> -> vector<16x512xf32>
    %563 = arith.addf %560, %562 : vector<16x512xf32>
    %564 = vector.extract_strided_slice %563 {offsets = [0, 0], sizes = [16, 128], strides = [1, 1]} : vector<16x512xf32> to vector<16x128xf32>
    %cst_211 = arith.constant 5.000000e-01 : f32
    %565 = vector.broadcast %cst_211 : f32 to vector<16x128xf32>
    %566 = arith.mulf %565, %564 : vector<16x128xf32>
    %567 = math.tanh %566 : vector<16x128xf32>
    %cst_212 = arith.constant 5.000000e-01 : f32
    %568 = vector.broadcast %cst_212 : f32 to vector<16x128xf32>
    %569 = arith.mulf %568, %567 : vector<16x128xf32>
    %cst_213 = arith.constant 5.000000e-01 : f32
    %570 = vector.broadcast %cst_213 : f32 to vector<16x128xf32>
    %571 = arith.addf %569, %570 : vector<16x128xf32>
    %572 = vector.extract_strided_slice %563 {offsets = [0, 128], sizes = [16, 128], strides = [1, 1]} : vector<16x512xf32> to vector<16x128xf32>
    %cst_214 = arith.constant 5.000000e-01 : f32
    %573 = vector.broadcast %cst_214 : f32 to vector<16x128xf32>
    %574 = arith.mulf %573, %572 : vector<16x128xf32>
    %575 = math.tanh %574 : vector<16x128xf32>
    %cst_215 = arith.constant 5.000000e-01 : f32
    %576 = vector.broadcast %cst_215 : f32 to vector<16x128xf32>
    %577 = arith.mulf %576, %575 : vector<16x128xf32>
    %cst_216 = arith.constant 5.000000e-01 : f32
    %578 = vector.broadcast %cst_216 : f32 to vector<16x128xf32>
    %579 = arith.addf %577, %578 : vector<16x128xf32>
    %580 = vector.extract_strided_slice %563 {offsets = [0, 256], sizes = [16, 128], strides = [1, 1]} : vector<16x512xf32> to vector<16x128xf32>
    %581 = math.tanh %580 : vector<16x128xf32>
    %582 = vector.extract_strided_slice %563 {offsets = [0, 384], sizes = [16, 128], strides = [1, 1]} : vector<16x512xf32> to vector<16x128xf32>
    %cst_217 = arith.constant 5.000000e-01 : f32
    %583 = vector.broadcast %cst_217 : f32 to vector<16x128xf32>
    %584 = arith.mulf %583, %582 : vector<16x128xf32>
    %585 = math.tanh %584 : vector<16x128xf32>
    %cst_218 = arith.constant 5.000000e-01 : f32
    %586 = vector.broadcast %cst_218 : f32 to vector<16x128xf32>
    %587 = arith.mulf %586, %585 : vector<16x128xf32>
    %cst_219 = arith.constant 5.000000e-01 : f32
    %588 = vector.broadcast %cst_219 : f32 to vector<16x128xf32>
    %589 = arith.addf %587, %588 : vector<16x128xf32>
    %590 = arith.mulf %579, %552 : vector<16x128xf32>
    %591 = arith.mulf %571, %581 : vector<16x128xf32>
    %592 = arith.addf %590, %591 : vector<16x128xf32>
    %593 = math.tanh %592 : vector<16x128xf32>
    %594 = arith.mulf %589, %593 : vector<16x128xf32>
    %c5_i32_220 = arith.constant 5 : i32
    %595 = arith.index_cast %c5_i32_220 : i32 to index
    %c0_221 = arith.constant 0 : index
    %c0_222 = arith.constant 0 : index
    %596 = vector.load %arg11[%595, %c0_221, %c0_222] : memref<8x16x512xbf16, #tpu.memory_space<vmem>>, vector<1x16x512xbf16>
    %597 = vector.shape_cast %596 : vector<1x16x512xbf16> to vector<16x512xbf16>
    %598 = arith.extf %597 : vector<16x512xbf16> to vector<16x512xf32>
    %599 = vector.broadcast %390 : vector<1x512xf32> to vector<16x512xf32>
    %600 = arith.addf %598, %599 : vector<16x512xf32>
    %601 = arith.truncf %594 : vector<16x128xf32> to vector<16x128xbf16>
    %cst_223 = arith.constant dense<0.000000e+00> : vector<16x512xf32>
    %602 = tpu.matmul %601, %389, %cst_223 {dimension_numbers = #tpu.dot_dimension_numbers<[1], [0], [0], [1], [0, 0, 1, 1], [], []>} : vector<16x128xbf16>, vector<128x512xbf16>, vector<16x512xf32> -> vector<16x512xf32>
    %603 = arith.addf %600, %602 : vector<16x512xf32>
    %604 = vector.extract_strided_slice %603 {offsets = [0, 0], sizes = [16, 128], strides = [1, 1]} : vector<16x512xf32> to vector<16x128xf32>
    %cst_224 = arith.constant 5.000000e-01 : f32
    %605 = vector.broadcast %cst_224 : f32 to vector<16x128xf32>
    %606 = arith.mulf %605, %604 : vector<16x128xf32>
    %607 = math.tanh %606 : vector<16x128xf32>
    %cst_225 = arith.constant 5.000000e-01 : f32
    %608 = vector.broadcast %cst_225 : f32 to vector<16x128xf32>
    %609 = arith.mulf %608, %607 : vector<16x128xf32>
    %cst_226 = arith.constant 5.000000e-01 : f32
    %610 = vector.broadcast %cst_226 : f32 to vector<16x128xf32>
    %611 = arith.addf %609, %610 : vector<16x128xf32>
    %612 = vector.extract_strided_slice %603 {offsets = [0, 128], sizes = [16, 128], strides = [1, 1]} : vector<16x512xf32> to vector<16x128xf32>
    %cst_227 = arith.constant 5.000000e-01 : f32
    %613 = vector.broadcast %cst_227 : f32 to vector<16x128xf32>
    %614 = arith.mulf %613, %612 : vector<16x128xf32>
    %615 = math.tanh %614 : vector<16x128xf32>
    %cst_228 = arith.constant 5.000000e-01 : f32
    %616 = vector.broadcast %cst_228 : f32 to vector<16x128xf32>
    %617 = arith.mulf %616, %615 : vector<16x128xf32>
    %cst_229 = arith.constant 5.000000e-01 : f32
    %618 = vector.broadcast %cst_229 : f32 to vector<16x128xf32>
    %619 = arith.addf %617, %618 : vector<16x128xf32>
    %620 = vector.extract_strided_slice %603 {offsets = [0, 256], sizes = [16, 128], strides = [1, 1]} : vector<16x512xf32> to vector<16x128xf32>
    %621 = math.tanh %620 : vector<16x128xf32>
    %622 = vector.extract_strided_slice %603 {offsets = [0, 384], sizes = [16, 128], strides = [1, 1]} : vector<16x512xf32> to vector<16x128xf32>
    %cst_230 = arith.constant 5.000000e-01 : f32
    %623 = vector.broadcast %cst_230 : f32 to vector<16x128xf32>
    %624 = arith.mulf %623, %622 : vector<16x128xf32>
    %625 = math.tanh %624 : vector<16x128xf32>
    %cst_231 = arith.constant 5.000000e-01 : f32
    %626 = vector.broadcast %cst_231 : f32 to vector<16x128xf32>
    %627 = arith.mulf %626, %625 : vector<16x128xf32>
    %cst_232 = arith.constant 5.000000e-01 : f32
    %628 = vector.broadcast %cst_232 : f32 to vector<16x128xf32>
    %629 = arith.addf %627, %628 : vector<16x128xf32>
    %630 = arith.mulf %619, %592 : vector<16x128xf32>
    %631 = arith.mulf %611, %621 : vector<16x128xf32>
    %632 = arith.addf %630, %631 : vector<16x128xf32>
    %633 = math.tanh %632 : vector<16x128xf32>
    %634 = arith.mulf %629, %633 : vector<16x128xf32>
    %c6_i32_233 = arith.constant 6 : i32
    %635 = arith.index_cast %c6_i32_233 : i32 to index
    %c0_234 = arith.constant 0 : index
    %c0_235 = arith.constant 0 : index
    %636 = vector.load %arg11[%635, %c0_234, %c0_235] : memref<8x16x512xbf16, #tpu.memory_space<vmem>>, vector<1x16x512xbf16>
    %637 = vector.shape_cast %636 : vector<1x16x512xbf16> to vector<16x512xbf16>
    %638 = arith.extf %637 : vector<16x512xbf16> to vector<16x512xf32>
    %639 = vector.broadcast %390 : vector<1x512xf32> to vector<16x512xf32>
    %640 = arith.addf %638, %639 : vector<16x512xf32>
    %641 = arith.truncf %634 : vector<16x128xf32> to vector<16x128xbf16>
    %cst_236 = arith.constant dense<0.000000e+00> : vector<16x512xf32>
    %642 = tpu.matmul %641, %389, %cst_236 {dimension_numbers = #tpu.dot_dimension_numbers<[1], [0], [0], [1], [0, 0, 1, 1], [], []>} : vector<16x128xbf16>, vector<128x512xbf16>, vector<16x512xf32> -> vector<16x512xf32>
    %643 = arith.addf %640, %642 : vector<16x512xf32>
    %644 = vector.extract_strided_slice %643 {offsets = [0, 0], sizes = [16, 128], strides = [1, 1]} : vector<16x512xf32> to vector<16x128xf32>
    %cst_237 = arith.constant 5.000000e-01 : f32
    %645 = vector.broadcast %cst_237 : f32 to vector<16x128xf32>
    %646 = arith.mulf %645, %644 : vector<16x128xf32>
    %647 = math.tanh %646 : vector<16x128xf32>
    %cst_238 = arith.constant 5.000000e-01 : f32
    %648 = vector.broadcast %cst_238 : f32 to vector<16x128xf32>
    %649 = arith.mulf %648, %647 : vector<16x128xf32>
    %cst_239 = arith.constant 5.000000e-01 : f32
    %650 = vector.broadcast %cst_239 : f32 to vector<16x128xf32>
    %651 = arith.addf %649, %650 : vector<16x128xf32>
    %652 = vector.extract_strided_slice %643 {offsets = [0, 128], sizes = [16, 128], strides = [1, 1]} : vector<16x512xf32> to vector<16x128xf32>
    %cst_240 = arith.constant 5.000000e-01 : f32
    %653 = vector.broadcast %cst_240 : f32 to vector<16x128xf32>
    %654 = arith.mulf %653, %652 : vector<16x128xf32>
    %655 = math.tanh %654 : vector<16x128xf32>
    %cst_241 = arith.constant 5.000000e-01 : f32
    %656 = vector.broadcast %cst_241 : f32 to vector<16x128xf32>
    %657 = arith.mulf %656, %655 : vector<16x128xf32>
    %cst_242 = arith.constant 5.000000e-01 : f32
    %658 = vector.broadcast %cst_242 : f32 to vector<16x128xf32>
    %659 = arith.addf %657, %658 : vector<16x128xf32>
    %660 = vector.extract_strided_slice %643 {offsets = [0, 256], sizes = [16, 128], strides = [1, 1]} : vector<16x512xf32> to vector<16x128xf32>
    %661 = math.tanh %660 : vector<16x128xf32>
    %662 = vector.extract_strided_slice %643 {offsets = [0, 384], sizes = [16, 128], strides = [1, 1]} : vector<16x512xf32> to vector<16x128xf32>
    %cst_243 = arith.constant 5.000000e-01 : f32
    %663 = vector.broadcast %cst_243 : f32 to vector<16x128xf32>
    %664 = arith.mulf %663, %662 : vector<16x128xf32>
    %665 = math.tanh %664 : vector<16x128xf32>
    %cst_244 = arith.constant 5.000000e-01 : f32
    %666 = vector.broadcast %cst_244 : f32 to vector<16x128xf32>
    %667 = arith.mulf %666, %665 : vector<16x128xf32>
    %cst_245 = arith.constant 5.000000e-01 : f32
    %668 = vector.broadcast %cst_245 : f32 to vector<16x128xf32>
    %669 = arith.addf %667, %668 : vector<16x128xf32>
    %670 = arith.mulf %659, %632 : vector<16x128xf32>
    %671 = arith.mulf %651, %661 : vector<16x128xf32>
    %672 = arith.addf %670, %671 : vector<16x128xf32>
    %673 = math.tanh %672 : vector<16x128xf32>
    %674 = arith.mulf %669, %673 : vector<16x128xf32>
    %c7_i32_246 = arith.constant 7 : i32
    %675 = arith.index_cast %c7_i32_246 : i32 to index
    %c0_247 = arith.constant 0 : index
    %c0_248 = arith.constant 0 : index
    %676 = vector.load %arg11[%675, %c0_247, %c0_248] : memref<8x16x512xbf16, #tpu.memory_space<vmem>>, vector<1x16x512xbf16>
    %677 = vector.shape_cast %676 : vector<1x16x512xbf16> to vector<16x512xbf16>
    %678 = arith.extf %677 : vector<16x512xbf16> to vector<16x512xf32>
    %679 = vector.broadcast %390 : vector<1x512xf32> to vector<16x512xf32>
    %680 = arith.addf %678, %679 : vector<16x512xf32>
    %681 = arith.truncf %674 : vector<16x128xf32> to vector<16x128xbf16>
    %cst_249 = arith.constant dense<0.000000e+00> : vector<16x512xf32>
    %682 = tpu.matmul %681, %389, %cst_249 {dimension_numbers = #tpu.dot_dimension_numbers<[1], [0], [0], [1], [0, 0, 1, 1], [], []>} : vector<16x128xbf16>, vector<128x512xbf16>, vector<16x512xf32> -> vector<16x512xf32>
    %683 = arith.addf %680, %682 : vector<16x512xf32>
    %684 = vector.extract_strided_slice %683 {offsets = [0, 0], sizes = [16, 128], strides = [1, 1]} : vector<16x512xf32> to vector<16x128xf32>
    %cst_250 = arith.constant 5.000000e-01 : f32
    %685 = vector.broadcast %cst_250 : f32 to vector<16x128xf32>
    %686 = arith.mulf %685, %684 : vector<16x128xf32>
    %687 = math.tanh %686 : vector<16x128xf32>
    %cst_251 = arith.constant 5.000000e-01 : f32
    %688 = vector.broadcast %cst_251 : f32 to vector<16x128xf32>
    %689 = arith.mulf %688, %687 : vector<16x128xf32>
    %cst_252 = arith.constant 5.000000e-01 : f32
    %690 = vector.broadcast %cst_252 : f32 to vector<16x128xf32>
    %691 = arith.addf %689, %690 : vector<16x128xf32>
    %692 = vector.extract_strided_slice %683 {offsets = [0, 128], sizes = [16, 128], strides = [1, 1]} : vector<16x512xf32> to vector<16x128xf32>
    %cst_253 = arith.constant 5.000000e-01 : f32
    %693 = vector.broadcast %cst_253 : f32 to vector<16x128xf32>
    %694 = arith.mulf %693, %692 : vector<16x128xf32>
    %695 = math.tanh %694 : vector<16x128xf32>
    %cst_254 = arith.constant 5.000000e-01 : f32
    %696 = vector.broadcast %cst_254 : f32 to vector<16x128xf32>
    %697 = arith.mulf %696, %695 : vector<16x128xf32>
    %cst_255 = arith.constant 5.000000e-01 : f32
    %698 = vector.broadcast %cst_255 : f32 to vector<16x128xf32>
    %699 = arith.addf %697, %698 : vector<16x128xf32>
    %700 = vector.extract_strided_slice %683 {offsets = [0, 256], sizes = [16, 128], strides = [1, 1]} : vector<16x512xf32> to vector<16x128xf32>
    %701 = math.tanh %700 : vector<16x128xf32>
    %702 = vector.extract_strided_slice %683 {offsets = [0, 384], sizes = [16, 128], strides = [1, 1]} : vector<16x512xf32> to vector<16x128xf32>
    %cst_256 = arith.constant 5.000000e-01 : f32
    %703 = vector.broadcast %cst_256 : f32 to vector<16x128xf32>
    %704 = arith.mulf %703, %702 : vector<16x128xf32>
    %705 = math.tanh %704 : vector<16x128xf32>
    %cst_257 = arith.constant 5.000000e-01 : f32
    %706 = vector.broadcast %cst_257 : f32 to vector<16x128xf32>
    %707 = arith.mulf %706, %705 : vector<16x128xf32>
    %cst_258 = arith.constant 5.000000e-01 : f32
    %708 = vector.broadcast %cst_258 : f32 to vector<16x128xf32>
    %709 = arith.addf %707, %708 : vector<16x128xf32>
    %710 = arith.mulf %699, %672 : vector<16x128xf32>
    %711 = arith.mulf %691, %701 : vector<16x128xf32>
    %712 = arith.addf %710, %711 : vector<16x128xf32>
    %713 = math.tanh %712 : vector<16x128xf32>
    %714 = arith.mulf %709, %713 : vector<16x128xf32>
    %c8_i32_259 = arith.constant 8 : i32
    %c1_260 = arith.constant 1 : index
    %c0_261 = arith.constant 0 : index
    %c0_262 = arith.constant 0 : index
    %715 = vector.load %arg9[%c1_260, %c0_261, %c0_262] : memref<2x16x128xf32, #tpu.memory_space<vmem>>, vector<1x16x128xf32>
    %716 = vector.shape_cast %715 : vector<1x16x128xf32> to vector<16x128xf32>
    %717 = vector.shape_cast %714 : vector<16x128xf32> to vector<1x16x128xf32>
    tpu.vector_store %arg9[%c1_260, %c0_261, %c0_262], %717 {strides = array<i32>} : memref<2x16x128xf32, #tpu.memory_space<vmem>>, vector<1x16x128xf32>,
    %c1_263 = arith.constant 1 : index
    %c0_264 = arith.constant 0 : index
    %c0_265 = arith.constant 0 : index
    %718 = vector.load %arg10[%c1_263, %c0_264, %c0_265] : memref<2x16x128xf32, #tpu.memory_space<vmem>>, vector<1x16x128xf32>
    %719 = vector.shape_cast %718 : vector<1x16x128xf32> to vector<16x128xf32>
    %720 = vector.shape_cast %712 : vector<16x128xf32> to vector<1x16x128xf32>
    tpu.vector_store %arg10[%c1_263, %c0_264, %c0_265], %720 {strides = array<i32>} : memref<2x16x128xf32, #tpu.memory_space<vmem>>, vector<1x16x128xf32>,
    return
  }
  func.func @transform_0(%arg0: i32, %arg1: i32) -> (i32, i32, i32) {
    %c0_i32 = arith.constant 0 : i32
    %c0_i32_0 = arith.constant 0 : i32
    return %arg1, %arg0, %c0_i32 : i32, i32, i32
  }
  func.func @transform_1(%arg0: i32, %arg1: i32) -> (i32, i32) {
    %c0_i32 = arith.constant 0 : i32
    %c0_i32_0 = arith.constant 0 : i32
    %c0_i32_1 = arith.constant 0 : i32
    return %c0_i32, %c0_i32_0 : i32, i32
  }
  func.func @transform_2(%arg0: i32, %arg1: i32) -> (i32, i32) {
    %c0_i32 = arith.constant 0 : i32
    %c0_i32_0 = arith.constant 0 : i32
    %c0_i32_1 = arith.constant 0 : i32
    return %c0_i32, %c0_i32_0 : i32, i32
  }
  func.func @transform_3(%arg0: i32, %arg1: i32) -> (i32, i32) {
    %c0_i32 = arith.constant 0 : i32
    %c0_i32_0 = arith.constant 0 : i32
    %c0_i32_1 = arith.constant 0 : i32
    return %c0_i32, %c0_i32_0 : i32, i32
  }
  func.func @transform_4(%arg0: i32, %arg1: i32) -> (i32, i32) {
    %c0_i32 = arith.constant 0 : i32
    %c0_i32_0 = arith.constant 0 : i32
    %c0_i32_1 = arith.constant 0 : i32
    return %c0_i32, %c0_i32_0 : i32, i32
  }
  func.func @transform_5(%arg0: i32, %arg1: i32) -> (i32, i32) {
    %c0_i32 = arith.constant 0 : i32
    %c0_i32_0 = arith.constant 0 : i32
    %c0_i32_1 = arith.constant 0 : i32
    return %c0_i32, %c0_i32_0 : i32, i32
  }
  func.func @transform_6(%arg0: i32, %arg1: i32) -> (i32, i32) {
    %c0_i32 = arith.constant 0 : i32
    %c0_i32_0 = arith.constant 0 : i32
    %c0_i32_1 = arith.constant 0 : i32
    return %c0_i32, %c0_i32_0 : i32, i32
  }
  func.func @transform_7(%arg0: i32, %arg1: i32) -> (i32, i32, i32) {
    %c0_i32 = arith.constant 0 : i32
    %c0_i32_0 = arith.constant 0 : i32
    %c0_i32_1 = arith.constant 0 : i32
    return %c0_i32, %arg0, %c0_i32_0 : i32, i32, i32
  }
  func.func @transform_8(%arg0: i32, %arg1: i32) -> (i32, i32, i32) {
    %c0_i32 = arith.constant 0 : i32
    %c0_i32_0 = arith.constant 0 : i32
    %c0_i32_1 = arith.constant 0 : i32
    return %c0_i32, %arg0, %c0_i32_0 : i32, i32, i32
  }
}

</mosaic_0001>

<llo_original>
// kernel: tpu_custom_call.1
$region0: #{tpu_custom_call.1}
  #allocation0 [shape = 'u32[]', space=smem, size = 0x4, offset = 0x4, fixed_abs, tag = 'smem constant byte address 0x4 - core index']
  #allocation1 [shape = 'u32[72,128]{1,0:T(1,128)}', space=vmem, size = 0x9000, scoped, tag = 'internal scratch']
  #allocation2 [shape = 'bf16[8,16,512]{2,1,0:T(8,128)(2,1)}', space=vmem, size = 0x20000, scoped, tag = 'scratch operand']
  #allocation3 [shape = 'bf16[8,16,128]{2,1,0:T(8,128)(2,1)}', space=vmem, size = 0x8000, scoped, tag = 'scratch operand']
  %s0 = inlined_call_operand.hbm [shape: bf16[8,16,128], index: 0, kind: input, shape index: {}]
  %s1 = inlined_call_operand.hbm [shape: bf16[128,512], index: 1, kind: input, shape index: {}]
  %s2 = inlined_call_operand.hbm [shape: bf16[128,512], index: 2, kind: input, shape index: {}]
  %s3 = inlined_call_operand.hbm [shape: bf16[128,512], index: 3, kind: input, shape index: {}]
  %s4 = inlined_call_operand.hbm [shape: bf16[128,512], index: 4, kind: input, shape index: {}]
  %s5 = inlined_call_operand.vmem [shape: f32[1,512], index: 5, kind: input, shape index: {}]
  %s6 = inlined_call_operand.hbm [shape: f32[1,512], index: 6, kind: input, shape index: {}]
  %s7 = inlined_call_operand.hbm [shape: f32[2,16,128], index: 7, kind: output, shape index: {0}]
  %s8 = inlined_call_operand.hbm [shape: f32[2,16,128], index: 8, kind: output, shape index: {1}]
  %9 = xla_tuple %s7, %s8
  %s10 = sld [smem:[#allocation0]]
  $region74: #{tpu_custom_call.1} parent=0
    _
  %s12 = ssub.s32 1, %s10
  %s13 = scalar_select 0, %s12, %s10
  $region1: #{tpu_custom_call.1} parent=0
    #allocation4 [shape = 'u8[32768]{0}', space=vmem, size = 0x8000, scoped, tag = 'input window, operand 0, single buffered']
    #allocation5 [shape = 's32[1]{0}', space=sflag, size = 0x4, scoped, tag = 'scoped memory for tpu_custom_call.1']
    #allocation6 [shape = 's32[1]{0}', space=sflag, size = 0x4, scoped, tag = 'scoped memory for tpu_custom_call.1']
    #allocation7 [shape = 'u8[131072]{0}', space=vmem, size = 0x20000, scoped, tag = 'input window, operand 1, single buffered']
    #allocation8 [shape = 's32[1]{0}', space=sflag, size = 0x4, scoped, tag = 'scoped memory for tpu_custom_call.1']
    #allocation9 [shape = 'u8[131072]{0}', space=vmem, size = 0x20000, scoped, tag = 'input window, operand 2, single buffered']
    #allocation10 [shape = 'u8[131072]{0}', space=vmem, size = 0x20000, scoped, tag = 'input window, operand 3, single buffered']
    #allocation11 [shape = 's32[1]{0}', space=sflag, size = 0x4, scoped, tag = 'scoped memory for tpu_custom_call.1']
    #allocation12 [shape = 'u8[131072]{0}', space=vmem, size = 0x20000, scoped, tag = 'input window, operand 4, single buffered']
    #allocation13 [shape = 'u8[2048]{0}', space=vmem, size = 0x800, scoped, tag = 'input window, operand 6, single buffered']
    #allocation14 [shape = 's32[1]{0}', space=sflag, size = 0x4, scoped, tag = 'scoped memory for tpu_custom_call.1']
    #allocation15 [shape = 'u8[16384]{0}', space=vmem, size = 0x4000, scoped, tag = 'output window, operand 0, single buffered']
    #allocation16 [shape = 'u8[16384]{0}', space=vmem, size = 0x4000, scoped, tag = 'output window, operand 1, single buffered']
    #allocation17 [shape = 's32[1]{0}', space=sflag, size = 0x4, scoped, tag = 'scoped memory for tpu_custom_call.1']
    %14 = vsyncpa [#allocation5], 0
    %15 = vsyncpa [#allocation8], 0
    %16 = vsyncpa [#allocation11], 0
    %17 = vsyncpa [#allocation14], 0
    %18 = vsyncpa [#allocation6], 0
    %19 = vsyncpa [#allocation17], 0
    // Predicated region
    $region2: #{tpu_custom_call.1} parent=1 // pred_check
      _
    $region3: #{tpu_custom_call.1} parent=1 // pred_check_branch
      %21 = sbr.rel (0) target = $region5
    $region4: #{tpu_custom_call.1} parent=1 // pred_region
      %23 = vsyncadd [#allocation5], 0
      %s24 = sshll.u32 %s0, 4
      %s25 = int_to_ptr.hbm [resolvable:$true] %s24
      %s26 = sshll.u32 [#allocation4], 4
      %s27 = int_to_ptr.vmem [resolvable:$true] %s26
      %32 = dma.hbm_to_vmem [thread:$0]  %s25, 1024, %s27, [#allocation5], 64, 64, 4
    $region5: #{tpu_custom_call.1} parent=1 // pred_fallthru
      _
    // Predicated region
    $region6: #{tpu_custom_call.1} parent=1 // pred_check
      _
    $region7: #{tpu_custom_call.1} parent=1 // pred_check_branch
      %34 = sbr.rel (0) target = $region9
    $region8: #{tpu_custom_call.1} parent=1 // pred_region
      %36 = vsyncadd [#allocation8], 0
      %s37 = sshll.u32 %s1, 4
      %s38 = int_to_ptr.hbm [resolvable:$true] %s37
      %s39 = sshll.u32 [#allocation7], 4
      %s40 = int_to_ptr.vmem [resolvable:$true] %s39
      %45 = dma.hbm_to_vmem [thread:$0]  %s38, 4096, %s40, [#allocation8], 256, 256, 16
    $region9: #{tpu_custom_call.1} parent=1 // pred_fallthru
      _
    // Predicated region
    $region10: #{tpu_custom_call.1} parent=1 // pred_check
      _
    $region11: #{tpu_custom_call.1} parent=1 // pred_check_branch
      %47 = sbr.rel (0) target = $region13
    $region12: #{tpu_custom_call.1} parent=1 // pred_region
      %49 = vsyncadd [#allocation8], 0
      %s50 = sshll.u32 %s2, 4
      %s51 = int_to_ptr.hbm [resolvable:$true] %s50
      %s52 = sshll.u32 [#allocation9], 4
      %s53 = int_to_ptr.vmem [resolvable:$true] %s52
      %58 = dma.hbm_to_vmem [thread:$0]  %s51, 4096, %s53, [#allocation8], 256, 256, 16
    $region13: #{tpu_custom_call.1} parent=1 // pred_fallthru
      _
    // Predicated region
    $region14: #{tpu_custom_call.1} parent=1 // pred_check
      _
    $region15: #{tpu_custom_call.1} parent=1 // pred_check_branch
      %60 = sbr.rel (0) target = $region17
    $region16: #{tpu_custom_call.1} parent=1 // pred_region
      %62 = vsyncadd [#allocation11], 0
      %s63 = sshll.u32 %s3, 4
      %s64 = int_to_ptr.hbm [resolvable:$true] %s63
      %s65 = sshll.u32 [#allocation10], 4
      %s66 = int_to_ptr.vmem [resolvable:$true] %s65
      %71 = dma.hbm_to_vmem [thread:$0]  %s64, 4096, %s66, [#allocation11], 256, 256, 16
    $region17: #{tpu_custom_call.1} parent=1 // pred_fallthru
      _
    // Predicated region
    $region18: #{tpu_custom_call.1} parent=1 // pred_check
      _
    $region19: #{tpu_custom_call.1} parent=1 // pred_check_branch
      %73 = sbr.rel (0) target = $region21
    $region20: #{tpu_custom_call.1} parent=1 // pred_region
      %75 = vsyncadd [#allocation11], 0
      %s76 = sshll.u32 %s4, 4
      %s77 = int_to_ptr.hbm [resolvable:$true] %s76
      %s78 = sshll.u32 [#allocation12], 4
      %s79 = int_to_ptr.vmem [resolvable:$true] %s78
      %84 = dma.hbm_to_vmem [thread:$0]  %s77, 4096, %s79, [#allocation11], 256, 256, 16
    $region21: #{tpu_custom_call.1} parent=1 // pred_fallthru
      _
    // Predicated region
    $region22: #{tpu_custom_call.1} parent=1 // pred_check
      _
    $region23: #{tpu_custom_call.1} parent=1 // pred_check_branch
      %86 = sbr.rel (0) target = $region25
    $region24: #{tpu_custom_call.1} parent=1 // pred_region
      _
    $region25: #{tpu_custom_call.1} parent=1 // pred_fallthru
      _
    // Predicated region
    $region26: #{tpu_custom_call.1} parent=1 // pred_check
      _
    $region27: #{tpu_custom_call.1} parent=1 // pred_check_branch
      %88 = sbr.rel (0) target = $region29
    $region28: #{tpu_custom_call.1} parent=1 // pred_region
      %90 = vsyncadd [#allocation14], 0
      %s92 = sshll.u32 %s6, 4
      %s93 = int_to_ptr.hbm [resolvable:$true] %s92
      %s94 = sshll.u32 [#allocation13], 4
      %s95 = int_to_ptr.vmem [resolvable:$true] %s94
      %97 = dma.hbm_to_vmem [thread:$0]  %s93, 64, %s95, [#allocation14]
    $region29: #{tpu_custom_call.1} parent=1 // pred_fallthru
      _
    // Predicated region
    $region30: #{tpu_custom_call.1} parent=1 // pred_check
      _
    $region31: #{tpu_custom_call.1} parent=1 // pred_check_branch
      %99 = sbr.rel (0) target = $region33
    $region32: #{tpu_custom_call.1} parent=1 // pred_region
      %101 = dma.done [#allocation5], 1024
    $region33: #{tpu_custom_call.1} parent=1 // pred_fallthru
      _
    // Predicated region
    $region34: #{tpu_custom_call.1} parent=1 // pred_check
      _
    $region35: #{tpu_custom_call.1} parent=1 // pred_check_branch
      %103 = sbr.rel (0) target = $region37
    $region36: #{tpu_custom_call.1} parent=1 // pred_region
      %105 = dma.done [#allocation8], 4096
    $region37: #{tpu_custom_call.1} parent=1 // pred_fallthru
      _
    // Predicated region
    $region38: #{tpu_custom_call.1} parent=1 // pred_check
      _
    $region39: #{tpu_custom_call.1} parent=1 // pred_check_branch
      %107 = sbr.rel (0) target = $region41
    $region40: #{tpu_custom_call.1} parent=1 // pred_region
      %109 = dma.done [#allocation8], 4096
    $region41: #{tpu_custom_call.1} parent=1 // pred_fallthru
      _
    // Predicated region
    $region42: #{tpu_custom_call.1} parent=1 // pred_check
      _
    $region43: #{tpu_custom_call.1} parent=1 // pred_check_branch
      %111 = sbr.rel (0) target = $region45
    $region44: #{tpu_custom_call.1} parent=1 // pred_region
      %113 = dma.done [#allocation11], 4096
    $region45: #{tpu_custom_call.1} parent=1 // pred_fallthru
      _
    // Predicated region
    $region46: #{tpu_custom_call.1} parent=1 // pred_check
      _
    $region47: #{tpu_custom_call.1} parent=1 // pred_check_branch
      %115 = sbr.rel (0) target = $region49
    $region48: #{tpu_custom_call.1} parent=1 // pred_region
      %117 = dma.done [#allocation11], 4096
    $region49: #{tpu_custom_call.1} parent=1 // pred_fallthru
      _
    // Predicated region
    $region50: #{tpu_custom_call.1} parent=1 // pred_check
      _
    $region51: #{tpu_custom_call.1} parent=1 // pred_check_branch
      %119 = sbr.rel (0) target = $region53
    $region52: #{tpu_custom_call.1} parent=1 // pred_region
      %121 = dma.done [#allocation14], 64
    $region53: #{tpu_custom_call.1} parent=1 // pred_fallthru
      _
    %p122 = scmp.eq.s32.totalorder 0, 0
    // Predicated region
    $region54: #{tpu_custom_call.1} parent=1 // pred_check
      %p123 = pneg %p122
    $region55: #{tpu_custom_call.1} parent=1 // pred_check_branch
      %125 = sbr.rel (%p123) target = $region57
    $region56: #{tpu_custom_call.1} parent=1 // pred_region
      %126 = vst [vmem:[#allocation15] sm:$0xff] 0.0
      %127 = vst [vmem:[#allocation15 + $0x8] sm:$0xff] 0.0
      %128 = vst [vmem:[#allocation15 + $0x10] sm:$0xff] 0.0
      %129 = vst [vmem:[#allocation15 + $0x18] sm:$0xff] 0.0
      %130 = vst [vmem:[#allocation16] sm:$0xff] 0.0
      %131 = vst [vmem:[#allocation16 + $0x8] sm:$0xff] 0.0
      %132 = vst [vmem:[#allocation16 + $0x10] sm:$0xff] 0.0
      %133 = vst [vmem:[#allocation16 + $0x18] sm:$0xff] 0.0
    $region57: #{tpu_custom_call.1} parent=1 // pred_fallthru
      _
    %v134 = vld [vmem:[#allocation4] sm:$0xf]
    %v135 = vld [vmem:[#allocation4 + $0x4] sm:$0xf]
    %v136 = vld [vmem:[#allocation4 + $0x8] sm:$0xf]
    %v137 = vld [vmem:[#allocation4 + $0xc] sm:$0xf]
    %v138 = vld [vmem:[#allocation4 + $0x10] sm:$0xf]
    %v139 = vld [vmem:[#allocation4 + $0x14] sm:$0xf]
    %v140 = vld [vmem:[#allocation4 + $0x18] sm:$0xf]
    %v141 = vld [vmem:[#allocation4 + $0x1c] sm:$0xf]
    %v142 = vld [vmem:[#allocation4 + $0x20] sm:$0xf]
    %v143 = vld [vmem:[#allocation4 + $0x24] sm:$0xf]
    %v144 = vld [vmem:[#allocation4 + $0x28] sm:$0xf]
    %v145 = vld [vmem:[#allocation4 + $0x2c] sm:$0xf]
    %v146 = vld [vmem:[#allocation4 + $0x30] sm:$0xf]
    %v147 = vld [vmem:[#allocation4 + $0x34] sm:$0xf]
    %v148 = vld [vmem:[#allocation4 + $0x38] sm:$0xf]
    %v149 = vld [vmem:[#allocation4 + $0x3c] sm:$0xf]
    %v150 = vld [vmem:[#allocation7] sm:$0xff]
    %v151 = vld [vmem:[#allocation7 + $0x8] sm:$0xff]
    %v152 = vld [vmem:[#allocation7 + $0x10] sm:$0xff]
    %v153 = vld [vmem:[#allocation7 + $0x18] sm:$0xff]
    %v154 = vld [vmem:[#allocation7 + $0x20] sm:$0xff]
    %v155 = vld [vmem:[#allocation7 + $0x28] sm:$0xff]
    %v156 = vld [vmem:[#allocation7 + $0x30] sm:$0xff]
    %v157 = vld [vmem:[#allocation7 + $0x38] sm:$0xff]
    %v158 = vld [vmem:[#allocation7 + $0x40] sm:$0xff]
    %v159 = vld [vmem:[#allocation7 + $0x48] sm:$0xff]
    %v160 = vld [vmem:[#allocation7 + $0x50] sm:$0xff]
    %v161 = vld [vmem:[#allocation7 + $0x58] sm:$0xff]
    %v162 = vld [vmem:[#allocation7 + $0x60] sm:$0xff]
    %v163 = vld [vmem:[#allocation7 + $0x68] sm:$0xff]
    %v164 = vld [vmem:[#allocation7 + $0x70] sm:$0xff]
    %v165 = vld [vmem:[#allocation7 + $0x78] sm:$0xff]
    %v166 = vld [vmem:[#allocation7 + $0x80] sm:$0xff]
    %v167 = vld [vmem:[#allocation7 + $0x88] sm:$0xff]
    %v168 = vld [vmem:[#allocation7 + $0x90] sm:$0xff]
    %v169 = vld [vmem:[#allocation7 + $0x98] sm:$0xff]
    %v170 = vld [vmem:[#allocation7 + $0xa0] sm:$0xff]
    %v171 = vld [vmem:[#allocation7 + $0xa8] sm:$0xff]
    %v172 = vld [vmem:[#allocation7 + $0xb0] sm:$0xff]
    %v173 = vld [vmem:[#allocation7 + $0xb8] sm:$0xff]
    %v174 = vld [vmem:[#allocation7 + $0xc0] sm:$0xff]
    %v175 = vld [vmem:[#allocation7 + $0xc8] sm:$0xff]
    %v176 = vld [vmem:[#allocation7 + $0xd0] sm:$0xff]
    %v177 = vld [vmem:[#allocation7 + $0xd8] sm:$0xff]
    %v178 = vld [vmem:[#allocation7 + $0xe0] sm:$0xff]
    %v179 = vld [vmem:[#allocation7 + $0xe8] sm:$0xff]
    %v180 = vld [vmem:[#allocation7 + $0xf0] sm:$0xff]
    %v181 = vld [vmem:[#allocation7 + $0xf8] sm:$0xff]
    %v198 = vunpack.c.l.b16 %v134
    %v199 = vunpack.c.l.b16 %v135
    %v200 = vunpack.c.l.b16 %v136
    %v201 = vunpack.c.l.b16 %v137
    %v202 = vunpack.c.l.b16 %v138
    %v203 = vunpack.c.l.b16 %v139
    %v204 = vunpack.c.l.b16 %v140
    %v205 = vunpack.c.l.b16 %v141
    %v206 = vunpack.c.l.b16 %v142
    %v207 = vunpack.c.l.b16 %v143
    %v208 = vunpack.c.l.b16 %v144
    %v209 = vunpack.c.l.b16 %v145
    %v210 = vunpack.c.l.b16 %v146
    %v211 = vunpack.c.l.b16 %v147
    %v212 = vunpack.c.l.b16 %v148
    %v213 = vunpack.c.l.b16 %v149
    %v214 = vpack.c.b16 %v199, %v198
    %v215 = vpack.c.b16 %v201, %v200
    %v216 = vpack.c.b16 %v203, %v202
    %v217 = vpack.c.b16 %v205, %v204
    %v218 = vpack.c.b16 %v207, %v206
    %v219 = vpack.c.b16 %v209, %v208
    %v220 = vpack.c.b16 %v211, %v210
    %v221 = vpack.c.b16 %v213, %v212
    %v262 = vunpack.c.l.b16 %v150
    %v263 = vunpack.c.h.b16 %v150
    %v264 = vunpack.c.l.b16 %v151
    %v265 = vunpack.c.h.b16 %v151
    %v266 = vunpack.c.l.b16 %v152
    %v267 = vunpack.c.h.b16 %v152
    %v268 = vunpack.c.l.b16 %v153
    %v269 = vunpack.c.h.b16 %v153
    %v270 = vunpack.c.l.b16 %v154
    %v271 = vunpack.c.h.b16 %v154
    %v272 = vunpack.c.l.b16 %v155
    %v273 = vunpack.c.h.b16 %v155
    %v274 = vunpack.c.l.b16 %v156
    %v275 = vunpack.c.h.b16 %v156
    %v276 = vunpack.c.l.b16 %v157
    %v277 = vunpack.c.h.b16 %v157
    %v278 = vunpack.c.l.b16 %v158
    %v279 = vunpack.c.h.b16 %v158
    %v280 = vunpack.c.l.b16 %v159
    %v281 = vunpack.c.h.b16 %v159
    %v282 = vunpack.c.l.b16 %v160
    %v283 = vunpack.c.h.b16 %v160
    %v284 = vunpack.c.l.b16 %v161
    %v285 = vunpack.c.h.b16 %v161
    %v286 = vunpack.c.l.b16 %v162
    %v287 = vunpack.c.h.b16 %v162
    %v288 = vunpack.c.l.b16 %v163
    %v289 = vunpack.c.h.b16 %v163
    %v290 = vunpack.c.l.b16 %v164
    %v291 = vunpack.c.h.b16 %v164
    %v292 = vunpack.c.l.b16 %v165
    %v293 = vunpack.c.h.b16 %v165
    %v294 = vunpack.c.l.b16 %v166
    %v295 = vunpack.c.h.b16 %v166
    %v296 = vunpack.c.l.b16 %v167
    %v297 = vunpack.c.h.b16 %v167
    %v298 = vunpack.c.l.b16 %v168
    %v299 = vunpack.c.h.b16 %v168
    %v300 = vunpack.c.l.b16 %v169
    %v301 = vunpack.c.h.b16 %v169
    %v302 = vunpack.c.l.b16 %v170
    %v303 = vunpack.c.h.b16 %v170
    %v304 = vunpack.c.l.b16 %v171
    %v305 = vunpack.c.h.b16 %v171
    %v306 = vunpack.c.l.b16 %v172
    %v307 = vunpack.c.h.b16 %v172
    %v308 = vunpack.c.l.b16 %v173
    %v309 = vunpack.c.h.b16 %v173
    %v310 = vunpack.c.l.b16 %v174
    %v311 = vunpack.c.h.b16 %v174
    %v312 = vunpack.c.l.b16 %v175
    %v313 = vunpack.c.h.b16 %v175
    %v314 = vunpack.c.l.b16 %v176
    %v315 = vunpack.c.h.b16 %v176
    %v316 = vunpack.c.l.b16 %v177
    %v317 = vunpack.c.h.b16 %v177
    %v318 = vunpack.c.l.b16 %v178
    %v319 = vunpack.c.h.b16 %v178
    %v320 = vunpack.c.l.b16 %v179
    %v321 = vunpack.c.h.b16 %v179
    %v322 = vunpack.c.l.b16 %v180
    %v323 = vunpack.c.h.b16 %v180
    %v324 = vunpack.c.l.b16 %v181
    %v325 = vunpack.c.h.b16 %v181
    %v326 = vpack.c.b16 %v266, %v262
    %v327 = vpack.c.b16 %v267, %v263
    %v328 = vpack.c.b16 %v268, %v264
    %v329 = vpack.c.b16 %v269, %v265
    %v330 = vpack.c.b16 %v274, %v270
    %v331 = vpack.c.b16 %v275, %v271
    %v332 = vpack.c.b16 %v276, %v272
    %v333 = vpack.c.b16 %v277, %v273
    %v334 = vpack.c.b16 %v282, %v278
    %v335 = vpack.c.b16 %v283, %v279
    %v336 = vpack.c.b16 %v284, %v280
    %v337 = vpack.c.b16 %v285, %v281
    %v338 = vpack.c.b16 %v290, %v286
    %v339 = vpack.c.b16 %v291, %v287
    %v340 = vpack.c.b16 %v292, %v288
    %v341 = vpack.c.b16 %v293, %v289
    %v342 = vpack.c.b16 %v298, %v294
    %v343 = vpack.c.b16 %v299, %v295
    %v344 = vpack.c.b16 %v300, %v296
    %v345 = vpack.c.b16 %v301, %v297
    %v346 = vpack.c.b16 %v306, %v302
    %v347 = vpack.c.b16 %v307, %v303
    %v348 = vpack.c.b16 %v308, %v304
    %v349 = vpack.c.b16 %v309, %v305
    %v350 = vpack.c.b16 %v314, %v310
    %v351 = vpack.c.b16 %v315, %v311
    %v352 = vpack.c.b16 %v316, %v312
    %v353 = vpack.c.b16 %v317, %v313
    %v354 = vpack.c.b16 %v322, %v318
    %v355 = vpack.c.b16 %v323, %v319
    %v356 = vpack.c.b16 %v324, %v320
    %v357 = vpack.c.b16 %v325, %v321
    %390 = vmatpush.bf16.msra.mxu0 %v354
    %391 = vmatpush.bf16.msra.mxu0 %v350
    %392 = vmatpush.bf16.msra.mxu0 %v346
    %393 = vmatpush.bf16.msra.mxu0 %v342
    %394 = vmatpush.bf16.msra.mxu0 %v338
    %395 = vmatpush.bf16.msra.mxu0 %v334
    %396 = vmatpush.bf16.msra.mxu0 %v330
    %397 = vmatpush.bf16.msra.mxu0 %v326
    %398 = vmatmul.bf16.gmra.mxu0 %v214
    %v399 = vpop.f32.mrf.mxu0
    %v400 = vadd.f32 0.0, %v399
    %v401 = vpop.f32.mrf.mxu0
    %v402 = vadd.f32 0.0, %v401
    %403 = vmatmul.bf16.gmra.mxu0 %v215
    %v404 = vpop.f32.mrf.mxu0
    %v405 = vadd.f32 0.0, %v404
    %v406 = vpop.f32.mrf.mxu0
    %v407 = vadd.f32 0.0, %v406
    %408 = vmatmul.bf16.gmra.mxu0 %v216
    %v409 = vpop.f32.mrf.mxu0
    %v410 = vadd.f32 0.0, %v409
    %v411 = vpop.f32.mrf.mxu0
    %v412 = vadd.f32 0.0, %v411
    %413 = vmatmul.bf16.gmra.mxu0 %v217
    %v414 = vpop.f32.mrf.mxu0
    %v415 = vadd.f32 0.0, %v414
    %v416 = vpop.f32.mrf.mxu0
    %v417 = vadd.f32 0.0, %v416
    %418 = vmatmul.bf16.gmra.mxu0 %v218
    %v419 = vpop.f32.mrf.mxu0
    %v420 = vadd.f32 0.0, %v419
    %v421 = vpop.f32.mrf.mxu0
    %v422 = vadd.f32 0.0, %v421
    %423 = vmatmul.bf16.gmra.mxu0 %v219
    %v424 = vpop.f32.mrf.mxu0
    %v425 = vadd.f32 0.0, %v424
    %v426 = vpop.f32.mrf.mxu0
    %v427 = vadd.f32 0.0, %v426
    %428 = vmatmul.bf16.gmra.mxu0 %v220
    %v429 = vpop.f32.mrf.mxu0
    %v430 = vadd.f32 0.0, %v429
    %v431 = vpop.f32.mrf.mxu0
    %v432 = vadd.f32 0.0, %v431
    %433 = vmatmul.bf16.gmra.mxu0 %v221
    %v434 = vpop.f32.mrf.mxu0
    %v435 = vadd.f32 0.0, %v434
    %v436 = vpop.f32.mrf.mxu0
    %v437 = vadd.f32 0.0, %v436
    %438 = vdwg.mxu0
    %439 = vmatpush.bf16.msra.mxu0 %v355
    %440 = vmatpush.bf16.msra.mxu0 %v351
    %441 = vmatpush.bf16.msra.mxu0 %v347
    %442 = vmatpush.bf16.msra.mxu0 %v343
    %443 = vmatpush.bf16.msra.mxu0 %v339
    %444 = vmatpush.bf16.msra.mxu0 %v335
    %445 = vmatpush.bf16.msra.mxu0 %v331
    %446 = vmatpush.bf16.msra.mxu0 %v327
    %447 = vmatmul.bf16.gmra.mxu0 %v214
    %v448 = vpop.f32.mrf.mxu0
    %v449 = vadd.f32 0.0, %v448
    %v450 = vpop.f32.mrf.mxu0
    %v451 = vadd.f32 0.0, %v450
    %452 = vmatmul.bf16.gmra.mxu0 %v215
    %v453 = vpop.f32.mrf.mxu0
    %v454 = vadd.f32 0.0, %v453
    %v455 = vpop.f32.mrf.mxu0
    %v456 = vadd.f32 0.0, %v455
    %457 = vmatmul.bf16.gmra.mxu0 %v216
    %v458 = vpop.f32.mrf.mxu0
    %v459 = vadd.f32 0.0, %v458
    %v460 = vpop.f32.mrf.mxu0
    %v461 = vadd.f32 0.0, %v460
    %462 = vmatmul.bf16.gmra.mxu0 %v217
    %v463 = vpop.f32.mrf.mxu0
    %v464 = vadd.f32 0.0, %v463
    %v465 = vpop.f32.mrf.mxu0
    %v466 = vadd.f32 0.0, %v465
    %467 = vmatmul.bf16.gmra.mxu0 %v218
    %v468 = vpop.f32.mrf.mxu0
    %v469 = vadd.f32 0.0, %v468
    %v470 = vpop.f32.mrf.mxu0
    %v471 = vadd.f32 0.0, %v470
    %472 = vmatmul.bf16.gmra.mxu0 %v219
    %v473 = vpop.f32.mrf.mxu0
    %v474 = vadd.f32 0.0, %v473
    %v475 = vpop.f32.mrf.mxu0
    %v476 = vadd.f32 0.0, %v475
    %477 = vmatmul.bf16.gmra.mxu0 %v220
    %v478 = vpop.f32.mrf.mxu0
    %v479 = vadd.f32 0.0, %v478
    %v480 = vpop.f32.mrf.mxu0
    %v481 = vadd.f32 0.0, %v480
    %482 = vmatmul.bf16.gmra.mxu0 %v221
    %v483 = vpop.f32.mrf.mxu0
    %v484 = vadd.f32 0.0, %v483
    %v485 = vpop.f32.mrf.mxu0
    %v486 = vadd.f32 0.0, %v485
    %487 = vdwg.mxu0
    %488 = vmatpush.bf16.msra.mxu0 %v356
    %489 = vmatpush.bf16.msra.mxu0 %v352
    %490 = vmatpush.bf16.msra.mxu0 %v348
    %491 = vmatpush.bf16.msra.mxu0 %v344
    %492 = vmatpush.bf16.msra.mxu0 %v340
    %493 = vmatpush.bf16.msra.mxu0 %v336
    %494 = vmatpush.bf16.msra.mxu0 %v332
    %495 = vmatpush.bf16.msra.mxu0 %v328
    %496 = vmatmul.bf16.gmra.mxu0 %v214
    %v497 = vpop.f32.mrf.mxu0
    %v498 = vadd.f32 0.0, %v497
    %v499 = vpop.f32.mrf.mxu0
    %v500 = vadd.f32 0.0, %v499
    %501 = vmatmul.bf16.gmra.mxu0 %v215
    %v502 = vpop.f32.mrf.mxu0
    %v503 = vadd.f32 0.0, %v502
    %v504 = vpop.f32.mrf.mxu0
    %v505 = vadd.f32 0.0, %v504
    %506 = vmatmul.bf16.gmra.mxu0 %v216
    %v507 = vpop.f32.mrf.mxu0
    %v508 = vadd.f32 0.0, %v507
    %v509 = vpop.f32.mrf.mxu0
    %v510 = vadd.f32 0.0, %v509
    %511 = vmatmul.bf16.gmra.mxu0 %v217
    %v512 = vpop.f32.mrf.mxu0
    %v513 = vadd.f32 0.0, %v512
    %v514 = vpop.f32.mrf.mxu0
    %v515 = vadd.f32 0.0, %v514
    %516 = vmatmul.bf16.gmra.mxu0 %v218
    %v517 = vpop.f32.mrf.mxu0
    %v518 = vadd.f32 0.0, %v517
    %v519 = vpop.f32.mrf.mxu0
    %v520 = vadd.f32 0.0, %v519
    %521 = vmatmul.bf16.gmra.mxu0 %v219
    %v522 = vpop.f32.mrf.mxu0
    %v523 = vadd.f32 0.0, %v522
    %v524 = vpop.f32.mrf.mxu0
    %v525 = vadd.f32 0.0, %v524
    %526 = vmatmul.bf16.gmra.mxu0 %v220
    %v527 = vpop.f32.mrf.mxu0
    %v528 = vadd.f32 0.0, %v527
    %v529 = vpop.f32.mrf.mxu0
    %v530 = vadd.f32 0.0, %v529
    %531 = vmatmul.bf16.gmra.mxu0 %v221
    %v532 = vpop.f32.mrf.mxu0
    %v533 = vadd.f32 0.0, %v532
    %v534 = vpop.f32.mrf.mxu0
    %v535 = vadd.f32 0.0, %v534
    %536 = vdwg.mxu0
    %537 = vmatpush.bf16.msra.mxu0 %v357
    %538 = vmatpush.bf16.msra.mxu0 %v353
    %539 = vmatpush.bf16.msra.mxu0 %v349
    %540 = vmatpush.bf16.msra.mxu0 %v345
    %541 = vmatpush.bf16.msra.mxu0 %v341
    %542 = vmatpush.bf16.msra.mxu0 %v337
    %543 = vmatpush.bf16.msra.mxu0 %v333
    %544 = vmatpush.bf16.msra.mxu0 %v329
    %545 = vmatmul.bf16.gmra.mxu0 %v214
    %v546 = vpop.f32.mrf.mxu0
    %v547 = vadd.f32 0.0, %v546
    %v548 = vpop.f32.mrf.mxu0
    %v549 = vadd.f32 0.0, %v548
    %550 = vmatmul.bf16.gmra.mxu0 %v215
    %v551 = vpop.f32.mrf.mxu0
    %v552 = vadd.f32 0.0, %v551
    %v553 = vpop.f32.mrf.mxu0
    %v554 = vadd.f32 0.0, %v553
    %555 = vmatmul.bf16.gmra.mxu0 %v216
    %v556 = vpop.f32.mrf.mxu0
    %v557 = vadd.f32 0.0, %v556
    %v558 = vpop.f32.mrf.mxu0
    %v559 = vadd.f32 0.0, %v558
    %560 = vmatmul.bf16.gmra.mxu0 %v217
    %v561 = vpop.f32.mrf.mxu0
    %v562 = vadd.f32 0.0, %v561
    %v563 = vpop.f32.mrf.mxu0
    %v564 = vadd.f32 0.0, %v563
    %565 = vmatmul.bf16.gmra.mxu0 %v218
    %v566 = vpop.f32.mrf.mxu0
    %v567 = vadd.f32 0.0, %v566
    %v568 = vpop.f32.mrf.mxu0
    %v569 = vadd.f32 0.0, %v568
    %570 = vmatmul.bf16.gmra.mxu0 %v219
    %v571 = vpop.f32.mrf.mxu0
    %v572 = vadd.f32 0.0, %v571
    %v573 = vpop.f32.mrf.mxu0
    %v574 = vadd.f32 0.0, %v573
    %575 = vmatmul.bf16.gmra.mxu0 %v220
    %v576 = vpop.f32.mrf.mxu0
    %v577 = vadd.f32 0.0, %v576
    %v578 = vpop.f32.mrf.mxu0
    %v579 = vadd.f32 0.0, %v578
    %580 = vmatmul.bf16.gmra.mxu0 %v221
    %v581 = vpop.f32.mrf.mxu0
    %v582 = vadd.f32 0.0, %v581
    %v583 = vpop.f32.mrf.mxu0
    %v584 = vadd.f32 0.0, %v583
    %585 = vdwg.mxu0
    %v586 = vpack.c.bf16 %v449, %v400
    %v587 = vpack.c.bf16 %v547, %v498
    %v588 = vpack.c.bf16 %v451, %v402
    %v589 = vpack.c.bf16 %v549, %v500
    %v590 = vpack.c.bf16 %v454, %v405
    %v591 = vpack.c.bf16 %v552, %v503
    %v592 = vpack.c.bf16 %v456, %v407
    %v593 = vpack.c.bf16 %v554, %v505
    %v594 = vpack.c.bf16 %v459, %v410
    %v595 = vpack.c.bf16 %v557, %v508
    %v596 = vpack.c.bf16 %v461, %v412
    %v597 = vpack.c.bf16 %v559, %v510
    %v598 = vpack.c.bf16 %v464, %v415
    %v599 = vpack.c.bf16 %v562, %v513
    %v600 = vpack.c.bf16 %v466, %v417
    %v601 = vpack.c.bf16 %v564, %v515
    %v602 = vpack.c.bf16 %v469, %v420
    %v603 = vpack.c.bf16 %v567, %v518
    %v604 = vpack.c.bf16 %v471, %v422
    %v605 = vpack.c.bf16 %v569, %v520
    %v606 = vpack.c.bf16 %v474, %v425
    %v607 = vpack.c.bf16 %v572, %v523
    %v608 = vpack.c.bf16 %v476, %v427
    %v609 = vpack.c.bf16 %v574, %v525
    %v610 = vpack.c.bf16 %v479, %v430
    %v611 = vpack.c.bf16 %v577, %v528
    %v612 = vpack.c.bf16 %v481, %v432
    %v613 = vpack.c.bf16 %v579, %v530
    %v614 = vpack.c.bf16 %v484, %v435
    %v615 = vpack.c.bf16 %v582, %v533
    %v616 = vpack.c.bf16 %v486, %v437
    %v617 = vpack.c.bf16 %v584, %v535
    %618 = vst [vmem:[#allocation2] sm:$0xff] %v586
    %619 = vst [vmem:[#allocation2 + $0x8] sm:$0xff] %v587
    %620 = vst [vmem:[#allocation2 + $0x10] sm:$0xff] %v588
    %621 = vst [vmem:[#allocation2 + $0x18] sm:$0xff] %v589
    %622 = vst [vmem:[#allocation2 + $0x20] sm:$0xff] %v590
    %623 = vst [vmem:[#allocation2 + $0x28] sm:$0xff] %v591
    %624 = vst [vmem:[#allocation2 + $0x30] sm:$0xff] %v592
    %625 = vst [vmem:[#allocation2 + $0x38] sm:$0xff] %v593
    %626 = vst [vmem:[#allocation2 + $0x40] sm:$0xff] %v594
    %627 = vst [vmem:[#allocation2 + $0x48] sm:$0xff] %v595
    %628 = vst [vmem:[#allocation2 + $0x50] sm:$0xff] %v596
    %629 = vst [vmem:[#allocation2 + $0x58] sm:$0xff] %v597
    %630 = vst [vmem:[#allocation2 + $0x60] sm:$0xff] %v598
    %631 = vst [vmem:[#allocation2 + $0x68] sm:$0xff] %v599
    %632 = vst [vmem:[#allocation2 + $0x70] sm:$0xff] %v600
    %633 = vst [vmem:[#allocation2 + $0x78] sm:$0xff] %v601
    %634 = vst [vmem:[#allocation2 + $0x80] sm:$0xff] %v602
    %635 = vst [vmem:[#allocation2 + $0x88] sm:$0xff] %v603
    %636 = vst [vmem:[#allocation2 + $0x90] sm:$0xff] %v604
    %637 = vst [vmem:[#allocation2 + $0x98] sm:$0xff] %v605
    %638 = vst [vmem:[#allocation2 + $0xa0] sm:$0xff] %v606
    %639 = vst [vmem:[#allocation2 + $0xa8] sm:$0xff] %v607
    %640 = vst [vmem:[#allocation2 + $0xb0] sm:$0xff] %v608
    %641 = vst [vmem:[#allocation2 + $0xb8] sm:$0xff] %v609
    %642 = vst [vmem:[#allocation2 + $0xc0] sm:$0xff] %v610
    %643 = vst [vmem:[#allocation2 + $0xc8] sm:$0xff] %v611
    %644 = vst [vmem:[#allocation2 + $0xd0] sm:$0xff] %v612
    %645 = vst [vmem:[#allocation2 + $0xd8] sm:$0xff] %v613
    %646 = vst [vmem:[#allocation2 + $0xe0] sm:$0xff] %v614
    %647 = vst [vmem:[#allocation2 + $0xe8] sm:$0xff] %v615
    %648 = vst [vmem:[#allocation2 + $0xf0] sm:$0xff] %v616
    %649 = vst [vmem:[#allocation2 + $0xf8] sm:$0xff] %v617
    %v650 = vld [vmem:[#allocation10] sm:$0xff]
    %v651 = vld [vmem:[#allocation10 + $0x8] sm:$0xff]
    %v652 = vld [vmem:[#allocation10 + $0x10] sm:$0xff]
    %v653 = vld [vmem:[#allocation10 + $0x18] sm:$0xff]
    %v654 = vld [vmem:[#allocation10 + $0x20] sm:$0xff]
    %v655 = vld [vmem:[#allocation10 + $0x28] sm:$0xff]
    %v656 = vld [vmem:[#allocation10 + $0x30] sm:$0xff]
    %v657 = vld [vmem:[#allocation10 + $0x38] sm:$0xff]
    %v658 = vld [vmem:[#allocation10 + $0x40] sm:$0xff]
    %v659 = vld [vmem:[#allocation10 + $0x48] sm:$0xff]
    %v660 = vld [vmem:[#allocation10 + $0x50] sm:$0xff]
    %v661 = vld [vmem:[#allocation10 + $0x58] sm:$0xff]
    %v662 = vld [vmem:[#allocation10 + $0x60] sm:$0xff]
    %v663 = vld [vmem:[#allocation10 + $0x68] sm:$0xff]
    %v664 = vld [vmem:[#allocation10 + $0x70] sm:$0xff]
    %v665 = vld [vmem:[#allocation10 + $0x78] sm:$0xff]
    %v666 = vld [vmem:[#allocation10 + $0x80] sm:$0xff]
    %v667 = vld [vmem:[#allocation10 + $0x88] sm:$0xff]
    %v668 = vld [vmem:[#allocation10 + $0x90] sm:$0xff]
    %v669 = vld [vmem:[#allocation10 + $0x98] sm:$0xff]
    %v670 = vld [vmem:[#allocation10 + $0xa0] sm:$0xff]
    %v671 = vld [vmem:[#allocation10 + $0xa8] sm:$0xff]
    %v672 = vld [vmem:[#allocation10 + $0xb0] sm:$0xff]
    %v673 = vld [vmem:[#allocation10 + $0xb8] sm:$0xff]
    %v674 = vld [vmem:[#allocation10 + $0xc0] sm:$0xff]
    %v675 = vld [vmem:[#allocation10 + $0xc8] sm:$0xff]
    %v676 = vld [vmem:[#allocation10 + $0xd0] sm:$0xff]
    %v677 = vld [vmem:[#allocation10 + $0xd8] sm:$0xff]
    %v678 = vld [vmem:[#allocation10 + $0xe0] sm:$0xff]
    %v679 = vld [vmem:[#allocation10 + $0xe8] sm:$0xff]
    %v680 = vld [vmem:[#allocation10 + $0xf0] sm:$0xff]
    %v681 = vld [vmem:[#allocation10 + $0xf8] sm:$0xff]
    %v682 = vld [vmem:[%s5] sm:$0xf]
    %v683 = vld [vmem:[#allocation15] sm:$0xff]
    %v684 = vld [vmem:[#allocation15 + $0x8] sm:$0xff]
    %v685 = vld [vmem:[#allocation16] sm:$0xff]
    %v686 = vld [vmem:[#allocation16 + $0x8] sm:$0xff]
    %v687 = vld [vmem:[#allocation2] sm:$0xff]
    %v688 = vld [vmem:[#allocation2 + $0x8] sm:$0xff]
    %v689 = vld [vmem:[#allocation2 + $0x10] sm:$0xff]
    %v690 = vld [vmem:[#allocation2 + $0x18] sm:$0xff]
    %v691 = vunpack.c.l.bf16 %v687
    %v692 = vunpack.c.h.bf16 %v687
    %v693 = vunpack.c.l.bf16 %v688
    %v694 = vunpack.c.h.bf16 %v688
    %v695 = vunpack.c.l.bf16 %v689
    %v696 = vunpack.c.h.bf16 %v689
    %v697 = vunpack.c.l.bf16 %v690
    %v698 = vunpack.c.h.bf16 %v690
    %v700 = vperm.slane %v682, 0
    %v701 = vperm.slane %v682, 1
    %v702 = vperm.slane %v682, 2
    %v703 = vperm.slane %v682, 3
    %v708 = vadd.f32 %v691, %v700
    %v709 = vadd.f32 %v692, %v701
    %v710 = vadd.f32 %v693, %v702
    %v711 = vadd.f32 %v694, %v703
    %v712 = vadd.f32 %v695, %v700
    %v713 = vadd.f32 %v696, %v701
    %v714 = vadd.f32 %v697, %v702
    %v715 = vadd.f32 %v698, %v703
    %v716 = vpack.c.bf16 %v684, %v683
    %v749 = vunpack.c.l.b16 %v650
    %v750 = vunpack.c.h.b16 %v650
    %v751 = vunpack.c.l.b16 %v651
    %v752 = vunpack.c.h.b16 %v651
    %v753 = vunpack.c.l.b16 %v652
    %v754 = vunpack.c.h.b16 %v652
    %v755 = vunpack.c.l.b16 %v653
    %v756 = vunpack.c.h.b16 %v653
    %v757 = vunpack.c.l.b16 %v654
    %v758 = vunpack.c.h.b16 %v654
    %v759 = vunpack.c.l.b16 %v655
    %v760 = vunpack.c.h.b16 %v655
    %v761 = vunpack.c.l.b16 %v656
    %v762 = vunpack.c.h.b16 %v656
    %v763 = vunpack.c.l.b16 %v657
    %v764 = vunpack.c.h.b16 %v657
    %v765 = vunpack.c.l.b16 %v658
    %v766 = vunpack.c.h.b16 %v658
    %v767 = vunpack.c.l.b16 %v659
    %v768 = vunpack.c.h.b16 %v659
    %v769 = vunpack.c.l.b16 %v660
    %v770 = vunpack.c.h.b16 %v660
    %v771 = vunpack.c.l.b16 %v661
    %v772 = vunpack.c.h.b16 %v661
    %v773 = vunpack.c.l.b16 %v662
    %v774 = vunpack.c.h.b16 %v662
    %v775 = vunpack.c.l.b16 %v663
    %v776 = vunpack.c.h.b16 %v663
    %v777 = vunpack.c.l.b16 %v664
    %v778 = vunpack.c.h.b16 %v664
    %v779 = vunpack.c.l.b16 %v665
    %v780 = vunpack.c.h.b16 %v665
    %v781 = vunpack.c.l.b16 %v666
    %v782 = vunpack.c.h.b16 %v666
    %v783 = vunpack.c.l.b16 %v667
    %v784 = vunpack.c.h.b16 %v667
    %v785 = vunpack.c.l.b16 %v668
    %v786 = vunpack.c.h.b16 %v668
    %v787 = vunpack.c.l.b16 %v669
    %v788 = vunpack.c.h.b16 %v669
    %v789 = vunpack.c.l.b16 %v670
    %v790 = vunpack.c.h.b16 %v670
    %v791 = vunpack.c.l.b16 %v671
    %v792 = vunpack.c.h.b16 %v671
    %v793 = vunpack.c.l.b16 %v672
    %v794 = vunpack.c.h.b16 %v672
    %v795 = vunpack.c.l.b16 %v673
    %v796 = vunpack.c.h.b16 %v673
    %v797 = vunpack.c.l.b16 %v674
    %v798 = vunpack.c.h.b16 %v674
    %v799 = vunpack.c.l.b16 %v675
    %v800 = vunpack.c.h.b16 %v675
    %v801 = vunpack.c.l.b16 %v676
    %v802 = vunpack.c.h.b16 %v676
    %v803 = vunpack.c.l.b16 %v677
    %v804 = vunpack.c.h.b16 %v677
    %v805 = vunpack.c.l.b16 %v678
    %v806 = vunpack.c.h.b16 %v678
    %v807 = vunpack.c.l.b16 %v679
    %v808 = vunpack.c.h.b16 %v679
    %v809 = vunpack.c.l.b16 %v680
    %v810 = vunpack.c.h.b16 %v680
    %v811 = vunpack.c.l.b16 %v681
    %v812 = vunpack.c.h.b16 %v681
    %v813 = vpack.c.b16 %v753, %v749
    %v814 = vpack.c.b16 %v754, %v750
    %v815 = vpack.c.b16 %v755, %v751
    %v816 = vpack.c.b16 %v756, %v752
    %v817 = vpack.c.b16 %v761, %v757
    %v818 = vpack.c.b16 %v762, %v758
    %v819 = vpack.c.b16 %v763, %v759
    %v820 = vpack.c.b16 %v764, %v760
    %v821 = vpack.c.b16 %v769, %v765
    %v822 = vpack.c.b16 %v770, %v766
    %v823 = vpack.c.b16 %v771, %v767
    %v824 = vpack.c.b16 %v772, %v768
    %v825 = vpack.c.b16 %v777, %v773
    %v826 = vpack.c.b16 %v778, %v774
    %v827 = vpack.c.b16 %v779, %v775
    %v828 = vpack.c.b16 %v780, %v776
    %v829 = vpack.c.b16 %v785, %v781
    %v830 = vpack.c.b16 %v786, %v782
    %v831 = vpack.c.b16 %v787, %v783
    %v832 = vpack.c.b16 %v788, %v784
    %v833 = vpack.c.b16 %v793, %v789
    %v834 = vpack.c.b16 %v794, %v790
    %v835 = vpack.c.b16 %v795, %v791
    %v836 = vpack.c.b16 %v796, %v792
    %v837 = vpack.c.b16 %v801, %v797
    %v838 = vpack.c.b16 %v802, %v798
    %v839 = vpack.c.b16 %v803, %v799
    %v840 = vpack.c.b16 %v804, %v800
    %v841 = vpack.c.b16 %v809, %v805
    %v842 = vpack.c.b16 %v810, %v806
    %v843 = vpack.c.b16 %v811, %v807
    %v844 = vpack.c.b16 %v812, %v808
    %877 = vmatpush.bf16.msra.mxu0 %v841
    %878 = vmatpush.bf16.msra.mxu0 %v837
    %879 = vmatpush.bf16.msra.mxu0 %v833
    %880 = vmatpush.bf16.msra.mxu0 %v829
    %881 = vmatpush.bf16.msra.mxu0 %v825
    %882 = vmatpush.bf16.msra.mxu0 %v821
    %883 = vmatpush.bf16.msra.mxu0 %v817
    %884 = vmatpush.bf16.msra.mxu0 %v813
    %885 = vmatmul.bf16.gmra.mxu0 %v716
    %v886 = vpop.f32.mrf.mxu0
    %v887 = vadd.f32 0.0, %v886
    %v888 = vpop.f32.mrf.mxu0
    %v889 = vadd.f32 0.0, %v888
    %890 = vdwg.mxu0
    %891 = vmatpush.bf16.msra.mxu0 %v842
    %892 = vmatpush.bf16.msra.mxu0 %v838
    %893 = vmatpush.bf16.msra.mxu0 %v834
    %894 = vmatpush.bf16.msra.mxu0 %v830
    %895 = vmatpush.bf16.msra.mxu0 %v826
    %896 = vmatpush.bf16.msra.mxu0 %v822
    %897 = vmatpush.bf16.msra.mxu0 %v818
    %898 = vmatpush.bf16.msra.mxu0 %v814
    %899 = vmatmul.bf16.gmra.mxu0 %v716
    %v900 = vpop.f32.mrf.mxu0
    %v901 = vadd.f32 0.0, %v900
    %v902 = vpop.f32.mrf.mxu0
    %v903 = vadd.f32 0.0, %v902
    %904 = vdwg.mxu0
    %905 = vmatpush.bf16.msra.mxu0 %v843
    %906 = vmatpush.bf16.msra.mxu0 %v839
    %907 = vmatpush.bf16.msra.mxu0 %v835
    %908 = vmatpush.bf16.msra.mxu0 %v831
    %909 = vmatpush.bf16.msra.mxu0 %v827
    %910 = vmatpush.bf16.msra.mxu0 %v823
    %911 = vmatpush.bf16.msra.mxu0 %v819
    %912 = vmatpush.bf16.msra.mxu0 %v815
    %913 = vmatmul.bf16.gmra.mxu0 %v716
    %v914 = vpop.f32.mrf.mxu0
    %v915 = vadd.f32 0.0, %v914
    %v916 = vpop.f32.mrf.mxu0
    %v917 = vadd.f32 0.0, %v916
    %918 = vdwg.mxu0
    %919 = vmatpush.bf16.msra.mxu0 %v844
    %920 = vmatpush.bf16.msra.mxu0 %v840
    %921 = vmatpush.bf16.msra.mxu0 %v836
    %922 = vmatpush.bf16.msra.mxu0 %v832
    %923 = vmatpush.bf16.msra.mxu0 %v828
    %924 = vmatpush.bf16.msra.mxu0 %v824
    %925 = vmatpush.bf16.msra.mxu0 %v820
    %926 = vmatpush.bf16.msra.mxu0 %v816
    %927 = vmatmul.bf16.gmra.mxu0 %v716
    %v928 = vpop.f32.mrf.mxu0
    %v929 = vadd.f32 0.0, %v928
    %v930 = vpop.f32.mrf.mxu0
    %v931 = vadd.f32 0.0, %v930
    %932 = vdwg.mxu0
    %v933 = vadd.f32 %v708, %v887
    %v934 = vadd.f32 %v709, %v901
    %v935 = vadd.f32 %v710, %v915
    %v936 = vadd.f32 %v711, %v929
    %v937 = vadd.f32 %v712, %v889
    %v938 = vadd.f32 %v713, %v903
    %v939 = vadd.f32 %v714, %v917
    %v940 = vadd.f32 %v715, %v931
    %v941 = vmul.f32 %v933, 0.5
    %v942 = vmul.f32 %v937, 0.5
    %v943 = vtanh.pop %v941
    %v944 = vtanh.pop %v942
    %v945 = vmul.f32 %v943, 0.5
    %v946 = vmul.f32 %v944, 0.5
    %v947 = vadd.f32 %v945, 0.5
    %v948 = vadd.f32 %v946, 0.5
    %v949 = vmul.f32 %v934, 0.5
    %v950 = vmul.f32 %v938, 0.5
    %v951 = vtanh.pop %v949
    %v952 = vtanh.pop %v950
    %v953 = vmul.f32 %v951, 0.5
    %v954 = vmul.f32 %v952, 0.5
    %v955 = vadd.f32 %v953, 0.5
    %v956 = vadd.f32 %v954, 0.5
    %v957 = vtanh.pop %v935
    %v958 = vtanh.pop %v939
    %v959 = vmul.f32 %v936, 0.5
    %v960 = vmul.f32 %v940, 0.5
    %v961 = vtanh.pop %v959
    %v962 = vtanh.pop %v960
    %v963 = vmul.f32 %v961, 0.5
    %v964 = vmul.f32 %v962, 0.5
    %v965 = vadd.f32 %v963, 0.5
    %v966 = vadd.f32 %v964, 0.5
    %v967 = vmul.f32 %v955, %v685
    %v968 = vmul.f32 %v956, %v686
    %v969 = vmul.f32 %v947, %v957
    %v970 = vmul.f32 %v948, %v958
    %v971 = vadd.f32 %v967, %v969
    %v972 = vadd.f32 %v968, %v970
    %v973 = vtanh.pop %v971
    %v974 = vtanh.pop %v972
    %v975 = vmul.f32 %v965, %v973
    %v976 = vmul.f32 %v966, %v974
    %v977 = vpack.c.bf16 %v975, %v975
    %v978 = vpack.c.bf16 %v976, %v976
    %979 = vst [vmem:[#allocation3] sm:$0xf] %v977
    %980 = vst [vmem:[#allocation3 + $0x4] sm:$0xf] %v978
    %s981 = scalar_lea.vmem [#allocation2], 32
    %v982 = vld [vmem:[%s981] sm:$0xff]
    %v983 = vld [vmem:[%s981 + $0x8] sm:$0xff]
    %v984 = vld [vmem:[%s981 + $0x10] sm:$0xff]
    %v985 = vld [vmem:[%s981 + $0x18] sm:$0xff]
    %v986 = vunpack.c.l.bf16 %v982
    %v987 = vunpack.c.h.bf16 %v982
    %v988 = vunpack.c.l.bf16 %v983
    %v989 = vunpack.c.h.bf16 %v983
    %v990 = vunpack.c.l.bf16 %v984
    %v991 = vunpack.c.h.bf16 %v984
    %v992 = vunpack.c.l.bf16 %v985
    %v993 = vunpack.c.h.bf16 %v985
    %v994 = vadd.f32 %v986, %v700
    %v995 = vadd.f32 %v987, %v701
    %v996 = vadd.f32 %v988, %v702
    %v997 = vadd.f32 %v989, %v703
    %v998 = vadd.f32 %v990, %v700
    %v999 = vadd.f32 %v991, %v701
    %v1000 = vadd.f32 %v992, %v702
    %v1001 = vadd.f32 %v993, %v703
    %v1004 = vunpack.c.l.b16 %v977
    %v1005 = vunpack.c.l.b16 %v978
    %v1006 = vpack.c.b16 %v1005, %v1004
    %1008 = vmatpush.bf16.msra.mxu0 %v841
    %1009 = vmatpush.bf16.msra.mxu0 %v837
    %1010 = vmatpush.bf16.msra.mxu0 %v833
    %1011 = vmatpush.bf16.msra.mxu0 %v829
    %1012 = vmatpush.bf16.msra.mxu0 %v825
    %1013 = vmatpush.bf16.msra.mxu0 %v821
    %1014 = vmatpush.bf16.msra.mxu0 %v817
    %1015 = vmatpush.bf16.msra.mxu0 %v813
    %1016 = vmatmul.bf16.gmra.mxu0 %v1006
    %v1017 = vpop.f32.mrf.mxu0
    %v1018 = vadd.f32 0.0, %v1017
    %v1019 = vpop.f32.mrf.mxu0
    %v1020 = vadd.f32 0.0, %v1019
    %1021 = vdwg.mxu0
    %1022 = vmatpush.bf16.msra.mxu0 %v842
    %1023 = vmatpush.bf16.msra.mxu0 %v838
    %1024 = vmatpush.bf16.msra.mxu0 %v834
    %1025 = vmatpush.bf16.msra.mxu0 %v830
    %1026 = vmatpush.bf16.msra.mxu0 %v826
    %1027 = vmatpush.bf16.msra.mxu0 %v822
    %1028 = vmatpush.bf16.msra.mxu0 %v818
    %1029 = vmatpush.bf16.msra.mxu0 %v814
    %1030 = vmatmul.bf16.gmra.mxu0 %v1006
    %v1031 = vpop.f32.mrf.mxu0
    %v1032 = vadd.f32 0.0, %v1031
    %v1033 = vpop.f32.mrf.mxu0
    %v1034 = vadd.f32 0.0, %v1033
    %1035 = vdwg.mxu0
    %1036 = vmatpush.bf16.msra.mxu0 %v843
    %1037 = vmatpush.bf16.msra.mxu0 %v839
    %1038 = vmatpush.bf16.msra.mxu0 %v835
    %1039 = vmatpush.bf16.msra.mxu0 %v831
    %1040 = vmatpush.bf16.msra.mxu0 %v827
    %1041 = vmatpush.bf16.msra.mxu0 %v823
    %1042 = vmatpush.bf16.msra.mxu0 %v819
    %1043 = vmatpush.bf16.msra.mxu0 %v815
    %1044 = vmatmul.bf16.gmra.mxu0 %v1006
    %v1045 = vpop.f32.mrf.mxu0
    %v1046 = vadd.f32 0.0, %v1045
    %v1047 = vpop.f32.mrf.mxu0
    %v1048 = vadd.f32 0.0, %v1047
    %1049 = vdwg.mxu0
    %1050 = vmatpush.bf16.msra.mxu0 %v844
    %1051 = vmatpush.bf16.msra.mxu0 %v840
    %1052 = vmatpush.bf16.msra.mxu0 %v836
    %1053 = vmatpush.bf16.msra.mxu0 %v832
    %1054 = vmatpush.bf16.msra.mxu0 %v828
    %1055 = vmatpush.bf16.msra.mxu0 %v824
    %1056 = vmatpush.bf16.msra.mxu0 %v820
    %1057 = vmatpush.bf16.msra.mxu0 %v816
    %1058 = vmatmul.bf16.gmra.mxu0 %v1006
    %v1059 = vpop.f32.mrf.mxu0
    %v1060 = vadd.f32 0.0, %v1059
    %v1061 = vpop.f32.mrf.mxu0
    %v1062 = vadd.f32 0.0, %v1061
    %1063 = vdwg.mxu0
    %v1064 = vadd.f32 %v994, %v1018
    %v1065 = vadd.f32 %v995, %v1032
    %v1066 = vadd.f32 %v996, %v1046
    %v1067 = vadd.f32 %v997, %v1060
    %v1068 = vadd.f32 %v998, %v1020
    %v1069 = vadd.f32 %v999, %v1034
    %v1070 = vadd.f32 %v1000, %v1048
    %v1071 = vadd.f32 %v1001, %v1062
    %v1072 = vmul.f32 %v1064, 0.5
    %v1073 = vmul.f32 %v1068, 0.5
    %v1074 = vtanh.pop %v1072
    %v1075 = vtanh.pop %v1073
    %v1076 = vmul.f32 %v1074, 0.5
    %v1077 = vmul.f32 %v1075, 0.5
    %v1078 = vadd.f32 %v1076, 0.5
    %v1079 = vadd.f32 %v1077, 0.5
    %v1080 = vmul.f32 %v1065, 0.5
    %v1081 = vmul.f32 %v1069, 0.5
    %v1082 = vtanh.pop %v1080
    %v1083 = vtanh.pop %v1081
    %v1084 = vmul.f32 %v1082, 0.5
    %v1085 = vmul.f32 %v1083, 0.5
    %v1086 = vadd.f32 %v1084, 0.5
    %v1087 = vadd.f32 %v1085, 0.5
    %v1088 = vtanh.pop %v1066
    %v1089 = vtanh.pop %v1070
    %v1090 = vmul.f32 %v1067, 0.5
    %v1091 = vmul.f32 %v1071, 0.5
    %v1092 = vtanh.pop %v1090
    %v1093 = vtanh.pop %v1091
    %v1094 = vmul.f32 %v1092, 0.5
    %v1095 = vmul.f32 %v1093, 0.5
    %v1096 = vadd.f32 %v1094, 0.5
    %v1097 = vadd.f32 %v1095, 0.5
    %v1098 = vmul.f32 %v1086, %v971
    %v1099 = vmul.f32 %v1087, %v972
    %v1100 = vmul.f32 %v1078, %v1088
    %v1101 = vmul.f32 %v1079, %v1089
    %v1102 = vadd.f32 %v1098, %v1100
    %v1103 = vadd.f32 %v1099, %v1101
    %v1104 = vtanh.pop %v1102
    %v1105 = vtanh.pop %v1103
    %v1106 = vmul.f32 %v1096, %v1104
    %v1107 = vmul.f32 %v1097, %v1105
    %v1108 = vpack.c.bf16 %v1106, %v1106
    %v1109 = vpack.c.bf16 %v1107, %v1107
    %s1110 = scalar_lea.vmem [#allocation3], 8
    %1111 = vst [vmem:[%s1110] sm:$0xf] %v1108
    %1112 = vst [vmem:[%s1110 + $0x4] sm:$0xf] %v1109
    %s1113 = scalar_lea.vmem [#allocation2], 64
    %v1114 = vld [vmem:[%s1113] sm:$0xff]
    %v1115 = vld [vmem:[%s1113 + $0x8] sm:$0xff]
    %v1116 = vld [vmem:[%s1113 + $0x10] sm:$0xff]
    %v1117 = vld [vmem:[%s1113 + $0x18] sm:$0xff]
    %v1118 = vunpack.c.l.bf16 %v1114
    %v1119 = vunpack.c.h.bf16 %v1114
    %v1120 = vunpack.c.l.bf16 %v1115
    %v1121 = vunpack.c.h.bf16 %v1115
    %v1122 = vunpack.c.l.bf16 %v1116
    %v1123 = vunpack.c.h.bf16 %v1116
    %v1124 = vunpack.c.l.bf16 %v1117
    %v1125 = vunpack.c.h.bf16 %v1117
    %v1126 = vadd.f32 %v1118, %v700
    %v1127 = vadd.f32 %v1119, %v701
    %v1128 = vadd.f32 %v1120, %v702
    %v1129 = vadd.f32 %v1121, %v703
    %v1130 = vadd.f32 %v1122, %v700
    %v1131 = vadd.f32 %v1123, %v701
    %v1132 = vadd.f32 %v1124, %v702
    %v1133 = vadd.f32 %v1125, %v703
    %v1136 = vunpack.c.l.b16 %v1108
    %v1137 = vunpack.c.l.b16 %v1109
    %v1138 = vpack.c.b16 %v1137, %v1136
    %1140 = vmatpush.bf16.msra.mxu0 %v841
    %1141 = vmatpush.bf16.msra.mxu0 %v837
    %1142 = vmatpush.bf16.msra.mxu0 %v833
    %1143 = vmatpush.bf16.msra.mxu0 %v829
    %1144 = vmatpush.bf16.msra.mxu0 %v825
    %1145 = vmatpush.bf16.msra.mxu0 %v821
    %1146 = vmatpush.bf16.msra.mxu0 %v817
    %1147 = vmatpush.bf16.msra.mxu0 %v813
    %1148 = vmatmul.bf16.gmra.mxu0 %v1138
    %v1149 = vpop.f32.mrf.mxu0
    %v1150 = vadd.f32 0.0, %v1149
    %v1151 = vpop.f32.mrf.mxu0
    %v1152 = vadd.f32 0.0, %v1151
    %1153 = vdwg.mxu0
    %1154 = vmatpush.bf16.msra.mxu0 %v842
    %1155 = vmatpush.bf16.msra.mxu0 %v838
    %1156 = vmatpush.bf16.msra.mxu0 %v834
    %1157 = vmatpush.bf16.msra.mxu0 %v830
    %1158 = vmatpush.bf16.msra.mxu0 %v826
    %1159 = vmatpush.bf16.msra.mxu0 %v822
    %1160 = vmatpush.bf16.msra.mxu0 %v818
    %1161 = vmatpush.bf16.msra.mxu0 %v814
    %1162 = vmatmul.bf16.gmra.mxu0 %v1138
    %v1163 = vpop.f32.mrf.mxu0
    %v1164 = vadd.f32 0.0, %v1163
    %v1165 = vpop.f32.mrf.mxu0
    %v1166 = vadd.f32 0.0, %v1165
    %1167 = vdwg.mxu0
    %1168 = vmatpush.bf16.msra.mxu0 %v843
    %1169 = vmatpush.bf16.msra.mxu0 %v839
    %1170 = vmatpush.bf16.msra.mxu0 %v835
    %1171 = vmatpush.bf16.msra.mxu0 %v831
    %1172 = vmatpush.bf16.msra.mxu0 %v827
    %1173 = vmatpush.bf16.msra.mxu0 %v823
    %1174 = vmatpush.bf16.msra.mxu0 %v819
    %1175 = vmatpush.bf16.msra.mxu0 %v815
    %1176 = vmatmul.bf16.gmra.mxu0 %v1138
    %v1177 = vpop.f32.mrf.mxu0
    %v1178 = vadd.f32 0.0, %v1177
    %v1179 = vpop.f32.mrf.mxu0
    %v1180 = vadd.f32 0.0, %v1179
    %1181 = vdwg.mxu0
    %1182 = vmatpush.bf16.msra.mxu0 %v844
    %1183 = vmatpush.bf16.msra.mxu0 %v840
    %1184 = vmatpush.bf16.msra.mxu0 %v836
    %1185 = vmatpush.bf16.msra.mxu0 %v832
    %1186 = vmatpush.bf16.msra.mxu0 %v828
    %1187 = vmatpush.bf16.msra.mxu0 %v824
    %1188 = vmatpush.bf16.msra.mxu0 %v820
    %1189 = vmatpush.bf16.msra.mxu0 %v816
    %1190 = vmatmul.bf16.gmra.mxu0 %v1138
    %v1191 = vpop.f32.mrf.mxu0
    %v1192 = vadd.f32 0.0, %v1191
    %v1193 = vpop.f32.mrf.mxu0
    %v1194 = vadd.f32 0.0, %v1193
    %1195 = vdwg.mxu0
    %v1196 = vadd.f32 %v1126, %v1150
    %v1197 = vadd.f32 %v1127, %v1164
    %v1198 = vadd.f32 %v1128, %v1178
    %v1199 = vadd.f32 %v1129, %v1192
    %v1200 = vadd.f32 %v1130, %v1152
    %v1201 = vadd.f32 %v1131, %v1166
    %v1202 = vadd.f32 %v1132, %v1180
    %v1203 = vadd.f32 %v1133, %v1194
    %v1204 = vmul.f32 %v1196, 0.5
    %v1205 = vmul.f32 %v1200, 0.5
    %v1206 = vtanh.pop %v1204
    %v1207 = vtanh.pop %v1205
    %v1208 = vmul.f32 %v1206, 0.5
    %v1209 = vmul.f32 %v1207, 0.5
    %v1210 = vadd.f32 %v1208, 0.5
    %v1211 = vadd.f32 %v1209, 0.5
    %v1212 = vmul.f32 %v1197, 0.5
    %v1213 = vmul.f32 %v1201, 0.5
    %v1214 = vtanh.pop %v1212
    %v1215 = vtanh.pop %v1213
    %v1216 = vmul.f32 %v1214, 0.5
    %v1217 = vmul.f32 %v1215, 0.5
    %v1218 = vadd.f32 %v1216, 0.5
    %v1219 = vadd.f32 %v1217, 0.5
    %v1220 = vtanh.pop %v1198
    %v1221 = vtanh.pop %v1202
    %v1222 = vmul.f32 %v1199, 0.5
    %v1223 = vmul.f32 %v1203, 0.5
    %v1224 = vtanh.pop %v1222
    %v1225 = vtanh.pop %v1223
    %v1226 = vmul.f32 %v1224, 0.5
    %v1227 = vmul.f32 %v1225, 0.5
    %v1228 = vadd.f32 %v1226, 0.5
    %v1229 = vadd.f32 %v1227, 0.5
    %v1230 = vmul.f32 %v1218, %v1102
    %v1231 = vmul.f32 %v1219, %v1103
    %v1232 = vmul.f32 %v1210, %v1220
    %v1233 = vmul.f32 %v1211, %v1221
    %v1234 = vadd.f32 %v1230, %v1232
    %v1235 = vadd.f32 %v1231, %v1233
    %v1236 = vtanh.pop %v1234
    %v1237 = vtanh.pop %v1235
    %v1238 = vmul.f32 %v1228, %v1236
    %v1239 = vmul.f32 %v1229, %v1237
    %v1240 = vpack.c.bf16 %v1238, %v1238
    %v1241 = vpack.c.bf16 %v1239, %v1239
    %s1242 = scalar_lea.vmem [#allocation3], 16
    %1243 = vst [vmem:[%s1242] sm:$0xf] %v1240
    %1244 = vst [vmem:[%s1242 + $0x4] sm:$0xf] %v1241
    %s1245 = scalar_lea.vmem [#allocation2], 96
    %v1246 = vld [vmem:[%s1245] sm:$0xff]
    %v1247 = vld [vmem:[%s1245 + $0x8] sm:$0xff]
    %v1248 = vld [vmem:[%s1245 + $0x10] sm:$0xff]
    %v1249 = vld [vmem:[%s1245 + $0x18] sm:$0xff]
    %v1250 = vunpack.c.l.bf16 %v1246
    %v1251 = vunpack.c.h.bf16 %v1246
    %v1252 = vunpack.c.l.bf16 %v1247
    %v1253 = vunpack.c.h.bf16 %v1247
    %v1254 = vunpack.c.l.bf16 %v1248
    %v1255 = vunpack.c.h.bf16 %v1248
    %v1256 = vunpack.c.l.bf16 %v1249
    %v1257 = vunpack.c.h.bf16 %v1249
    %v1258 = vadd.f32 %v1250, %v700
    %v1259 = vadd.f32 %v1251, %v701
    %v1260 = vadd.f32 %v1252, %v702
    %v1261 = vadd.f32 %v1253, %v703
    %v1262 = vadd.f32 %v1254, %v700
    %v1263 = vadd.f32 %v1255, %v701
    %v1264 = vadd.f32 %v1256, %v702
    %v1265 = vadd.f32 %v1257, %v703
    %v1268 = vunpack.c.l.b16 %v1240
    %v1269 = vunpack.c.l.b16 %v1241
    %v1270 = vpack.c.b16 %v1269, %v1268
    %1272 = vmatpush.bf16.msra.mxu0 %v841
    %1273 = vmatpush.bf16.msra.mxu0 %v837
    %1274 = vmatpush.bf16.msra.mxu0 %v833
    %1275 = vmatpush.bf16.msra.mxu0 %v829
    %1276 = vmatpush.bf16.msra.mxu0 %v825
    %1277 = vmatpush.bf16.msra.mxu0 %v821
    %1278 = vmatpush.bf16.msra.mxu0 %v817
    %1279 = vmatpush.bf16.msra.mxu0 %v813
    %1280 = vmatmul.bf16.gmra.mxu0 %v1270
    %v1281 = vpop.f32.mrf.mxu0
    %v1282 = vadd.f32 0.0, %v1281
    %v1283 = vpop.f32.mrf.mxu0
    %v1284 = vadd.f32 0.0, %v1283
    %1285 = vdwg.mxu0
    %1286 = vmatpush.bf16.msra.mxu0 %v842
    %1287 = vmatpush.bf16.msra.mxu0 %v838
    %1288 = vmatpush.bf16.msra.mxu0 %v834
    %1289 = vmatpush.bf16.msra.mxu0 %v830
    %1290 = vmatpush.bf16.msra.mxu0 %v826
    %1291 = vmatpush.bf16.msra.mxu0 %v822
    %1292 = vmatpush.bf16.msra.mxu0 %v818
    %1293 = vmatpush.bf16.msra.mxu0 %v814
    %1294 = vmatmul.bf16.gmra.mxu0 %v1270
    %v1295 = vpop.f32.mrf.mxu0
    %v1296 = vadd.f32 0.0, %v1295
    %v1297 = vpop.f32.mrf.mxu0
    %v1298 = vadd.f32 0.0, %v1297
    %1299 = vdwg.mxu0
    %1300 = vmatpush.bf16.msra.mxu0 %v843
    %1301 = vmatpush.bf16.msra.mxu0 %v839
    %1302 = vmatpush.bf16.msra.mxu0 %v835
    %1303 = vmatpush.bf16.msra.mxu0 %v831
    %1304 = vmatpush.bf16.msra.mxu0 %v827
    %1305 = vmatpush.bf16.msra.mxu0 %v823
    %1306 = vmatpush.bf16.msra.mxu0 %v819
    %1307 = vmatpush.bf16.msra.mxu0 %v815
    %1308 = vmatmul.bf16.gmra.mxu0 %v1270
    %v1309 = vpop.f32.mrf.mxu0
    %v1310 = vadd.f32 0.0, %v1309
    %v1311 = vpop.f32.mrf.mxu0
    %v1312 = vadd.f32 0.0, %v1311
    %1313 = vdwg.mxu0
    %1314 = vmatpush.bf16.msra.mxu0 %v844
    %1315 = vmatpush.bf16.msra.mxu0 %v840
    %1316 = vmatpush.bf16.msra.mxu0 %v836
    %1317 = vmatpush.bf16.msra.mxu0 %v832
    %1318 = vmatpush.bf16.msra.mxu0 %v828
    %1319 = vmatpush.bf16.msra.mxu0 %v824
    %1320 = vmatpush.bf16.msra.mxu0 %v820
    %1321 = vmatpush.bf16.msra.mxu0 %v816
    %1322 = vmatmul.bf16.gmra.mxu0 %v1270
    %v1323 = vpop.f32.mrf.mxu0
    %v1324 = vadd.f32 0.0, %v1323
    %v1325 = vpop.f32.mrf.mxu0
    %v1326 = vadd.f32 0.0, %v1325
    %1327 = vdwg.mxu0
    %v1328 = vadd.f32 %v1258, %v1282
    %v1329 = vadd.f32 %v1259, %v1296
    %v1330 = vadd.f32 %v1260, %v1310
    %v1331 = vadd.f32 %v1261, %v1324
    %v1332 = vadd.f32 %v1262, %v1284
    %v1333 = vadd.f32 %v1263, %v1298
    %v1334 = vadd.f32 %v1264, %v1312
    %v1335 = vadd.f32 %v1265, %v1326
    %v1336 = vmul.f32 %v1328, 0.5
    %v1337 = vmul.f32 %v1332, 0.5
    %v1338 = vtanh.pop %v1336
    %v1339 = vtanh.pop %v1337
    %v1340 = vmul.f32 %v1338, 0.5
    %v1341 = vmul.f32 %v1339, 0.5
    %v1342 = vadd.f32 %v1340, 0.5
    %v1343 = vadd.f32 %v1341, 0.5
    %v1344 = vmul.f32 %v1329, 0.5
    %v1345 = vmul.f32 %v1333, 0.5
    %v1346 = vtanh.pop %v1344
    %v1347 = vtanh.pop %v1345
    %v1348 = vmul.f32 %v1346, 0.5
    %v1349 = vmul.f32 %v1347, 0.5
    %v1350 = vadd.f32 %v1348, 0.5
    %v1351 = vadd.f32 %v1349, 0.5
    %v1352 = vtanh.pop %v1330
    %v1353 = vtanh.pop %v1334
    %v1354 = vmul.f32 %v1331, 0.5
    %v1355 = vmul.f32 %v1335, 0.5
    %v1356 = vtanh.pop %v1354
    %v1357 = vtanh.pop %v1355
    %v1358 = vmul.f32 %v1356, 0.5
    %v1359 = vmul.f32 %v1357, 0.5
    %v1360 = vadd.f32 %v1358, 0.5
    %v1361 = vadd.f32 %v1359, 0.5
    %v1362 = vmul.f32 %v1350, %v1234
    %v1363 = vmul.f32 %v1351, %v1235
    %v1364 = vmul.f32 %v1342, %v1352
    %v1365 = vmul.f32 %v1343, %v1353
    %v1366 = vadd.f32 %v1362, %v1364
    %v1367 = vadd.f32 %v1363, %v1365
    %v1368 = vtanh.pop %v1366
    %v1369 = vtanh.pop %v1367
    %v1370 = vmul.f32 %v1360, %v1368
    %v1371 = vmul.f32 %v1361, %v1369
    %v1372 = vpack.c.bf16 %v1370, %v1370
    %v1373 = vpack.c.bf16 %v1371, %v1371
    %s1374 = scalar_lea.vmem [#allocation3], 24
    %1375 = vst [vmem:[%s1374] sm:$0xf] %v1372
    %1376 = vst [vmem:[%s1374 + $0x4] sm:$0xf] %v1373
    %s1377 = scalar_lea.vmem [#allocation2], 128
    %v1378 = vld [vmem:[%s1377] sm:$0xff]
    %v1379 = vld [vmem:[%s1377 + $0x8] sm:$0xff]
    %v1380 = vld [vmem:[%s1377 + $0x10] sm:$0xff]
    %v1381 = vld [vmem:[%s1377 + $0x18] sm:$0xff]
    %v1382 = vunpack.c.l.bf16 %v1378
    %v1383 = vunpack.c.h.bf16 %v1378
    %v1384 = vunpack.c.l.bf16 %v1379
    %v1385 = vunpack.c.h.bf16 %v1379
    %v1386 = vunpack.c.l.bf16 %v1380
    %v1387 = vunpack.c.h.bf16 %v1380
    %v1388 = vunpack.c.l.bf16 %v1381
    %v1389 = vunpack.c.h.bf16 %v1381
    %v1390 = vadd.f32 %v1382, %v700
    %v1391 = vadd.f32 %v1383, %v701
    %v1392 = vadd.f32 %v1384, %v702
    %v1393 = vadd.f32 %v1385, %v703
    %v1394 = vadd.f32 %v1386, %v700
    %v1395 = vadd.f32 %v1387, %v701
    %v1396 = vadd.f32 %v1388, %v702
    %v1397 = vadd.f32 %v1389, %v703
    %v1400 = vunpack.c.l.b16 %v1372
    %v1401 = vunpack.c.l.b16 %v1373
    %v1402 = vpack.c.b16 %v1401, %v1400
    %1404 = vmatpush.bf16.msra.mxu0 %v841
    %1405 = vmatpush.bf16.msra.mxu0 %v837
    %1406 = vmatpush.bf16.msra.mxu0 %v833
    %1407 = vmatpush.bf16.msra.mxu0 %v829
    %1408 = vmatpush.bf16.msra.mxu0 %v825
    %1409 = vmatpush.bf16.msra.mxu0 %v821
    %1410 = vmatpush.bf16.msra.mxu0 %v817
    %1411 = vmatpush.bf16.msra.mxu0 %v813
    %1412 = vmatmul.bf16.gmra.mxu0 %v1402
    %v1413 = vpop.f32.mrf.mxu0
    %v1414 = vadd.f32 0.0, %v1413
    %v1415 = vpop.f32.mrf.mxu0
    %v1416 = vadd.f32 0.0, %v1415
    %1417 = vdwg.mxu0
    %1418 = vmatpush.bf16.msra.mxu0 %v842
    %1419 = vmatpush.bf16.msra.mxu0 %v838
    %1420 = vmatpush.bf16.msra.mxu0 %v834
    %1421 = vmatpush.bf16.msra.mxu0 %v830
    %1422 = vmatpush.bf16.msra.mxu0 %v826
    %1423 = vmatpush.bf16.msra.mxu0 %v822
    %1424 = vmatpush.bf16.msra.mxu0 %v818
    %1425 = vmatpush.bf16.msra.mxu0 %v814
    %1426 = vmatmul.bf16.gmra.mxu0 %v1402
    %v1427 = vpop.f32.mrf.mxu0
    %v1428 = vadd.f32 0.0, %v1427
    %v1429 = vpop.f32.mrf.mxu0
    %v1430 = vadd.f32 0.0, %v1429
    %1431 = vdwg.mxu0
    %1432 = vmatpush.bf16.msra.mxu0 %v843
    %1433 = vmatpush.bf16.msra.mxu0 %v839
    %1434 = vmatpush.bf16.msra.mxu0 %v835
    %1435 = vmatpush.bf16.msra.mxu0 %v831
    %1436 = vmatpush.bf16.msra.mxu0 %v827
    %1437 = vmatpush.bf16.msra.mxu0 %v823
    %1438 = vmatpush.bf16.msra.mxu0 %v819
    %1439 = vmatpush.bf16.msra.mxu0 %v815
    %1440 = vmatmul.bf16.gmra.mxu0 %v1402
    %v1441 = vpop.f32.mrf.mxu0
    %v1442 = vadd.f32 0.0, %v1441
    %v1443 = vpop.f32.mrf.mxu0
    %v1444 = vadd.f32 0.0, %v1443
    %1445 = vdwg.mxu0
    %1446 = vmatpush.bf16.msra.mxu0 %v844
    %1447 = vmatpush.bf16.msra.mxu0 %v840
    %1448 = vmatpush.bf16.msra.mxu0 %v836
    %1449 = vmatpush.bf16.msra.mxu0 %v832
    %1450 = vmatpush.bf16.msra.mxu0 %v828
    %1451 = vmatpush.bf16.msra.mxu0 %v824
    %1452 = vmatpush.bf16.msra.mxu0 %v820
    %1453 = vmatpush.bf16.msra.mxu0 %v816
    %1454 = vmatmul.bf16.gmra.mxu0 %v1402
    %v1455 = vpop.f32.mrf.mxu0
    %v1456 = vadd.f32 0.0, %v1455
    %v1457 = vpop.f32.mrf.mxu0
    %v1458 = vadd.f32 0.0, %v1457
    %1459 = vdwg.mxu0
    %v1460 = vadd.f32 %v1390, %v1414
    %v1461 = vadd.f32 %v1391, %v1428
    %v1462 = vadd.f32 %v1392, %v1442
    %v1463 = vadd.f32 %v1393, %v1456
    %v1464 = vadd.f32 %v1394, %v1416
    %v1465 = vadd.f32 %v1395, %v1430
    %v1466 = vadd.f32 %v1396, %v1444
    %v1467 = vadd.f32 %v1397, %v1458
    %v1468 = vmul.f32 %v1460, 0.5
    %v1469 = vmul.f32 %v1464, 0.5
    %v1470 = vtanh.pop %v1468
    %v1471 = vtanh.pop %v1469
    %v1472 = vmul.f32 %v1470, 0.5
    %v1473 = vmul.f32 %v1471, 0.5
    %v1474 = vadd.f32 %v1472, 0.5
    %v1475 = vadd.f32 %v1473, 0.5
    %v1476 = vmul.f32 %v1461, 0.5
    %v1477 = vmul.f32 %v1465, 0.5
    %v1478 = vtanh.pop %v1476
    %v1479 = vtanh.pop %v1477
    %v1480 = vmul.f32 %v1478, 0.5
    %v1481 = vmul.f32 %v1479, 0.5
    %v1482 = vadd.f32 %v1480, 0.5
    %v1483 = vadd.f32 %v1481, 0.5
    %v1484 = vtanh.pop %v1462
    %v1485 = vtanh.pop %v1466
    %v1486 = vmul.f32 %v1463, 0.5
    %v1487 = vmul.f32 %v1467, 0.5
    %v1488 = vtanh.pop %v1486
    %v1489 = vtanh.pop %v1487
    %v1490 = vmul.f32 %v1488, 0.5
    %v1491 = vmul.f32 %v1489, 0.5
    %v1492 = vadd.f32 %v1490, 0.5
    %v1493 = vadd.f32 %v1491, 0.5
    %v1494 = vmul.f32 %v1482, %v1366
    %v1495 = vmul.f32 %v1483, %v1367
    %v1496 = vmul.f32 %v1474, %v1484
    %v1497 = vmul.f32 %v1475, %v1485
    %v1498 = vadd.f32 %v1494, %v1496
    %v1499 = vadd.f32 %v1495, %v1497
    %v1500 = vtanh.pop %v1498
    %v1501 = vtanh.pop %v1499
    %v1502 = vmul.f32 %v1492, %v1500
    %v1503 = vmul.f32 %v1493, %v1501
    %v1504 = vpack.c.bf16 %v1502, %v1502
    %v1505 = vpack.c.bf16 %v1503, %v1503
    %s1506 = scalar_lea.vmem [#allocation3], 32
    %1507 = vst [vmem:[%s1506] sm:$0xf] %v1504
    %1508 = vst [vmem:[%s1506 + $0x4] sm:$0xf] %v1505
    %s1509 = scalar_lea.vmem [#allocation2], 160
    %v1510 = vld [vmem:[%s1509] sm:$0xff]
    %v1511 = vld [vmem:[%s1509 + $0x8] sm:$0xff]
    %v1512 = vld [vmem:[%s1509 + $0x10] sm:$0xff]
    %v1513 = vld [vmem:[%s1509 + $0x18] sm:$0xff]
    %v1514 = vunpack.c.l.bf16 %v1510
    %v1515 = vunpack.c.h.bf16 %v1510
    %v1516 = vunpack.c.l.bf16 %v1511
    %v1517 = vunpack.c.h.bf16 %v1511
    %v1518 = vunpack.c.l.bf16 %v1512
    %v1519 = vunpack.c.h.bf16 %v1512
    %v1520 = vunpack.c.l.bf16 %v1513
    %v1521 = vunpack.c.h.bf16 %v1513
    %v1522 = vadd.f32 %v1514, %v700
    %v1523 = vadd.f32 %v1515, %v701
    %v1524 = vadd.f32 %v1516, %v702
    %v1525 = vadd.f32 %v1517, %v703
    %v1526 = vadd.f32 %v1518, %v700
    %v1527 = vadd.f32 %v1519, %v701
    %v1528 = vadd.f32 %v1520, %v702
    %v1529 = vadd.f32 %v1521, %v703
    %v1532 = vunpack.c.l.b16 %v1504
    %v1533 = vunpack.c.l.b16 %v1505
    %v1534 = vpack.c.b16 %v1533, %v1532
    %1536 = vmatpush.bf16.msra.mxu0 %v841
    %1537 = vmatpush.bf16.msra.mxu0 %v837
    %1538 = vmatpush.bf16.msra.mxu0 %v833
    %1539 = vmatpush.bf16.msra.mxu0 %v829
    %1540 = vmatpush.bf16.msra.mxu0 %v825
    %1541 = vmatpush.bf16.msra.mxu0 %v821
    %1542 = vmatpush.bf16.msra.mxu0 %v817
    %1543 = vmatpush.bf16.msra.mxu0 %v813
    %1544 = vmatmul.bf16.gmra.mxu0 %v1534
    %v1545 = vpop.f32.mrf.mxu0
    %v1546 = vadd.f32 0.0, %v1545
    %v1547 = vpop.f32.mrf.mxu0
    %v1548 = vadd.f32 0.0, %v1547
    %1549 = vdwg.mxu0
    %1550 = vmatpush.bf16.msra.mxu0 %v842
    %1551 = vmatpush.bf16.msra.mxu0 %v838
    %1552 = vmatpush.bf16.msra.mxu0 %v834
    %1553 = vmatpush.bf16.msra.mxu0 %v830
    %1554 = vmatpush.bf16.msra.mxu0 %v826
    %1555 = vmatpush.bf16.msra.mxu0 %v822
    %1556 = vmatpush.bf16.msra.mxu0 %v818
    %1557 = vmatpush.bf16.msra.mxu0 %v814
    %1558 = vmatmul.bf16.gmra.mxu0 %v1534
    %v1559 = vpop.f32.mrf.mxu0
    %v1560 = vadd.f32 0.0, %v1559
    %v1561 = vpop.f32.mrf.mxu0
    %v1562 = vadd.f32 0.0, %v1561
    %1563 = vdwg.mxu0
    %1564 = vmatpush.bf16.msra.mxu0 %v843
    %1565 = vmatpush.bf16.msra.mxu0 %v839
    %1566 = vmatpush.bf16.msra.mxu0 %v835
    %1567 = vmatpush.bf16.msra.mxu0 %v831
    %1568 = vmatpush.bf16.msra.mxu0 %v827
    %1569 = vmatpush.bf16.msra.mxu0 %v823
    %1570 = vmatpush.bf16.msra.mxu0 %v819
    %1571 = vmatpush.bf16.msra.mxu0 %v815
    %1572 = vmatmul.bf16.gmra.mxu0 %v1534
    %v1573 = vpop.f32.mrf.mxu0
    %v1574 = vadd.f32 0.0, %v1573
    %v1575 = vpop.f32.mrf.mxu0
    %v1576 = vadd.f32 0.0, %v1575
    %1577 = vdwg.mxu0
    %1578 = vmatpush.bf16.msra.mxu0 %v844
    %1579 = vmatpush.bf16.msra.mxu0 %v840
    %1580 = vmatpush.bf16.msra.mxu0 %v836
    %1581 = vmatpush.bf16.msra.mxu0 %v832
    %1582 = vmatpush.bf16.msra.mxu0 %v828
    %1583 = vmatpush.bf16.msra.mxu0 %v824
    %1584 = vmatpush.bf16.msra.mxu0 %v820
    %1585 = vmatpush.bf16.msra.mxu0 %v816
    %1586 = vmatmul.bf16.gmra.mxu0 %v1534
    %v1587 = vpop.f32.mrf.mxu0
    %v1588 = vadd.f32 0.0, %v1587
    %v1589 = vpop.f32.mrf.mxu0
    %v1590 = vadd.f32 0.0, %v1589
    %1591 = vdwg.mxu0
    %v1592 = vadd.f32 %v1522, %v1546
    %v1593 = vadd.f32 %v1523, %v1560
    %v1594 = vadd.f32 %v1524, %v1574
    %v1595 = vadd.f32 %v1525, %v1588
    %v1596 = vadd.f32 %v1526, %v1548
    %v1597 = vadd.f32 %v1527, %v1562
    %v1598 = vadd.f32 %v1528, %v1576
    %v1599 = vadd.f32 %v1529, %v1590
    %v1600 = vmul.f32 %v1592, 0.5
    %v1601 = vmul.f32 %v1596, 0.5
    %v1602 = vtanh.pop %v1600
    %v1603 = vtanh.pop %v1601
    %v1604 = vmul.f32 %v1602, 0.5
    %v1605 = vmul.f32 %v1603, 0.5
    %v1606 = vadd.f32 %v1604, 0.5
    %v1607 = vadd.f32 %v1605, 0.5
    %v1608 = vmul.f32 %v1593, 0.5
    %v1609 = vmul.f32 %v1597, 0.5
    %v1610 = vtanh.pop %v1608
    %v1611 = vtanh.pop %v1609
    %v1612 = vmul.f32 %v1610, 0.5
    %v1613 = vmul.f32 %v1611, 0.5
    %v1614 = vadd.f32 %v1612, 0.5
    %v1615 = vadd.f32 %v1613, 0.5
    %v1616 = vtanh.pop %v1594
    %v1617 = vtanh.pop %v1598
    %v1618 = vmul.f32 %v1595, 0.5
    %v1619 = vmul.f32 %v1599, 0.5
    %v1620 = vtanh.pop %v1618
    %v1621 = vtanh.pop %v1619
    %v1622 = vmul.f32 %v1620, 0.5
    %v1623 = vmul.f32 %v1621, 0.5
    %v1624 = vadd.f32 %v1622, 0.5
    %v1625 = vadd.f32 %v1623, 0.5
    %v1626 = vmul.f32 %v1614, %v1498
    %v1627 = vmul.f32 %v1615, %v1499
    %v1628 = vmul.f32 %v1606, %v1616
    %v1629 = vmul.f32 %v1607, %v1617
    %v1630 = vadd.f32 %v1626, %v1628
    %v1631 = vadd.f32 %v1627, %v1629
    %v1632 = vtanh.pop %v1630
    %v1633 = vtanh.pop %v1631
    %v1634 = vmul.f32 %v1624, %v1632
    %v1635 = vmul.f32 %v1625, %v1633
    %v1636 = vpack.c.bf16 %v1634, %v1634
    %v1637 = vpack.c.bf16 %v1635, %v1635
    %s1638 = scalar_lea.vmem [#allocation3], 40
    %1639 = vst [vmem:[%s1638] sm:$0xf] %v1636
    %1640 = vst [vmem:[%s1638 + $0x4] sm:$0xf] %v1637
    %s1641 = scalar_lea.vmem [#allocation2], 192
    %v1642 = vld [vmem:[%s1641] sm:$0xff]
    %v1643 = vld [vmem:[%s1641 + $0x8] sm:$0xff]
    %v1644 = vld [vmem:[%s1641 + $0x10] sm:$0xff]
    %v1645 = vld [vmem:[%s1641 + $0x18] sm:$0xff]
    %v1646 = vunpack.c.l.bf16 %v1642
    %v1647 = vunpack.c.h.bf16 %v1642
    %v1648 = vunpack.c.l.bf16 %v1643
    %v1649 = vunpack.c.h.bf16 %v1643
    %v1650 = vunpack.c.l.bf16 %v1644
    %v1651 = vunpack.c.h.bf16 %v1644
    %v1652 = vunpack.c.l.bf16 %v1645
    %v1653 = vunpack.c.h.bf16 %v1645
    %v1654 = vadd.f32 %v1646, %v700
    %v1655 = vadd.f32 %v1647, %v701
    %v1656 = vadd.f32 %v1648, %v702
    %v1657 = vadd.f32 %v1649, %v703
    %v1658 = vadd.f32 %v1650, %v700
    %v1659 = vadd.f32 %v1651, %v701
    %v1660 = vadd.f32 %v1652, %v702
    %v1661 = vadd.f32 %v1653, %v703
    %v1664 = vunpack.c.l.b16 %v1636
    %v1665 = vunpack.c.l.b16 %v1637
    %v1666 = vpack.c.b16 %v1665, %v1664
    %1668 = vmatpush.bf16.msra.mxu0 %v841
    %1669 = vmatpush.bf16.msra.mxu0 %v837
    %1670 = vmatpush.bf16.msra.mxu0 %v833
    %1671 = vmatpush.bf16.msra.mxu0 %v829
    %1672 = vmatpush.bf16.msra.mxu0 %v825
    %1673 = vmatpush.bf16.msra.mxu0 %v821
    %1674 = vmatpush.bf16.msra.mxu0 %v817
    %1675 = vmatpush.bf16.msra.mxu0 %v813
    %1676 = vmatmul.bf16.gmra.mxu0 %v1666
    %v1677 = vpop.f32.mrf.mxu0
    %v1678 = vadd.f32 0.0, %v1677
    %v1679 = vpop.f32.mrf.mxu0
    %v1680 = vadd.f32 0.0, %v1679
    %1681 = vdwg.mxu0
    %1682 = vmatpush.bf16.msra.mxu0 %v842
    %1683 = vmatpush.bf16.msra.mxu0 %v838
    %1684 = vmatpush.bf16.msra.mxu0 %v834
    %1685 = vmatpush.bf16.msra.mxu0 %v830
    %1686 = vmatpush.bf16.msra.mxu0 %v826
    %1687 = vmatpush.bf16.msra.mxu0 %v822
    %1688 = vmatpush.bf16.msra.mxu0 %v818
    %1689 = vmatpush.bf16.msra.mxu0 %v814
    %1690 = vmatmul.bf16.gmra.mxu0 %v1666
    %v1691 = vpop.f32.mrf.mxu0
    %v1692 = vadd.f32 0.0, %v1691
    %v1693 = vpop.f32.mrf.mxu0
    %v1694 = vadd.f32 0.0, %v1693
    %1695 = vdwg.mxu0
    %1696 = vmatpush.bf16.msra.mxu0 %v843
    %1697 = vmatpush.bf16.msra.mxu0 %v839
    %1698 = vmatpush.bf16.msra.mxu0 %v835
    %1699 = vmatpush.bf16.msra.mxu0 %v831
    %1700 = vmatpush.bf16.msra.mxu0 %v827
    %1701 = vmatpush.bf16.msra.mxu0 %v823
    %1702 = vmatpush.bf16.msra.mxu0 %v819
    %1703 = vmatpush.bf16.msra.mxu0 %v815
    %1704 = vmatmul.bf16.gmra.mxu0 %v1666
    %v1705 = vpop.f32.mrf.mxu0
    %v1706 = vadd.f32 0.0, %v1705
    %v1707 = vpop.f32.mrf.mxu0
    %v1708 = vadd.f32 0.0, %v1707
    %1709 = vdwg.mxu0
    %1710 = vmatpush.bf16.msra.mxu0 %v844
    %1711 = vmatpush.bf16.msra.mxu0 %v840
    %1712 = vmatpush.bf16.msra.mxu0 %v836
    %1713 = vmatpush.bf16.msra.mxu0 %v832
    %1714 = vmatpush.bf16.msra.mxu0 %v828
    %1715 = vmatpush.bf16.msra.mxu0 %v824
    %1716 = vmatpush.bf16.msra.mxu0 %v820
    %1717 = vmatpush.bf16.msra.mxu0 %v816
    %1718 = vmatmul.bf16.gmra.mxu0 %v1666
    %v1719 = vpop.f32.mrf.mxu0
    %v1720 = vadd.f32 0.0, %v1719
    %v1721 = vpop.f32.mrf.mxu0
    %v1722 = vadd.f32 0.0, %v1721
    %1723 = vdwg.mxu0
    %v1724 = vadd.f32 %v1654, %v1678
    %v1725 = vadd.f32 %v1655, %v1692
    %v1726 = vadd.f32 %v1656, %v1706
    %v1727 = vadd.f32 %v1657, %v1720
    %v1728 = vadd.f32 %v1658, %v1680
    %v1729 = vadd.f32 %v1659, %v1694
    %v1730 = vadd.f32 %v1660, %v1708
    %v1731 = vadd.f32 %v1661, %v1722
    %v1732 = vmul.f32 %v1724, 0.5
    %v1733 = vmul.f32 %v1728, 0.5
    %v1734 = vtanh.pop %v1732
    %v1735 = vtanh.pop %v1733
    %v1736 = vmul.f32 %v1734, 0.5
    %v1737 = vmul.f32 %v1735, 0.5
    %v1738 = vadd.f32 %v1736, 0.5
    %v1739 = vadd.f32 %v1737, 0.5
    %v1740 = vmul.f32 %v1725, 0.5
    %v1741 = vmul.f32 %v1729, 0.5
    %v1742 = vtanh.pop %v1740
    %v1743 = vtanh.pop %v1741
    %v1744 = vmul.f32 %v1742, 0.5
    %v1745 = vmul.f32 %v1743, 0.5
    %v1746 = vadd.f32 %v1744, 0.5
    %v1747 = vadd.f32 %v1745, 0.5
    %v1748 = vtanh.pop %v1726
    %v1749 = vtanh.pop %v1730
    %v1750 = vmul.f32 %v1727, 0.5
    %v1751 = vmul.f32 %v1731, 0.5
    %v1752 = vtanh.pop %v1750
    %v1753 = vtanh.pop %v1751
    %v1754 = vmul.f32 %v1752, 0.5
    %v1755 = vmul.f32 %v1753, 0.5
    %v1756 = vadd.f32 %v1754, 0.5
    %v1757 = vadd.f32 %v1755, 0.5
    %v1758 = vmul.f32 %v1746, %v1630
    %v1759 = vmul.f32 %v1747, %v1631
    %v1760 = vmul.f32 %v1738, %v1748
    %v1761 = vmul.f32 %v1739, %v1749
    %v1762 = vadd.f32 %v1758, %v1760
    %v1763 = vadd.f32 %v1759, %v1761
    %v1764 = vtanh.pop %v1762
    %v1765 = vtanh.pop %v1763
    %v1766 = vmul.f32 %v1756, %v1764
    %v1767 = vmul.f32 %v1757, %v1765
    %v1768 = vpack.c.bf16 %v1766, %v1766
    %v1769 = vpack.c.bf16 %v1767, %v1767
    %s1770 = scalar_lea.vmem [#allocation3], 48
    %1771 = vst [vmem:[%s1770] sm:$0xf] %v1768
    %1772 = vst [vmem:[%s1770 + $0x4] sm:$0xf] %v1769
    %s1773 = scalar_lea.vmem [#allocation2], 224
    %v1774 = vld [vmem:[%s1773] sm:$0xff]
    %v1775 = vld [vmem:[%s1773 + $0x8] sm:$0xff]
    %v1776 = vld [vmem:[%s1773 + $0x10] sm:$0xff]
    %v1777 = vld [vmem:[%s1773 + $0x18] sm:$0xff]
    %v1778 = vunpack.c.l.bf16 %v1774
    %v1779 = vunpack.c.h.bf16 %v1774
    %v1780 = vunpack.c.l.bf16 %v1775
    %v1781 = vunpack.c.h.bf16 %v1775
    %v1782 = vunpack.c.l.bf16 %v1776
    %v1783 = vunpack.c.h.bf16 %v1776
    %v1784 = vunpack.c.l.bf16 %v1777
    %v1785 = vunpack.c.h.bf16 %v1777
    %v1786 = vadd.f32 %v1778, %v700
    %v1787 = vadd.f32 %v1779, %v701
    %v1788 = vadd.f32 %v1780, %v702
    %v1789 = vadd.f32 %v1781, %v703
    %v1790 = vadd.f32 %v1782, %v700
    %v1791 = vadd.f32 %v1783, %v701
    %v1792 = vadd.f32 %v1784, %v702
    %v1793 = vadd.f32 %v1785, %v703
    %v1796 = vunpack.c.l.b16 %v1768
    %v1797 = vunpack.c.l.b16 %v1769
    %v1798 = vpack.c.b16 %v1797, %v1796
    %1800 = vmatpush.bf16.msra.mxu0 %v841
    %1801 = vmatpush.bf16.msra.mxu0 %v837
    %1802 = vmatpush.bf16.msra.mxu0 %v833
    %1803 = vmatpush.bf16.msra.mxu0 %v829
    %1804 = vmatpush.bf16.msra.mxu0 %v825
    %1805 = vmatpush.bf16.msra.mxu0 %v821
    %1806 = vmatpush.bf16.msra.mxu0 %v817
    %1807 = vmatpush.bf16.msra.mxu0 %v813
    %1808 = vmatmul.bf16.gmra.mxu0 %v1798
    %v1809 = vpop.f32.mrf.mxu0
    %v1810 = vadd.f32 0.0, %v1809
    %v1811 = vpop.f32.mrf.mxu0
    %v1812 = vadd.f32 0.0, %v1811
    %1813 = vdwg.mxu0
    %1814 = vmatpush.bf16.msra.mxu0 %v842
    %1815 = vmatpush.bf16.msra.mxu0 %v838
    %1816 = vmatpush.bf16.msra.mxu0 %v834
    %1817 = vmatpush.bf16.msra.mxu0 %v830
    %1818 = vmatpush.bf16.msra.mxu0 %v826
    %1819 = vmatpush.bf16.msra.mxu0 %v822
    %1820 = vmatpush.bf16.msra.mxu0 %v818
    %1821 = vmatpush.bf16.msra.mxu0 %v814
    %1822 = vmatmul.bf16.gmra.mxu0 %v1798
    %v1823 = vpop.f32.mrf.mxu0
    %v1824 = vadd.f32 0.0, %v1823
    %v1825 = vpop.f32.mrf.mxu0
    %v1826 = vadd.f32 0.0, %v1825
    %1827 = vdwg.mxu0
    %1828 = vmatpush.bf16.msra.mxu0 %v843
    %1829 = vmatpush.bf16.msra.mxu0 %v839
    %1830 = vmatpush.bf16.msra.mxu0 %v835
    %1831 = vmatpush.bf16.msra.mxu0 %v831
    %1832 = vmatpush.bf16.msra.mxu0 %v827
    %1833 = vmatpush.bf16.msra.mxu0 %v823
    %1834 = vmatpush.bf16.msra.mxu0 %v819
    %1835 = vmatpush.bf16.msra.mxu0 %v815
    %1836 = vmatmul.bf16.gmra.mxu0 %v1798
    %v1837 = vpop.f32.mrf.mxu0
    %v1838 = vadd.f32 0.0, %v1837
    %v1839 = vpop.f32.mrf.mxu0
    %v1840 = vadd.f32 0.0, %v1839
    %1841 = vdwg.mxu0
    %1842 = vmatpush.bf16.msra.mxu0 %v844
    %1843 = vmatpush.bf16.msra.mxu0 %v840
    %1844 = vmatpush.bf16.msra.mxu0 %v836
    %1845 = vmatpush.bf16.msra.mxu0 %v832
    %1846 = vmatpush.bf16.msra.mxu0 %v828
    %1847 = vmatpush.bf16.msra.mxu0 %v824
    %1848 = vmatpush.bf16.msra.mxu0 %v820
    %1849 = vmatpush.bf16.msra.mxu0 %v816
    %1850 = vmatmul.bf16.gmra.mxu0 %v1798
    %v1851 = vpop.f32.mrf.mxu0
    %v1852 = vadd.f32 0.0, %v1851
    %v1853 = vpop.f32.mrf.mxu0
    %v1854 = vadd.f32 0.0, %v1853
    %1855 = vdwg.mxu0
    %v1856 = vadd.f32 %v1786, %v1810
    %v1857 = vadd.f32 %v1787, %v1824
    %v1858 = vadd.f32 %v1788, %v1838
    %v1859 = vadd.f32 %v1789, %v1852
    %v1860 = vadd.f32 %v1790, %v1812
    %v1861 = vadd.f32 %v1791, %v1826
    %v1862 = vadd.f32 %v1792, %v1840
    %v1863 = vadd.f32 %v1793, %v1854
    %v1864 = vmul.f32 %v1856, 0.5
    %v1865 = vmul.f32 %v1860, 0.5
    %v1866 = vtanh.pop %v1864
    %v1867 = vtanh.pop %v1865
    %v1868 = vmul.f32 %v1866, 0.5
    %v1869 = vmul.f32 %v1867, 0.5
    %v1870 = vadd.f32 %v1868, 0.5
    %v1871 = vadd.f32 %v1869, 0.5
    %v1872 = vmul.f32 %v1857, 0.5
    %v1873 = vmul.f32 %v1861, 0.5
    %v1874 = vtanh.pop %v1872
    %v1875 = vtanh.pop %v1873
    %v1876 = vmul.f32 %v1874, 0.5
    %v1877 = vmul.f32 %v1875, 0.5
    %v1878 = vadd.f32 %v1876, 0.5
    %v1879 = vadd.f32 %v1877, 0.5
    %v1880 = vtanh.pop %v1858
    %v1881 = vtanh.pop %v1862
    %v1882 = vmul.f32 %v1859, 0.5
    %v1883 = vmul.f32 %v1863, 0.5
    %v1884 = vtanh.pop %v1882
    %v1885 = vtanh.pop %v1883
    %v1886 = vmul.f32 %v1884, 0.5
    %v1887 = vmul.f32 %v1885, 0.5
    %v1888 = vadd.f32 %v1886, 0.5
    %v1889 = vadd.f32 %v1887, 0.5
    %v1890 = vmul.f32 %v1878, %v1762
    %v1891 = vmul.f32 %v1879, %v1763
    %v1892 = vmul.f32 %v1870, %v1880
    %v1893 = vmul.f32 %v1871, %v1881
    %v1894 = vadd.f32 %v1890, %v1892
    %v1895 = vadd.f32 %v1891, %v1893
    %v1896 = vtanh.pop %v1894
    %v1897 = vtanh.pop %v1895
    %v1898 = vmul.f32 %v1888, %v1896
    %v1899 = vmul.f32 %v1889, %v1897
    %v1900 = vpack.c.bf16 %v1898, %v1898
    %v1901 = vpack.c.bf16 %v1899, %v1899
    %s1902 = scalar_lea.vmem [#allocation3], 56
    %1903 = vst [vmem:[%s1902] sm:$0xf] %v1900
    %1904 = vst [vmem:[%s1902 + $0x4] sm:$0xf] %v1901
    %1905 = vst [vmem:[#allocation15] sm:$0xff] %v1898
    %1906 = vst [vmem:[#allocation15 + $0x8] sm:$0xff] %v1899
    %1907 = vst [vmem:[#allocation16] sm:$0xff] %v1894
    %1908 = vst [vmem:[#allocation16 + $0x8] sm:$0xff] %v1895
    %v1909 = vld [vmem:[#allocation3] sm:$0xf]
    %v1910 = vld [vmem:[#allocation3 + $0x4] sm:$0xf]
    %v1911 = vld [vmem:[#allocation3 + $0x8] sm:$0xf]
    %v1912 = vld [vmem:[#allocation3 + $0xc] sm:$0xf]
    %v1913 = vld [vmem:[#allocation3 + $0x10] sm:$0xf]
    %v1914 = vld [vmem:[#allocation3 + $0x14] sm:$0xf]
    %v1915 = vld [vmem:[#allocation3 + $0x18] sm:$0xf]
    %v1916 = vld [vmem:[#allocation3 + $0x1c] sm:$0xf]
    %v1917 = vld [vmem:[#allocation3 + $0x20] sm:$0xf]
    %v1918 = vld [vmem:[#allocation3 + $0x24] sm:$0xf]
    %v1919 = vld [vmem:[#allocation3 + $0x28] sm:$0xf]
    %v1920 = vld [vmem:[#allocation3 + $0x2c] sm:$0xf]
    %v1921 = vld [vmem:[#allocation3 + $0x30] sm:$0xf]
    %v1922 = vld [vmem:[#allocation3 + $0x34] sm:$0xf]
    %v1923 = vld [vmem:[#allocation3 + $0x38] sm:$0xf]
    %v1924 = vld [vmem:[#allocation3 + $0x3c] sm:$0xf]
    %v1925 = vld [vmem:[#allocation9] sm:$0xff]
    %v1926 = vld [vmem:[#allocation9 + $0x8] sm:$0xff]
    %v1927 = vld [vmem:[#allocation9 + $0x10] sm:$0xff]
    %v1928 = vld [vmem:[#allocation9 + $0x18] sm:$0xff]
    %v1929 = vld [vmem:[#allocation9 + $0x20] sm:$0xff]
    %v1930 = vld [vmem:[#allocation9 + $0x28] sm:$0xff]
    %v1931 = vld [vmem:[#allocation9 + $0x30] sm:$0xff]
    %v1932 = vld [vmem:[#allocation9 + $0x38] sm:$0xff]
    %v1933 = vld [vmem:[#allocation9 + $0x40] sm:$0xff]
    %v1934 = vld [vmem:[#allocation9 + $0x48] sm:$0xff]
    %v1935 = vld [vmem:[#allocation9 + $0x50] sm:$0xff]
    %v1936 = vld [vmem:[#allocation9 + $0x58] sm:$0xff]
    %v1937 = vld [vmem:[#allocation9 + $0x60] sm:$0xff]
    %v1938 = vld [vmem:[#allocation9 + $0x68] sm:$0xff]
    %v1939 = vld [vmem:[#allocation9 + $0x70] sm:$0xff]
    %v1940 = vld [vmem:[#allocation9 + $0x78] sm:$0xff]
    %v1941 = vld [vmem:[#allocation9 + $0x80] sm:$0xff]
    %v1942 = vld [vmem:[#allocation9 + $0x88] sm:$0xff]
    %v1943 = vld [vmem:[#allocation9 + $0x90] sm:$0xff]
    %v1944 = vld [vmem:[#allocation9 + $0x98] sm:$0xff]
    %v1945 = vld [vmem:[#allocation9 + $0xa0] sm:$0xff]
    %v1946 = vld [vmem:[#allocation9 + $0xa8] sm:$0xff]
    %v1947 = vld [vmem:[#allocation9 + $0xb0] sm:$0xff]
    %v1948 = vld [vmem:[#allocation9 + $0xb8] sm:$0xff]
    %v1949 = vld [vmem:[#allocation9 + $0xc0] sm:$0xff]
    %v1950 = vld [vmem:[#allocation9 + $0xc8] sm:$0xff]
    %v1951 = vld [vmem:[#allocation9 + $0xd0] sm:$0xff]
    %v1952 = vld [vmem:[#allocation9 + $0xd8] sm:$0xff]
    %v1953 = vld [vmem:[#allocation9 + $0xe0] sm:$0xff]
    %v1954 = vld [vmem:[#allocation9 + $0xe8] sm:$0xff]
    %v1955 = vld [vmem:[#allocation9 + $0xf0] sm:$0xff]
    %v1956 = vld [vmem:[#allocation9 + $0xf8] sm:$0xff]
    %v1973 = vunpack.c.l.b16 %v1909
    %v1974 = vunpack.c.l.b16 %v1910
    %v1975 = vunpack.c.l.b16 %v1911
    %v1976 = vunpack.c.l.b16 %v1912
    %v1977 = vunpack.c.l.b16 %v1913
    %v1978 = vunpack.c.l.b16 %v1914
    %v1979 = vunpack.c.l.b16 %v1915
    %v1980 = vunpack.c.l.b16 %v1916
    %v1981 = vunpack.c.l.b16 %v1917
    %v1982 = vunpack.c.l.b16 %v1918
    %v1983 = vunpack.c.l.b16 %v1919
    %v1984 = vunpack.c.l.b16 %v1920
    %v1985 = vunpack.c.l.b16 %v1921
    %v1986 = vunpack.c.l.b16 %v1922
    %v1987 = vunpack.c.l.b16 %v1923
    %v1988 = vunpack.c.l.b16 %v1924
    %v1989 = vpack.c.b16 %v1974, %v1973
    %v1990 = vpack.c.b16 %v1976, %v1975
    %v1991 = vpack.c.b16 %v1978, %v1977
    %v1992 = vpack.c.b16 %v1980, %v1979
    %v1993 = vpack.c.b16 %v1982, %v1981
    %v1994 = vpack.c.b16 %v1984, %v1983
    %v1995 = vpack.c.b16 %v1986, %v1985
    %v1996 = vpack.c.b16 %v1988, %v1987
    %v2037 = vunpack.c.l.b16 %v1925
    %v2038 = vunpack.c.h.b16 %v1925
    %v2039 = vunpack.c.l.b16 %v1926
    %v2040 = vunpack.c.h.b16 %v1926
    %v2041 = vunpack.c.l.b16 %v1927
    %v2042 = vunpack.c.h.b16 %v1927
    %v2043 = vunpack.c.l.b16 %v1928
    %v2044 = vunpack.c.h.b16 %v1928
    %v2045 = vunpack.c.l.b16 %v1929
    %v2046 = vunpack.c.h.b16 %v1929
    %v2047 = vunpack.c.l.b16 %v1930
    %v2048 = vunpack.c.h.b16 %v1930
    %v2049 = vunpack.c.l.b16 %v1931
    %v2050 = vunpack.c.h.b16 %v1931
    %v2051 = vunpack.c.l.b16 %v1932
    %v2052 = vunpack.c.h.b16 %v1932
    %v2053 = vunpack.c.l.b16 %v1933
    %v2054 = vunpack.c.h.b16 %v1933
    %v2055 = vunpack.c.l.b16 %v1934
    %v2056 = vunpack.c.h.b16 %v1934
    %v2057 = vunpack.c.l.b16 %v1935
    %v2058 = vunpack.c.h.b16 %v1935
    %v2059 = vunpack.c.l.b16 %v1936
    %v2060 = vunpack.c.h.b16 %v1936
    %v2061 = vunpack.c.l.b16 %v1937
    %v2062 = vunpack.c.h.b16 %v1937
    %v2063 = vunpack.c.l.b16 %v1938
    %v2064 = vunpack.c.h.b16 %v1938
    %v2065 = vunpack.c.l.b16 %v1939
    %v2066 = vunpack.c.h.b16 %v1939
    %v2067 = vunpack.c.l.b16 %v1940
    %v2068 = vunpack.c.h.b16 %v1940
    %v2069 = vunpack.c.l.b16 %v1941
    %v2070 = vunpack.c.h.b16 %v1941
    %v2071 = vunpack.c.l.b16 %v1942
    %v2072 = vunpack.c.h.b16 %v1942
    %v2073 = vunpack.c.l.b16 %v1943
    %v2074 = vunpack.c.h.b16 %v1943
    %v2075 = vunpack.c.l.b16 %v1944
    %v2076 = vunpack.c.h.b16 %v1944
    %v2077 = vunpack.c.l.b16 %v1945
    %v2078 = vunpack.c.h.b16 %v1945
    %v2079 = vunpack.c.l.b16 %v1946
    %v2080 = vunpack.c.h.b16 %v1946
    %v2081 = vunpack.c.l.b16 %v1947
    %v2082 = vunpack.c.h.b16 %v1947
    %v2083 = vunpack.c.l.b16 %v1948
    %v2084 = vunpack.c.h.b16 %v1948
    %v2085 = vunpack.c.l.b16 %v1949
    %v2086 = vunpack.c.h.b16 %v1949
    %v2087 = vunpack.c.l.b16 %v1950
    %v2088 = vunpack.c.h.b16 %v1950
    %v2089 = vunpack.c.l.b16 %v1951
    %v2090 = vunpack.c.h.b16 %v1951
    %v2091 = vunpack.c.l.b16 %v1952
    %v2092 = vunpack.c.h.b16 %v1952
    %v2093 = vunpack.c.l.b16 %v1953
    %v2094 = vunpack.c.h.b16 %v1953
    %v2095 = vunpack.c.l.b16 %v1954
    %v2096 = vunpack.c.h.b16 %v1954
    %v2097 = vunpack.c.l.b16 %v1955
    %v2098 = vunpack.c.h.b16 %v1955
    %v2099 = vunpack.c.l.b16 %v1956
    %v2100 = vunpack.c.h.b16 %v1956
    %v2101 = vpack.c.b16 %v2041, %v2037
    %v2102 = vpack.c.b16 %v2042, %v2038
    %v2103 = vpack.c.b16 %v2043, %v2039
    %v2104 = vpack.c.b16 %v2044, %v2040
    %v2105 = vpack.c.b16 %v2049, %v2045
    %v2106 = vpack.c.b16 %v2050, %v2046
    %v2107 = vpack.c.b16 %v2051, %v2047
    %v2108 = vpack.c.b16 %v2052, %v2048
    %v2109 = vpack.c.b16 %v2057, %v2053
    %v2110 = vpack.c.b16 %v2058, %v2054
    %v2111 = vpack.c.b16 %v2059, %v2055
    %v2112 = vpack.c.b16 %v2060, %v2056
    %v2113 = vpack.c.b16 %v2065, %v2061
    %v2114 = vpack.c.b16 %v2066, %v2062
    %v2115 = vpack.c.b16 %v2067, %v2063
    %v2116 = vpack.c.b16 %v2068, %v2064
    %v2117 = vpack.c.b16 %v2073, %v2069
    %v2118 = vpack.c.b16 %v2074, %v2070
    %v2119 = vpack.c.b16 %v2075, %v2071
    %v2120 = vpack.c.b16 %v2076, %v2072
    %v2121 = vpack.c.b16 %v2081, %v2077
    %v2122 = vpack.c.b16 %v2082, %v2078
    %v2123 = vpack.c.b16 %v2083, %v2079
    %v2124 = vpack.c.b16 %v2084, %v2080
    %v2125 = vpack.c.b16 %v2089, %v2085
    %v2126 = vpack.c.b16 %v2090, %v2086
    %v2127 = vpack.c.b16 %v2091, %v2087
    %v2128 = vpack.c.b16 %v2092, %v2088
    %v2129 = vpack.c.b16 %v2097, %v2093
    %v2130 = vpack.c.b16 %v2098, %v2094
    %v2131 = vpack.c.b16 %v2099, %v2095
    %v2132 = vpack.c.b16 %v2100, %v2096
    %2165 = vmatpush.bf16.msra.mxu0 %v2129
    %2166 = vmatpush.bf16.msra.mxu0 %v2125
    %2167 = vmatpush.bf16.msra.mxu0 %v2121
    %2168 = vmatpush.bf16.msra.mxu0 %v2117
    %2169 = vmatpush.bf16.msra.mxu0 %v2113
    %2170 = vmatpush.bf16.msra.mxu0 %v2109
    %2171 = vmatpush.bf16.msra.mxu0 %v2105
    %2172 = vmatpush.bf16.msra.mxu0 %v2101
    %2173 = vmatmul.bf16.gmra.mxu0 %v1989
    %v2174 = vpop.f32.mrf.mxu0
    %v2175 = vadd.f32 0.0, %v2174
    %v2176 = vpop.f32.mrf.mxu0
    %v2177 = vadd.f32 0.0, %v2176
    %2178 = vmatmul.bf16.gmra.mxu0 %v1990
    %v2179 = vpop.f32.mrf.mxu0
    %v2180 = vadd.f32 0.0, %v2179
    %v2181 = vpop.f32.mrf.mxu0
    %v2182 = vadd.f32 0.0, %v2181
    %2183 = vmatmul.bf16.gmra.mxu0 %v1991
    %v2184 = vpop.f32.mrf.mxu0
    %v2185 = vadd.f32 0.0, %v2184
    %v2186 = vpop.f32.mrf.mxu0
    %v2187 = vadd.f32 0.0, %v2186
    %2188 = vmatmul.bf16.gmra.mxu0 %v1992
    %v2189 = vpop.f32.mrf.mxu0
    %v2190 = vadd.f32 0.0, %v2189
    %v2191 = vpop.f32.mrf.mxu0
    %v2192 = vadd.f32 0.0, %v2191
    %2193 = vmatmul.bf16.gmra.mxu0 %v1993
    %v2194 = vpop.f32.mrf.mxu0
    %v2195 = vadd.f32 0.0, %v2194
    %v2196 = vpop.f32.mrf.mxu0
    %v2197 = vadd.f32 0.0, %v2196
    %2198 = vmatmul.bf16.gmra.mxu0 %v1994
    %v2199 = vpop.f32.mrf.mxu0
    %v2200 = vadd.f32 0.0, %v2199
    %v2201 = vpop.f32.mrf.mxu0
    %v2202 = vadd.f32 0.0, %v2201
    %2203 = vmatmul.bf16.gmra.mxu0 %v1995
    %v2204 = vpop.f32.mrf.mxu0
    %v2205 = vadd.f32 0.0, %v2204
    %v2206 = vpop.f32.mrf.mxu0
    %v2207 = vadd.f32 0.0, %v2206
    %2208 = vmatmul.bf16.gmra.mxu0 %v1996
    %v2209 = vpop.f32.mrf.mxu0
    %v2210 = vadd.f32 0.0, %v2209
    %v2211 = vpop.f32.mrf.mxu0
    %v2212 = vadd.f32 0.0, %v2211
    %2213 = vdwg.mxu0
    %2214 = vmatpush.bf16.msra.mxu0 %v2130
    %2215 = vmatpush.bf16.msra.mxu0 %v2126
    %2216 = vmatpush.bf16.msra.mxu0 %v2122
    %2217 = vmatpush.bf16.msra.mxu0 %v2118
    %2218 = vmatpush.bf16.msra.mxu0 %v2114
    %2219 = vmatpush.bf16.msra.mxu0 %v2110
    %2220 = vmatpush.bf16.msra.mxu0 %v2106
    %2221 = vmatpush.bf16.msra.mxu0 %v2102
    %2222 = vmatmul.bf16.gmra.mxu0 %v1989
    %v2223 = vpop.f32.mrf.mxu0
    %v2224 = vadd.f32 0.0, %v2223
    %v2225 = vpop.f32.mrf.mxu0
    %v2226 = vadd.f32 0.0, %v2225
    %2227 = vmatmul.bf16.gmra.mxu0 %v1990
    %v2228 = vpop.f32.mrf.mxu0
    %v2229 = vadd.f32 0.0, %v2228
    %v2230 = vpop.f32.mrf.mxu0
    %v2231 = vadd.f32 0.0, %v2230
    %2232 = vmatmul.bf16.gmra.mxu0 %v1991
    %v2233 = vpop.f32.mrf.mxu0
    %v2234 = vadd.f32 0.0, %v2233
    %v2235 = vpop.f32.mrf.mxu0
    %v2236 = vadd.f32 0.0, %v2235
    %2237 = vmatmul.bf16.gmra.mxu0 %v1992
    %v2238 = vpop.f32.mrf.mxu0
    %v2239 = vadd.f32 0.0, %v2238
    %v2240 = vpop.f32.mrf.mxu0
    %v2241 = vadd.f32 0.0, %v2240
    %2242 = vmatmul.bf16.gmra.mxu0 %v1993
    %v2243 = vpop.f32.mrf.mxu0
    %v2244 = vadd.f32 0.0, %v2243
    %v2245 = vpop.f32.mrf.mxu0
    %v2246 = vadd.f32 0.0, %v2245
    %2247 = vmatmul.bf16.gmra.mxu0 %v1994
    %v2248 = vpop.f32.mrf.mxu0
    %v2249 = vadd.f32 0.0, %v2248
    %v2250 = vpop.f32.mrf.mxu0
    %v2251 = vadd.f32 0.0, %v2250
    %2252 = vmatmul.bf16.gmra.mxu0 %v1995
    %v2253 = vpop.f32.mrf.mxu0
    %v2254 = vadd.f32 0.0, %v2253
    %v2255 = vpop.f32.mrf.mxu0
    %v2256 = vadd.f32 0.0, %v2255
    %2257 = vmatmul.bf16.gmra.mxu0 %v1996
    %v2258 = vpop.f32.mrf.mxu0
    %v2259 = vadd.f32 0.0, %v2258
    %v2260 = vpop.f32.mrf.mxu0
    %v2261 = vadd.f32 0.0, %v2260
    %2262 = vdwg.mxu0
    %2263 = vmatpush.bf16.msra.mxu0 %v2131
    %2264 = vmatpush.bf16.msra.mxu0 %v2127
    %2265 = vmatpush.bf16.msra.mxu0 %v2123
    %2266 = vmatpush.bf16.msra.mxu0 %v2119
    %2267 = vmatpush.bf16.msra.mxu0 %v2115
    %2268 = vmatpush.bf16.msra.mxu0 %v2111
    %2269 = vmatpush.bf16.msra.mxu0 %v2107
    %2270 = vmatpush.bf16.msra.mxu0 %v2103
    %2271 = vmatmul.bf16.gmra.mxu0 %v1989
    %v2272 = vpop.f32.mrf.mxu0
    %v2273 = vadd.f32 0.0, %v2272
    %v2274 = vpop.f32.mrf.mxu0
    %v2275 = vadd.f32 0.0, %v2274
    %2276 = vmatmul.bf16.gmra.mxu0 %v1990
    %v2277 = vpop.f32.mrf.mxu0
    %v2278 = vadd.f32 0.0, %v2277
    %v2279 = vpop.f32.mrf.mxu0
    %v2280 = vadd.f32 0.0, %v2279
    %2281 = vmatmul.bf16.gmra.mxu0 %v1991
    %v2282 = vpop.f32.mrf.mxu0
    %v2283 = vadd.f32 0.0, %v2282
    %v2284 = vpop.f32.mrf.mxu0
    %v2285 = vadd.f32 0.0, %v2284
    %2286 = vmatmul.bf16.gmra.mxu0 %v1992
    %v2287 = vpop.f32.mrf.mxu0
    %v2288 = vadd.f32 0.0, %v2287
    %v2289 = vpop.f32.mrf.mxu0
    %v2290 = vadd.f32 0.0, %v2289
    %2291 = vmatmul.bf16.gmra.mxu0 %v1993
    %v2292 = vpop.f32.mrf.mxu0
    %v2293 = vadd.f32 0.0, %v2292
    %v2294 = vpop.f32.mrf.mxu0
    %v2295 = vadd.f32 0.0, %v2294
    %2296 = vmatmul.bf16.gmra.mxu0 %v1994
    %v2297 = vpop.f32.mrf.mxu0
    %v2298 = vadd.f32 0.0, %v2297
    %v2299 = vpop.f32.mrf.mxu0
    %v2300 = vadd.f32 0.0, %v2299
    %2301 = vmatmul.bf16.gmra.mxu0 %v1995
    %v2302 = vpop.f32.mrf.mxu0
    %v2303 = vadd.f32 0.0, %v2302
    %v2304 = vpop.f32.mrf.mxu0
    %v2305 = vadd.f32 0.0, %v2304
    %2306 = vmatmul.bf16.gmra.mxu0 %v1996
    %v2307 = vpop.f32.mrf.mxu0
    %v2308 = vadd.f32 0.0, %v2307
    %v2309 = vpop.f32.mrf.mxu0
    %v2310 = vadd.f32 0.0, %v2309
    %2311 = vdwg.mxu0
    %2312 = vmatpush.bf16.msra.mxu0 %v2132
    %2313 = vmatpush.bf16.msra.mxu0 %v2128
    %2314 = vmatpush.bf16.msra.mxu0 %v2124
    %2315 = vmatpush.bf16.msra.mxu0 %v2120
    %2316 = vmatpush.bf16.msra.mxu0 %v2116
    %2317 = vmatpush.bf16.msra.mxu0 %v2112
    %2318 = vmatpush.bf16.msra.mxu0 %v2108
    %2319 = vmatpush.bf16.msra.mxu0 %v2104
    %2320 = vmatmul.bf16.gmra.mxu0 %v1989
    %v2321 = vpop.f32.mrf.mxu0
    %v2322 = vadd.f32 0.0, %v2321
    %v2323 = vpop.f32.mrf.mxu0
    %v2324 = vadd.f32 0.0, %v2323
    %2325 = vmatmul.bf16.gmra.mxu0 %v1990
    %v2326 = vpop.f32.mrf.mxu0
    %v2327 = vadd.f32 0.0, %v2326
    %v2328 = vpop.f32.mrf.mxu0
    %v2329 = vadd.f32 0.0, %v2328
    %2330 = vmatmul.bf16.gmra.mxu0 %v1991
    %v2331 = vpop.f32.mrf.mxu0
    %v2332 = vadd.f32 0.0, %v2331
    %v2333 = vpop.f32.mrf.mxu0
    %v2334 = vadd.f32 0.0, %v2333
    %2335 = vmatmul.bf16.gmra.mxu0 %v1992
    %v2336 = vpop.f32.mrf.mxu0
    %v2337 = vadd.f32 0.0, %v2336
    %v2338 = vpop.f32.mrf.mxu0
    %v2339 = vadd.f32 0.0, %v2338
    %2340 = vmatmul.bf16.gmra.mxu0 %v1993
    %v2341 = vpop.f32.mrf.mxu0
    %v2342 = vadd.f32 0.0, %v2341
    %v2343 = vpop.f32.mrf.mxu0
    %v2344 = vadd.f32 0.0, %v2343
    %2345 = vmatmul.bf16.gmra.mxu0 %v1994
    %v2346 = vpop.f32.mrf.mxu0
    %v2347 = vadd.f32 0.0, %v2346
    %v2348 = vpop.f32.mrf.mxu0
    %v2349 = vadd.f32 0.0, %v2348
    %2350 = vmatmul.bf16.gmra.mxu0 %v1995
    %v2351 = vpop.f32.mrf.mxu0
    %v2352 = vadd.f32 0.0, %v2351
    %v2353 = vpop.f32.mrf.mxu0
    %v2354 = vadd.f32 0.0, %v2353
    %2355 = vmatmul.bf16.gmra.mxu0 %v1996
    %v2356 = vpop.f32.mrf.mxu0
    %v2357 = vadd.f32 0.0, %v2356
    %v2358 = vpop.f32.mrf.mxu0
    %v2359 = vadd.f32 0.0, %v2358
    %2360 = vdwg.mxu0
    %v2361 = vpack.c.bf16 %v2224, %v2175
    %v2362 = vpack.c.bf16 %v2322, %v2273
    %v2363 = vpack.c.bf16 %v2226, %v2177
    %v2364 = vpack.c.bf16 %v2324, %v2275
    %v2365 = vpack.c.bf16 %v2229, %v2180
    %v2366 = vpack.c.bf16 %v2327, %v2278
    %v2367 = vpack.c.bf16 %v2231, %v2182
    %v2368 = vpack.c.bf16 %v2329, %v2280
    %v2369 = vpack.c.bf16 %v2234, %v2185
    %v2370 = vpack.c.bf16 %v2332, %v2283
    %v2371 = vpack.c.bf16 %v2236, %v2187
    %v2372 = vpack.c.bf16 %v2334, %v2285
    %v2373 = vpack.c.bf16 %v2239, %v2190
    %v2374 = vpack.c.bf16 %v2337, %v2288
    %v2375 = vpack.c.bf16 %v2241, %v2192
    %v2376 = vpack.c.bf16 %v2339, %v2290
    %v2377 = vpack.c.bf16 %v2244, %v2195
    %v2378 = vpack.c.bf16 %v2342, %v2293
    %v2379 = vpack.c.bf16 %v2246, %v2197
    %v2380 = vpack.c.bf16 %v2344, %v2295
    %v2381 = vpack.c.bf16 %v2249, %v2200
    %v2382 = vpack.c.bf16 %v2347, %v2298
    %v2383 = vpack.c.bf16 %v2251, %v2202
    %v2384 = vpack.c.bf16 %v2349, %v2300
    %v2385 = vpack.c.bf16 %v2254, %v2205
    %v2386 = vpack.c.bf16 %v2352, %v2303
    %v2387 = vpack.c.bf16 %v2256, %v2207
    %v2388 = vpack.c.bf16 %v2354, %v2305
    %v2389 = vpack.c.bf16 %v2259, %v2210
    %v2390 = vpack.c.bf16 %v2357, %v2308
    %v2391 = vpack.c.bf16 %v2261, %v2212
    %v2392 = vpack.c.bf16 %v2359, %v2310
    %2393 = vst [vmem:[#allocation2] sm:$0xff] %v2361
    %2394 = vst [vmem:[#allocation2 + $0x8] sm:$0xff] %v2362
    %2395 = vst [vmem:[#allocation2 + $0x10] sm:$0xff] %v2363
    %2396 = vst [vmem:[#allocation2 + $0x18] sm:$0xff] %v2364
    %2397 = vst [vmem:[#allocation2 + $0x20] sm:$0xff] %v2365
    %2398 = vst [vmem:[#allocation2 + $0x28] sm:$0xff] %v2366
    %2399 = vst [vmem:[#allocation2 + $0x30] sm:$0xff] %v2367
    %2400 = vst [vmem:[#allocation2 + $0x38] sm:$0xff] %v2368
    %2401 = vst [vmem:[#allocation2 + $0x40] sm:$0xff] %v2369
    %2402 = vst [vmem:[#allocation2 + $0x48] sm:$0xff] %v2370
    %2403 = vst [vmem:[#allocation2 + $0x50] sm:$0xff] %v2371
    %2404 = vst [vmem:[#allocation2 + $0x58] sm:$0xff] %v2372
    %2405 = vst [vmem:[#allocation2 + $0x60] sm:$0xff] %v2373
    %2406 = vst [vmem:[#allocation2 + $0x68] sm:$0xff] %v2374
    %2407 = vst [vmem:[#allocation2 + $0x70] sm:$0xff] %v2375
    %2408 = vst [vmem:[#allocation2 + $0x78] sm:$0xff] %v2376
    %2409 = vst [vmem:[#allocation2 + $0x80] sm:$0xff] %v2377
    %2410 = vst [vmem:[#allocation2 + $0x88] sm:$0xff] %v2378
    %2411 = vst [vmem:[#allocation2 + $0x90] sm:$0xff] %v2379
    %2412 = vst [vmem:[#allocation2 + $0x98] sm:$0xff] %v2380
    %2413 = vst [vmem:[#allocation2 + $0xa0] sm:$0xff] %v2381
    %2414 = vst [vmem:[#allocation2 + $0xa8] sm:$0xff] %v2382
    %2415 = vst [vmem:[#allocation2 + $0xb0] sm:$0xff] %v2383
    %2416 = vst [vmem:[#allocation2 + $0xb8] sm:$0xff] %v2384
    %2417 = vst [vmem:[#allocation2 + $0xc0] sm:$0xff] %v2385
    %2418 = vst [vmem:[#allocation2 + $0xc8] sm:$0xff] %v2386
    %2419 = vst [vmem:[#allocation2 + $0xd0] sm:$0xff] %v2387
    %2420 = vst [vmem:[#allocation2 + $0xd8] sm:$0xff] %v2388
    %2421 = vst [vmem:[#allocation2 + $0xe0] sm:$0xff] %v2389
    %2422 = vst [vmem:[#allocation2 + $0xe8] sm:$0xff] %v2390
    %2423 = vst [vmem:[#allocation2 + $0xf0] sm:$0xff] %v2391
    %2424 = vst [vmem:[#allocation2 + $0xf8] sm:$0xff] %v2392
    %v2425 = vld [vmem:[#allocation12] sm:$0xff]
    %v2426 = vld [vmem:[#allocation12 + $0x8] sm:$0xff]
    %v2427 = vld [vmem:[#allocation12 + $0x10] sm:$0xff]
    %v2428 = vld [vmem:[#allocation12 + $0x18] sm:$0xff]
    %v2429 = vld [vmem:[#allocation12 + $0x20] sm:$0xff]
    %v2430 = vld [vmem:[#allocation12 + $0x28] sm:$0xff]
    %v2431 = vld [vmem:[#allocation12 + $0x30] sm:$0xff]
    %v2432 = vld [vmem:[#allocation12 + $0x38] sm:$0xff]
    %v2433 = vld [vmem:[#allocation12 + $0x40] sm:$0xff]
    %v2434 = vld [vmem:[#allocation12 + $0x48] sm:$0xff]
    %v2435 = vld [vmem:[#allocation12 + $0x50] sm:$0xff]
    %v2436 = vld [vmem:[#allocation12 + $0x58] sm:$0xff]
    %v2437 = vld [vmem:[#allocation12 + $0x60] sm:$0xff]
    %v2438 = vld [vmem:[#allocation12 + $0x68] sm:$0xff]
    %v2439 = vld [vmem:[#allocation12 + $0x70] sm:$0xff]
    %v2440 = vld [vmem:[#allocation12 + $0x78] sm:$0xff]
    %v2441 = vld [vmem:[#allocation12 + $0x80] sm:$0xff]
    %v2442 = vld [vmem:[#allocation12 + $0x88] sm:$0xff]
    %v2443 = vld [vmem:[#allocation12 + $0x90] sm:$0xff]
    %v2444 = vld [vmem:[#allocation12 + $0x98] sm:$0xff]
    %v2445 = vld [vmem:[#allocation12 + $0xa0] sm:$0xff]
    %v2446 = vld [vmem:[#allocation12 + $0xa8] sm:$0xff]
    %v2447 = vld [vmem:[#allocation12 + $0xb0] sm:$0xff]
    %v2448 = vld [vmem:[#allocation12 + $0xb8] sm:$0xff]
    %v2449 = vld [vmem:[#allocation12 + $0xc0] sm:$0xff]
    %v2450 = vld [vmem:[#allocation12 + $0xc8] sm:$0xff]
    %v2451 = vld [vmem:[#allocation12 + $0xd0] sm:$0xff]
    %v2452 = vld [vmem:[#allocation12 + $0xd8] sm:$0xff]
    %v2453 = vld [vmem:[#allocation12 + $0xe0] sm:$0xff]
    %v2454 = vld [vmem:[#allocation12 + $0xe8] sm:$0xff]
    %v2455 = vld [vmem:[#allocation12 + $0xf0] sm:$0xff]
    %v2456 = vld [vmem:[#allocation12 + $0xf8] sm:$0xff]
    %v2457 = vld [vmem:[#allocation13] sm:$0xf]
    %s2458 = scalar_lea.vmem [#allocation15], 16
    %v2459 = vld [vmem:[%s2458] sm:$0xff]
    %v2460 = vld [vmem:[%s2458 + $0x8] sm:$0xff]
    %s2461 = scalar_lea.vmem [#allocation16], 16
    %v2462 = vld [vmem:[%s2461] sm:$0xff]
    %v2463 = vld [vmem:[%s2461 + $0x8] sm:$0xff]
    %v2464 = vld [vmem:[#allocation2] sm:$0xff]
    %v2465 = vld [vmem:[#allocation2 + $0x8] sm:$0xff]
    %v2466 = vld [vmem:[#allocation2 + $0x10] sm:$0xff]
    %v2467 = vld [vmem:[#allocation2 + $0x18] sm:$0xff]
    %v2468 = vunpack.c.l.bf16 %v2464
    %v2469 = vunpack.c.h.bf16 %v2464
    %v2470 = vunpack.c.l.bf16 %v2465
    %v2471 = vunpack.c.h.bf16 %v2465
    %v2472 = vunpack.c.l.bf16 %v2466
    %v2473 = vunpack.c.h.bf16 %v2466
    %v2474 = vunpack.c.l.bf16 %v2467
    %v2475 = vunpack.c.h.bf16 %v2467
    %v2477 = vperm.slane %v2457, 0
    %v2478 = vperm.slane %v2457, 1
    %v2479 = vperm.slane %v2457, 2
    %v2480 = vperm.slane %v2457, 3
    %v2485 = vadd.f32 %v2468, %v2477
    %v2486 = vadd.f32 %v2469, %v2478
    %v2487 = vadd.f32 %v2470, %v2479
    %v2488 = vadd.f32 %v2471, %v2480
    %v2489 = vadd.f32 %v2472, %v2477
    %v2490 = vadd.f32 %v2473, %v2478
    %v2491 = vadd.f32 %v2474, %v2479
    %v2492 = vadd.f32 %v2475, %v2480
    %v2493 = vpack.c.bf16 %v2460, %v2459
    %v2526 = vunpack.c.l.b16 %v2425
    %v2527 = vunpack.c.h.b16 %v2425
    %v2528 = vunpack.c.l.b16 %v2426
    %v2529 = vunpack.c.h.b16 %v2426
    %v2530 = vunpack.c.l.b16 %v2427
    %v2531 = vunpack.c.h.b16 %v2427
    %v2532 = vunpack.c.l.b16 %v2428
    %v2533 = vunpack.c.h.b16 %v2428
    %v2534 = vunpack.c.l.b16 %v2429
    %v2535 = vunpack.c.h.b16 %v2429
    %v2536 = vunpack.c.l.b16 %v2430
    %v2537 = vunpack.c.h.b16 %v2430
    %v2538 = vunpack.c.l.b16 %v2431
    %v2539 = vunpack.c.h.b16 %v2431
    %v2540 = vunpack.c.l.b16 %v2432
    %v2541 = vunpack.c.h.b16 %v2432
    %v2542 = vunpack.c.l.b16 %v2433
    %v2543 = vunpack.c.h.b16 %v2433
    %v2544 = vunpack.c.l.b16 %v2434
    %v2545 = vunpack.c.h.b16 %v2434
    %v2546 = vunpack.c.l.b16 %v2435
    %v2547 = vunpack.c.h.b16 %v2435
    %v2548 = vunpack.c.l.b16 %v2436
    %v2549 = vunpack.c.h.b16 %v2436
    %v2550 = vunpack.c.l.b16 %v2437
    %v2551 = vunpack.c.h.b16 %v2437
    %v2552 = vunpack.c.l.b16 %v2438
    %v2553 = vunpack.c.h.b16 %v2438
    %v2554 = vunpack.c.l.b16 %v2439
    %v2555 = vunpack.c.h.b16 %v2439
    %v2556 = vunpack.c.l.b16 %v2440
    %v2557 = vunpack.c.h.b16 %v2440
    %v2558 = vunpack.c.l.b16 %v2441
    %v2559 = vunpack.c.h.b16 %v2441
    %v2560 = vunpack.c.l.b16 %v2442
    %v2561 = vunpack.c.h.b16 %v2442
    %v2562 = vunpack.c.l.b16 %v2443
    %v2563 = vunpack.c.h.b16 %v2443
    %v2564 = vunpack.c.l.b16 %v2444
    %v2565 = vunpack.c.h.b16 %v2444
    %v2566 = vunpack.c.l.b16 %v2445
    %v2567 = vunpack.c.h.b16 %v2445
    %v2568 = vunpack.c.l.b16 %v2446
    %v2569 = vunpack.c.h.b16 %v2446
    %v2570 = vunpack.c.l.b16 %v2447
    %v2571 = vunpack.c.h.b16 %v2447
    %v2572 = vunpack.c.l.b16 %v2448
    %v2573 = vunpack.c.h.b16 %v2448
    %v2574 = vunpack.c.l.b16 %v2449
    %v2575 = vunpack.c.h.b16 %v2449
    %v2576 = vunpack.c.l.b16 %v2450
    %v2577 = vunpack.c.h.b16 %v2450
    %v2578 = vunpack.c.l.b16 %v2451
    %v2579 = vunpack.c.h.b16 %v2451
    %v2580 = vunpack.c.l.b16 %v2452
    %v2581 = vunpack.c.h.b16 %v2452
    %v2582 = vunpack.c.l.b16 %v2453
    %v2583 = vunpack.c.h.b16 %v2453
    %v2584 = vunpack.c.l.b16 %v2454
    %v2585 = vunpack.c.h.b16 %v2454
    %v2586 = vunpack.c.l.b16 %v2455
    %v2587 = vunpack.c.h.b16 %v2455
    %v2588 = vunpack.c.l.b16 %v2456
    %v2589 = vunpack.c.h.b16 %v2456
    %v2590 = vpack.c.b16 %v2530, %v2526
    %v2591 = vpack.c.b16 %v2531, %v2527
    %v2592 = vpack.c.b16 %v2532, %v2528
    %v2593 = vpack.c.b16 %v2533, %v2529
    %v2594 = vpack.c.b16 %v2538, %v2534
    %v2595 = vpack.c.b16 %v2539, %v2535
    %v2596 = vpack.c.b16 %v2540, %v2536
    %v2597 = vpack.c.b16 %v2541, %v2537
    %v2598 = vpack.c.b16 %v2546, %v2542
    %v2599 = vpack.c.b16 %v2547, %v2543
    %v2600 = vpack.c.b16 %v2548, %v2544
    %v2601 = vpack.c.b16 %v2549, %v2545
    %v2602 = vpack.c.b16 %v2554, %v2550
    %v2603 = vpack.c.b16 %v2555, %v2551
    %v2604 = vpack.c.b16 %v2556, %v2552
    %v2605 = vpack.c.b16 %v2557, %v2553
    %v2606 = vpack.c.b16 %v2562, %v2558
    %v2607 = vpack.c.b16 %v2563, %v2559
    %v2608 = vpack.c.b16 %v2564, %v2560
    %v2609 = vpack.c.b16 %v2565, %v2561
    %v2610 = vpack.c.b16 %v2570, %v2566
    %v2611 = vpack.c.b16 %v2571, %v2567
    %v2612 = vpack.c.b16 %v2572, %v2568
    %v2613 = vpack.c.b16 %v2573, %v2569
    %v2614 = vpack.c.b16 %v2578, %v2574
    %v2615 = vpack.c.b16 %v2579, %v2575
    %v2616 = vpack.c.b16 %v2580, %v2576
    %v2617 = vpack.c.b16 %v2581, %v2577
    %v2618 = vpack.c.b16 %v2586, %v2582
    %v2619 = vpack.c.b16 %v2587, %v2583
    %v2620 = vpack.c.b16 %v2588, %v2584
    %v2621 = vpack.c.b16 %v2589, %v2585
    %2654 = vmatpush.bf16.msra.mxu0 %v2618
    %2655 = vmatpush.bf16.msra.mxu0 %v2614
    %2656 = vmatpush.bf16.msra.mxu0 %v2610
    %2657 = vmatpush.bf16.msra.mxu0 %v2606
    %2658 = vmatpush.bf16.msra.mxu0 %v2602
    %2659 = vmatpush.bf16.msra.mxu0 %v2598
    %2660 = vmatpush.bf16.msra.mxu0 %v2594
    %2661 = vmatpush.bf16.msra.mxu0 %v2590
    %2662 = vmatmul.bf16.gmra.mxu0 %v2493
    %v2663 = vpop.f32.mrf.mxu0
    %v2664 = vadd.f32 0.0, %v2663
    %v2665 = vpop.f32.mrf.mxu0
    %v2666 = vadd.f32 0.0, %v2665
    %2667 = vdwg.mxu0
    %2668 = vmatpush.bf16.msra.mxu0 %v2619
    %2669 = vmatpush.bf16.msra.mxu0 %v2615
    %2670 = vmatpush.bf16.msra.mxu0 %v2611
    %2671 = vmatpush.bf16.msra.mxu0 %v2607
    %2672 = vmatpush.bf16.msra.mxu0 %v2603
    %2673 = vmatpush.bf16.msra.mxu0 %v2599
    %2674 = vmatpush.bf16.msra.mxu0 %v2595
    %2675 = vmatpush.bf16.msra.mxu0 %v2591
    %2676 = vmatmul.bf16.gmra.mxu0 %v2493
    %v2677 = vpop.f32.mrf.mxu0
    %v2678 = vadd.f32 0.0, %v2677
    %v2679 = vpop.f32.mrf.mxu0
    %v2680 = vadd.f32 0.0, %v2679
    %2681 = vdwg.mxu0
    %2682 = vmatpush.bf16.msra.mxu0 %v2620
    %2683 = vmatpush.bf16.msra.mxu0 %v2616
    %2684 = vmatpush.bf16.msra.mxu0 %v2612
    %2685 = vmatpush.bf16.msra.mxu0 %v2608
    %2686 = vmatpush.bf16.msra.mxu0 %v2604
    %2687 = vmatpush.bf16.msra.mxu0 %v2600
    %2688 = vmatpush.bf16.msra.mxu0 %v2596
    %2689 = vmatpush.bf16.msra.mxu0 %v2592
    %2690 = vmatmul.bf16.gmra.mxu0 %v2493
    %v2691 = vpop.f32.mrf.mxu0
    %v2692 = vadd.f32 0.0, %v2691
    %v2693 = vpop.f32.mrf.mxu0
    %v2694 = vadd.f32 0.0, %v2693
    %2695 = vdwg.mxu0
    %2696 = vmatpush.bf16.msra.mxu0 %v2621
    %2697 = vmatpush.bf16.msra.mxu0 %v2617
    %2698 = vmatpush.bf16.msra.mxu0 %v2613
    %2699 = vmatpush.bf16.msra.mxu0 %v2609
    %2700 = vmatpush.bf16.msra.mxu0 %v2605
    %2701 = vmatpush.bf16.msra.mxu0 %v2601
    %2702 = vmatpush.bf16.msra.mxu0 %v2597
    %2703 = vmatpush.bf16.msra.mxu0 %v2593
    %2704 = vmatmul.bf16.gmra.mxu0 %v2493
    %v2705 = vpop.f32.mrf.mxu0
    %v2706 = vadd.f32 0.0, %v2705
    %v2707 = vpop.f32.mrf.mxu0
    %v2708 = vadd.f32 0.0, %v2707
    %2709 = vdwg.mxu0
    %v2710 = vadd.f32 %v2485, %v2664
    %v2711 = vadd.f32 %v2486, %v2678
    %v2712 = vadd.f32 %v2487, %v2692
    %v2713 = vadd.f32 %v2488, %v2706
    %v2714 = vadd.f32 %v2489, %v2666
    %v2715 = vadd.f32 %v2490, %v2680
    %v2716 = vadd.f32 %v2491, %v2694
    %v2717 = vadd.f32 %v2492, %v2708
    %v2718 = vmul.f32 %v2710, 0.5
    %v2719 = vmul.f32 %v2714, 0.5
    %v2720 = vtanh.pop %v2718
    %v2721 = vtanh.pop %v2719
    %v2722 = vmul.f32 %v2720, 0.5
    %v2723 = vmul.f32 %v2721, 0.5
    %v2724 = vadd.f32 %v2722, 0.5
    %v2725 = vadd.f32 %v2723, 0.5
    %v2726 = vmul.f32 %v2711, 0.5
    %v2727 = vmul.f32 %v2715, 0.5
    %v2728 = vtanh.pop %v2726
    %v2729 = vtanh.pop %v2727
    %v2730 = vmul.f32 %v2728, 0.5
    %v2731 = vmul.f32 %v2729, 0.5
    %v2732 = vadd.f32 %v2730, 0.5
    %v2733 = vadd.f32 %v2731, 0.5
    %v2734 = vtanh.pop %v2712
    %v2735 = vtanh.pop %v2716
    %v2736 = vmul.f32 %v2713, 0.5
    %v2737 = vmul.f32 %v2717, 0.5
    %v2738 = vtanh.pop %v2736
    %v2739 = vtanh.pop %v2737
    %v2740 = vmul.f32 %v2738, 0.5
    %v2741 = vmul.f32 %v2739, 0.5
    %v2742 = vadd.f32 %v2740, 0.5
    %v2743 = vadd.f32 %v2741, 0.5
    %v2744 = vmul.f32 %v2732, %v2462
    %v2745 = vmul.f32 %v2733, %v2463
    %v2746 = vmul.f32 %v2724, %v2734
    %v2747 = vmul.f32 %v2725, %v2735
    %v2748 = vadd.f32 %v2744, %v2746
    %v2749 = vadd.f32 %v2745, %v2747
    %v2750 = vtanh.pop %v2748
    %v2751 = vtanh.pop %v2749
    %v2752 = vmul.f32 %v2742, %v2750
    %v2753 = vmul.f32 %v2743, %v2751
    %v2754 = vld [vmem:[%s981] sm:$0xff]
    %v2755 = vld [vmem:[%s981 + $0x8] sm:$0xff]
    %v2756 = vld [vmem:[%s981 + $0x10] sm:$0xff]
    %v2757 = vld [vmem:[%s981 + $0x18] sm:$0xff]
    %v2758 = vunpack.c.l.bf16 %v2754
    %v2759 = vunpack.c.h.bf16 %v2754
    %v2760 = vunpack.c.l.bf16 %v2755
    %v2761 = vunpack.c.h.bf16 %v2755
    %v2762 = vunpack.c.l.bf16 %v2756
    %v2763 = vunpack.c.h.bf16 %v2756
    %v2764 = vunpack.c.l.bf16 %v2757
    %v2765 = vunpack.c.h.bf16 %v2757
    %v2766 = vadd.f32 %v2758, %v2477
    %v2767 = vadd.f32 %v2759, %v2478
    %v2768 = vadd.f32 %v2760, %v2479
    %v2769 = vadd.f32 %v2761, %v2480
    %v2770 = vadd.f32 %v2762, %v2477
    %v2771 = vadd.f32 %v2763, %v2478
    %v2772 = vadd.f32 %v2764, %v2479
    %v2773 = vadd.f32 %v2765, %v2480
    %v2774 = vpack.c.bf16 %v2753, %v2752
    %2775 = vmatpush.bf16.msra.mxu0 %v2618
    %2776 = vmatpush.bf16.msra.mxu0 %v2614
    %2777 = vmatpush.bf16.msra.mxu0 %v2610
    %2778 = vmatpush.bf16.msra.mxu0 %v2606
    %2779 = vmatpush.bf16.msra.mxu0 %v2602
    %2780 = vmatpush.bf16.msra.mxu0 %v2598
    %2781 = vmatpush.bf16.msra.mxu0 %v2594
    %2782 = vmatpush.bf16.msra.mxu0 %v2590
    %2783 = vmatmul.bf16.gmra.mxu0 %v2774
    %v2784 = vpop.f32.mrf.mxu0
    %v2785 = vadd.f32 0.0, %v2784
    %v2786 = vpop.f32.mrf.mxu0
    %v2787 = vadd.f32 0.0, %v2786
    %2788 = vdwg.mxu0
    %2789 = vmatpush.bf16.msra.mxu0 %v2619
    %2790 = vmatpush.bf16.msra.mxu0 %v2615
    %2791 = vmatpush.bf16.msra.mxu0 %v2611
    %2792 = vmatpush.bf16.msra.mxu0 %v2607
    %2793 = vmatpush.bf16.msra.mxu0 %v2603
    %2794 = vmatpush.bf16.msra.mxu0 %v2599
    %2795 = vmatpush.bf16.msra.mxu0 %v2595
    %2796 = vmatpush.bf16.msra.mxu0 %v2591
    %2797 = vmatmul.bf16.gmra.mxu0 %v2774
    %v2798 = vpop.f32.mrf.mxu0
    %v2799 = vadd.f32 0.0, %v2798
    %v2800 = vpop.f32.mrf.mxu0
    %v2801 = vadd.f32 0.0, %v2800
    %2802 = vdwg.mxu0
    %2803 = vmatpush.bf16.msra.mxu0 %v2620
    %2804 = vmatpush.bf16.msra.mxu0 %v2616
    %2805 = vmatpush.bf16.msra.mxu0 %v2612
    %2806 = vmatpush.bf16.msra.mxu0 %v2608
    %2807 = vmatpush.bf16.msra.mxu0 %v2604
    %2808 = vmatpush.bf16.msra.mxu0 %v2600
    %2809 = vmatpush.bf16.msra.mxu0 %v2596
    %2810 = vmatpush.bf16.msra.mxu0 %v2592
    %2811 = vmatmul.bf16.gmra.mxu0 %v2774
    %v2812 = vpop.f32.mrf.mxu0
    %v2813 = vadd.f32 0.0, %v2812
    %v2814 = vpop.f32.mrf.mxu0
    %v2815 = vadd.f32 0.0, %v2814
    %2816 = vdwg.mxu0
    %2817 = vmatpush.bf16.msra.mxu0 %v2621
    %2818 = vmatpush.bf16.msra.mxu0 %v2617
    %2819 = vmatpush.bf16.msra.mxu0 %v2613
    %2820 = vmatpush.bf16.msra.mxu0 %v2609
    %2821 = vmatpush.bf16.msra.mxu0 %v2605
    %2822 = vmatpush.bf16.msra.mxu0 %v2601
    %2823 = vmatpush.bf16.msra.mxu0 %v2597
    %2824 = vmatpush.bf16.msra.mxu0 %v2593
    %2825 = vmatmul.bf16.gmra.mxu0 %v2774
    %v2826 = vpop.f32.mrf.mxu0
    %v2827 = vadd.f32 0.0, %v2826
    %v2828 = vpop.f32.mrf.mxu0
    %v2829 = vadd.f32 0.0, %v2828
    %2830 = vdwg.mxu0
    %v2831 = vadd.f32 %v2766, %v2785
    %v2832 = vadd.f32 %v2767, %v2799
    %v2833 = vadd.f32 %v2768, %v2813
    %v2834 = vadd.f32 %v2769, %v2827
    %v2835 = vadd.f32 %v2770, %v2787
    %v2836 = vadd.f32 %v2771, %v2801
    %v2837 = vadd.f32 %v2772, %v2815
    %v2838 = vadd.f32 %v2773, %v2829
    %v2839 = vmul.f32 %v2831, 0.5
    %v2840 = vmul.f32 %v2835, 0.5
    %v2841 = vtanh.pop %v2839
    %v2842 = vtanh.pop %v2840
    %v2843 = vmul.f32 %v2841, 0.5
    %v2844 = vmul.f32 %v2842, 0.5
    %v2845 = vadd.f32 %v2843, 0.5
    %v2846 = vadd.f32 %v2844, 0.5
    %v2847 = vmul.f32 %v2832, 0.5
    %v2848 = vmul.f32 %v2836, 0.5
    %v2849 = vtanh.pop %v2847
    %v2850 = vtanh.pop %v2848
    %v2851 = vmul.f32 %v2849, 0.5
    %v2852 = vmul.f32 %v2850, 0.5
    %v2853 = vadd.f32 %v2851, 0.5
    %v2854 = vadd.f32 %v2852, 0.5
    %v2855 = vtanh.pop %v2833
    %v2856 = vtanh.pop %v2837
    %v2857 = vmul.f32 %v2834, 0.5
    %v2858 = vmul.f32 %v2838, 0.5
    %v2859 = vtanh.pop %v2857
    %v2860 = vtanh.pop %v2858
    %v2861 = vmul.f32 %v2859, 0.5
    %v2862 = vmul.f32 %v2860, 0.5
    %v2863 = vadd.f32 %v2861, 0.5
    %v2864 = vadd.f32 %v2862, 0.5
    %v2865 = vmul.f32 %v2853, %v2748
    %v2866 = vmul.f32 %v2854, %v2749
    %v2867 = vmul.f32 %v2845, %v2855
    %v2868 = vmul.f32 %v2846, %v2856
    %v2869 = vadd.f32 %v2865, %v2867
    %v2870 = vadd.f32 %v2866, %v2868
    %v2871 = vtanh.pop %v2869
    %v2872 = vtanh.pop %v2870
    %v2873 = vmul.f32 %v2863, %v2871
    %v2874 = vmul.f32 %v2864, %v2872
    %v2875 = vld [vmem:[%s1113] sm:$0xff]
    %v2876 = vld [vmem:[%s1113 + $0x8] sm:$0xff]
    %v2877 = vld [vmem:[%s1113 + $0x10] sm:$0xff]
    %v2878 = vld [vmem:[%s1113 + $0x18] sm:$0xff]
    %v2879 = vunpack.c.l.bf16 %v2875
    %v2880 = vunpack.c.h.bf16 %v2875
    %v2881 = vunpack.c.l.bf16 %v2876
    %v2882 = vunpack.c.h.bf16 %v2876
    %v2883 = vunpack.c.l.bf16 %v2877
    %v2884 = vunpack.c.h.bf16 %v2877
    %v2885 = vunpack.c.l.bf16 %v2878
    %v2886 = vunpack.c.h.bf16 %v2878
    %v2887 = vadd.f32 %v2879, %v2477
    %v2888 = vadd.f32 %v2880, %v2478
    %v2889 = vadd.f32 %v2881, %v2479
    %v2890 = vadd.f32 %v2882, %v2480
    %v2891 = vadd.f32 %v2883, %v2477
    %v2892 = vadd.f32 %v2884, %v2478
    %v2893 = vadd.f32 %v2885, %v2479
    %v2894 = vadd.f32 %v2886, %v2480
    %v2895 = vpack.c.bf16 %v2874, %v2873
    %2896 = vmatpush.bf16.msra.mxu0 %v2618
    %2897 = vmatpush.bf16.msra.mxu0 %v2614
    %2898 = vmatpush.bf16.msra.mxu0 %v2610
    %2899 = vmatpush.bf16.msra.mxu0 %v2606
    %2900 = vmatpush.bf16.msra.mxu0 %v2602
    %2901 = vmatpush.bf16.msra.mxu0 %v2598
    %2902 = vmatpush.bf16.msra.mxu0 %v2594
    %2903 = vmatpush.bf16.msra.mxu0 %v2590
    %2904 = vmatmul.bf16.gmra.mxu0 %v2895
    %v2905 = vpop.f32.mrf.mxu0
    %v2906 = vadd.f32 0.0, %v2905
    %v2907 = vpop.f32.mrf.mxu0
    %v2908 = vadd.f32 0.0, %v2907
    %2909 = vdwg.mxu0
    %2910 = vmatpush.bf16.msra.mxu0 %v2619
    %2911 = vmatpush.bf16.msra.mxu0 %v2615
    %2912 = vmatpush.bf16.msra.mxu0 %v2611
    %2913 = vmatpush.bf16.msra.mxu0 %v2607
    %2914 = vmatpush.bf16.msra.mxu0 %v2603
    %2915 = vmatpush.bf16.msra.mxu0 %v2599
    %2916 = vmatpush.bf16.msra.mxu0 %v2595
    %2917 = vmatpush.bf16.msra.mxu0 %v2591
    %2918 = vmatmul.bf16.gmra.mxu0 %v2895
    %v2919 = vpop.f32.mrf.mxu0
    %v2920 = vadd.f32 0.0, %v2919
    %v2921 = vpop.f32.mrf.mxu0
    %v2922 = vadd.f32 0.0, %v2921
    %2923 = vdwg.mxu0
    %2924 = vmatpush.bf16.msra.mxu0 %v2620
    %2925 = vmatpush.bf16.msra.mxu0 %v2616
    %2926 = vmatpush.bf16.msra.mxu0 %v2612
    %2927 = vmatpush.bf16.msra.mxu0 %v2608
    %2928 = vmatpush.bf16.msra.mxu0 %v2604
    %2929 = vmatpush.bf16.msra.mxu0 %v2600
    %2930 = vmatpush.bf16.msra.mxu0 %v2596
    %2931 = vmatpush.bf16.msra.mxu0 %v2592
    %2932 = vmatmul.bf16.gmra.mxu0 %v2895
    %v2933 = vpop.f32.mrf.mxu0
    %v2934 = vadd.f32 0.0, %v2933
    %v2935 = vpop.f32.mrf.mxu0
    %v2936 = vadd.f32 0.0, %v2935
    %2937 = vdwg.mxu0
    %2938 = vmatpush.bf16.msra.mxu0 %v2621
    %2939 = vmatpush.bf16.msra.mxu0 %v2617
    %2940 = vmatpush.bf16.msra.mxu0 %v2613
    %2941 = vmatpush.bf16.msra.mxu0 %v2609
    %2942 = vmatpush.bf16.msra.mxu0 %v2605
    %2943 = vmatpush.bf16.msra.mxu0 %v2601
    %2944 = vmatpush.bf16.msra.mxu0 %v2597
    %2945 = vmatpush.bf16.msra.mxu0 %v2593
    %2946 = vmatmul.bf16.gmra.mxu0 %v2895
    %v2947 = vpop.f32.mrf.mxu0
    %v2948 = vadd.f32 0.0, %v2947
    %v2949 = vpop.f32.mrf.mxu0
    %v2950 = vadd.f32 0.0, %v2949
    %2951 = vdwg.mxu0
    %v2952 = vadd.f32 %v2887, %v2906
    %v2953 = vadd.f32 %v2888, %v2920
    %v2954 = vadd.f32 %v2889, %v2934
    %v2955 = vadd.f32 %v2890, %v2948
    %v2956 = vadd.f32 %v2891, %v2908
    %v2957 = vadd.f32 %v2892, %v2922
    %v2958 = vadd.f32 %v2893, %v2936
    %v2959 = vadd.f32 %v2894, %v2950
    %v2960 = vmul.f32 %v2952, 0.5
    %v2961 = vmul.f32 %v2956, 0.5
    %v2962 = vtanh.pop %v2960
    %v2963 = vtanh.pop %v2961
    %v2964 = vmul.f32 %v2962, 0.5
    %v2965 = vmul.f32 %v2963, 0.5
    %v2966 = vadd.f32 %v2964, 0.5
    %v2967 = vadd.f32 %v2965, 0.5
    %v2968 = vmul.f32 %v2953, 0.5
    %v2969 = vmul.f32 %v2957, 0.5
    %v2970 = vtanh.pop %v2968
    %v2971 = vtanh.pop %v2969
    %v2972 = vmul.f32 %v2970, 0.5
    %v2973 = vmul.f32 %v2971, 0.5
    %v2974 = vadd.f32 %v2972, 0.5
    %v2975 = vadd.f32 %v2973, 0.5
    %v2976 = vtanh.pop %v2954
    %v2977 = vtanh.pop %v2958
    %v2978 = vmul.f32 %v2955, 0.5
    %v2979 = vmul.f32 %v2959, 0.5
    %v2980 = vtanh.pop %v2978
    %v2981 = vtanh.pop %v2979
    %v2982 = vmul.f32 %v2980, 0.5
    %v2983 = vmul.f32 %v2981, 0.5
    %v2984 = vadd.f32 %v2982, 0.5
    %v2985 = vadd.f32 %v2983, 0.5
    %v2986 = vmul.f32 %v2974, %v2869
    %v2987 = vmul.f32 %v2975, %v2870
    %v2988 = vmul.f32 %v2966, %v2976
    %v2989 = vmul.f32 %v2967, %v2977
    %v2990 = vadd.f32 %v2986, %v2988
    %v2991 = vadd.f32 %v2987, %v2989
    %v2992 = vtanh.pop %v2990
    %v2993 = vtanh.pop %v2991
    %v2994 = vmul.f32 %v2984, %v2992
    %v2995 = vmul.f32 %v2985, %v2993
    %v2996 = vld [vmem:[%s1245] sm:$0xff]
    %v2997 = vld [vmem:[%s1245 + $0x8] sm:$0xff]
    %v2998 = vld [vmem:[%s1245 + $0x10] sm:$0xff]
    %v2999 = vld [vmem:[%s1245 + $0x18] sm:$0xff]
    %v3000 = vunpack.c.l.bf16 %v2996
    %v3001 = vunpack.c.h.bf16 %v2996
    %v3002 = vunpack.c.l.bf16 %v2997
    %v3003 = vunpack.c.h.bf16 %v2997
    %v3004 = vunpack.c.l.bf16 %v2998
    %v3005 = vunpack.c.h.bf16 %v2998
    %v3006 = vunpack.c.l.bf16 %v2999
    %v3007 = vunpack.c.h.bf16 %v2999
    %v3008 = vadd.f32 %v3000, %v2477
    %v3009 = vadd.f32 %v3001, %v2478
    %v3010 = vadd.f32 %v3002, %v2479
    %v3011 = vadd.f32 %v3003, %v2480
    %v3012 = vadd.f32 %v3004, %v2477
    %v3013 = vadd.f32 %v3005, %v2478
    %v3014 = vadd.f32 %v3006, %v2479
    %v3015 = vadd.f32 %v3007, %v2480
    %v3016 = vpack.c.bf16 %v2995, %v2994
    %3017 = vmatpush.bf16.msra.mxu0 %v2618
    %3018 = vmatpush.bf16.msra.mxu0 %v2614
    %3019 = vmatpush.bf16.msra.mxu0 %v2610
    %3020 = vmatpush.bf16.msra.mxu0 %v2606
    %3021 = vmatpush.bf16.msra.mxu0 %v2602
    %3022 = vmatpush.bf16.msra.mxu0 %v2598
    %3023 = vmatpush.bf16.msra.mxu0 %v2594
    %3024 = vmatpush.bf16.msra.mxu0 %v2590
    %3025 = vmatmul.bf16.gmra.mxu0 %v3016
    %v3026 = vpop.f32.mrf.mxu0
    %v3027 = vadd.f32 0.0, %v3026
    %v3028 = vpop.f32.mrf.mxu0
    %v3029 = vadd.f32 0.0, %v3028
    %3030 = vdwg.mxu0
    %3031 = vmatpush.bf16.msra.mxu0 %v2619
    %3032 = vmatpush.bf16.msra.mxu0 %v2615
    %3033 = vmatpush.bf16.msra.mxu0 %v2611
    %3034 = vmatpush.bf16.msra.mxu0 %v2607
    %3035 = vmatpush.bf16.msra.mxu0 %v2603
    %3036 = vmatpush.bf16.msra.mxu0 %v2599
    %3037 = vmatpush.bf16.msra.mxu0 %v2595
    %3038 = vmatpush.bf16.msra.mxu0 %v2591
    %3039 = vmatmul.bf16.gmra.mxu0 %v3016
    %v3040 = vpop.f32.mrf.mxu0
    %v3041 = vadd.f32 0.0, %v3040
    %v3042 = vpop.f32.mrf.mxu0
    %v3043 = vadd.f32 0.0, %v3042
    %3044 = vdwg.mxu0
    %3045 = vmatpush.bf16.msra.mxu0 %v2620
    %3046 = vmatpush.bf16.msra.mxu0 %v2616
    %3047 = vmatpush.bf16.msra.mxu0 %v2612
    %3048 = vmatpush.bf16.msra.mxu0 %v2608
    %3049 = vmatpush.bf16.msra.mxu0 %v2604
    %3050 = vmatpush.bf16.msra.mxu0 %v2600
    %3051 = vmatpush.bf16.msra.mxu0 %v2596
    %3052 = vmatpush.bf16.msra.mxu0 %v2592
    %3053 = vmatmul.bf16.gmra.mxu0 %v3016
    %v3054 = vpop.f32.mrf.mxu0
    %v3055 = vadd.f32 0.0, %v3054
    %v3056 = vpop.f32.mrf.mxu0
    %v3057 = vadd.f32 0.0, %v3056
    %3058 = vdwg.mxu0
    %3059 = vmatpush.bf16.msra.mxu0 %v2621
    %3060 = vmatpush.bf16.msra.mxu0 %v2617
    %3061 = vmatpush.bf16.msra.mxu0 %v2613
    %3062 = vmatpush.bf16.msra.mxu0 %v2609
    %3063 = vmatpush.bf16.msra.mxu0 %v2605
    %3064 = vmatpush.bf16.msra.mxu0 %v2601
    %3065 = vmatpush.bf16.msra.mxu0 %v2597
    %3066 = vmatpush.bf16.msra.mxu0 %v2593
    %3067 = vmatmul.bf16.gmra.mxu0 %v3016
    %v3068 = vpop.f32.mrf.mxu0
    %v3069 = vadd.f32 0.0, %v3068
    %v3070 = vpop.f32.mrf.mxu0
    %v3071 = vadd.f32 0.0, %v3070
    %3072 = vdwg.mxu0
    %v3073 = vadd.f32 %v3008, %v3027
    %v3074 = vadd.f32 %v3009, %v3041
    %v3075 = vadd.f32 %v3010, %v3055
    %v3076 = vadd.f32 %v3011, %v3069
    %v3077 = vadd.f32 %v3012, %v3029
    %v3078 = vadd.f32 %v3013, %v3043
    %v3079 = vadd.f32 %v3014, %v3057
    %v3080 = vadd.f32 %v3015, %v3071
    %v3081 = vmul.f32 %v3073, 0.5
    %v3082 = vmul.f32 %v3077, 0.5
    %v3083 = vtanh.pop %v3081
    %v3084 = vtanh.pop %v3082
    %v3085 = vmul.f32 %v3083, 0.5
    %v3086 = vmul.f32 %v3084, 0.5
    %v3087 = vadd.f32 %v3085, 0.5
    %v3088 = vadd.f32 %v3086, 0.5
    %v3089 = vmul.f32 %v3074, 0.5
    %v3090 = vmul.f32 %v3078, 0.5
    %v3091 = vtanh.pop %v3089
    %v3092 = vtanh.pop %v3090
    %v3093 = vmul.f32 %v3091, 0.5
    %v3094 = vmul.f32 %v3092, 0.5
    %v3095 = vadd.f32 %v3093, 0.5
    %v3096 = vadd.f32 %v3094, 0.5
    %v3097 = vtanh.pop %v3075
    %v3098 = vtanh.pop %v3079
    %v3099 = vmul.f32 %v3076, 0.5
    %v3100 = vmul.f32 %v3080, 0.5
    %v3101 = vtanh.pop %v3099
    %v3102 = vtanh.pop %v3100
    %v3103 = vmul.f32 %v3101, 0.5
    %v3104 = vmul.f32 %v3102, 0.5
    %v3105 = vadd.f32 %v3103, 0.5
    %v3106 = vadd.f32 %v3104, 0.5
    %v3107 = vmul.f32 %v3095, %v2990
    %v3108 = vmul.f32 %v3096, %v2991
    %v3109 = vmul.f32 %v3087, %v3097
    %v3110 = vmul.f32 %v3088, %v3098
    %v3111 = vadd.f32 %v3107, %v3109
    %v3112 = vadd.f32 %v3108, %v3110
    %v3113 = vtanh.pop %v3111
    %v3114 = vtanh.pop %v3112
    %v3115 = vmul.f32 %v3105, %v3113
    %v3116 = vmul.f32 %v3106, %v3114
    %v3117 = vld [vmem:[%s1377] sm:$0xff]
    %v3118 = vld [vmem:[%s1377 + $0x8] sm:$0xff]
    %v3119 = vld [vmem:[%s1377 + $0x10] sm:$0xff]
    %v3120 = vld [vmem:[%s1377 + $0x18] sm:$0xff]
    %v3121 = vunpack.c.l.bf16 %v3117
    %v3122 = vunpack.c.h.bf16 %v3117
    %v3123 = vunpack.c.l.bf16 %v3118
    %v3124 = vunpack.c.h.bf16 %v3118
    %v3125 = vunpack.c.l.bf16 %v3119
    %v3126 = vunpack.c.h.bf16 %v3119
    %v3127 = vunpack.c.l.bf16 %v3120
    %v3128 = vunpack.c.h.bf16 %v3120
    %v3129 = vadd.f32 %v3121, %v2477
    %v3130 = vadd.f32 %v3122, %v2478
    %v3131 = vadd.f32 %v3123, %v2479
    %v3132 = vadd.f32 %v3124, %v2480
    %v3133 = vadd.f32 %v3125, %v2477
    %v3134 = vadd.f32 %v3126, %v2478
    %v3135 = vadd.f32 %v3127, %v2479
    %v3136 = vadd.f32 %v3128, %v2480
    %v3137 = vpack.c.bf16 %v3116, %v3115
    %3138 = vmatpush.bf16.msra.mxu0 %v2618
    %3139 = vmatpush.bf16.msra.mxu0 %v2614
    %3140 = vmatpush.bf16.msra.mxu0 %v2610
    %3141 = vmatpush.bf16.msra.mxu0 %v2606
    %3142 = vmatpush.bf16.msra.mxu0 %v2602
    %3143 = vmatpush.bf16.msra.mxu0 %v2598
    %3144 = vmatpush.bf16.msra.mxu0 %v2594
    %3145 = vmatpush.bf16.msra.mxu0 %v2590
    %3146 = vmatmul.bf16.gmra.mxu0 %v3137
    %v3147 = vpop.f32.mrf.mxu0
    %v3148 = vadd.f32 0.0, %v3147
    %v3149 = vpop.f32.mrf.mxu0
    %v3150 = vadd.f32 0.0, %v3149
    %3151 = vdwg.mxu0
    %3152 = vmatpush.bf16.msra.mxu0 %v2619
    %3153 = vmatpush.bf16.msra.mxu0 %v2615
    %3154 = vmatpush.bf16.msra.mxu0 %v2611
    %3155 = vmatpush.bf16.msra.mxu0 %v2607
    %3156 = vmatpush.bf16.msra.mxu0 %v2603
    %3157 = vmatpush.bf16.msra.mxu0 %v2599
    %3158 = vmatpush.bf16.msra.mxu0 %v2595
    %3159 = vmatpush.bf16.msra.mxu0 %v2591
    %3160 = vmatmul.bf16.gmra.mxu0 %v3137
    %v3161 = vpop.f32.mrf.mxu0
    %v3162 = vadd.f32 0.0, %v3161
    %v3163 = vpop.f32.mrf.mxu0
    %v3164 = vadd.f32 0.0, %v3163
    %3165 = vdwg.mxu0
    %3166 = vmatpush.bf16.msra.mxu0 %v2620
    %3167 = vmatpush.bf16.msra.mxu0 %v2616
    %3168 = vmatpush.bf16.msra.mxu0 %v2612
    %3169 = vmatpush.bf16.msra.mxu0 %v2608
    %3170 = vmatpush.bf16.msra.mxu0 %v2604
    %3171 = vmatpush.bf16.msra.mxu0 %v2600
    %3172 = vmatpush.bf16.msra.mxu0 %v2596
    %3173 = vmatpush.bf16.msra.mxu0 %v2592
    %3174 = vmatmul.bf16.gmra.mxu0 %v3137
    %v3175 = vpop.f32.mrf.mxu0
    %v3176 = vadd.f32 0.0, %v3175
    %v3177 = vpop.f32.mrf.mxu0
    %v3178 = vadd.f32 0.0, %v3177
    %3179 = vdwg.mxu0
    %3180 = vmatpush.bf16.msra.mxu0 %v2621
    %3181 = vmatpush.bf16.msra.mxu0 %v2617
    %3182 = vmatpush.bf16.msra.mxu0 %v2613
    %3183 = vmatpush.bf16.msra.mxu0 %v2609
    %3184 = vmatpush.bf16.msra.mxu0 %v2605
    %3185 = vmatpush.bf16.msra.mxu0 %v2601
    %3186 = vmatpush.bf16.msra.mxu0 %v2597
    %3187 = vmatpush.bf16.msra.mxu0 %v2593
    %3188 = vmatmul.bf16.gmra.mxu0 %v3137
    %v3189 = vpop.f32.mrf.mxu0
    %v3190 = vadd.f32 0.0, %v3189
    %v3191 = vpop.f32.mrf.mxu0
    %v3192 = vadd.f32 0.0, %v3191
    %3193 = vdwg.mxu0
    %v3194 = vadd.f32 %v3129, %v3148
    %v3195 = vadd.f32 %v3130, %v3162
    %v3196 = vadd.f32 %v3131, %v3176
    %v3197 = vadd.f32 %v3132, %v3190
    %v3198 = vadd.f32 %v3133, %v3150
    %v3199 = vadd.f32 %v3134, %v3164
    %v3200 = vadd.f32 %v3135, %v3178
    %v3201 = vadd.f32 %v3136, %v3192
    %v3202 = vmul.f32 %v3194, 0.5
    %v3203 = vmul.f32 %v3198, 0.5
    %v3204 = vtanh.pop %v3202
    %v3205 = vtanh.pop %v3203
    %v3206 = vmul.f32 %v3204, 0.5
    %v3207 = vmul.f32 %v3205, 0.5
    %v3208 = vadd.f32 %v3206, 0.5
    %v3209 = vadd.f32 %v3207, 0.5
    %v3210 = vmul.f32 %v3195, 0.5
    %v3211 = vmul.f32 %v3199, 0.5
    %v3212 = vtanh.pop %v3210
    %v3213 = vtanh.pop %v3211
    %v3214 = vmul.f32 %v3212, 0.5
    %v3215 = vmul.f32 %v3213, 0.5
    %v3216 = vadd.f32 %v3214, 0.5
    %v3217 = vadd.f32 %v3215, 0.5
    %v3218 = vtanh.pop %v3196
    %v3219 = vtanh.pop %v3200
    %v3220 = vmul.f32 %v3197, 0.5
    %v3221 = vmul.f32 %v3201, 0.5
    %v3222 = vtanh.pop %v3220
    %v3223 = vtanh.pop %v3221
    %v3224 = vmul.f32 %v3222, 0.5
    %v3225 = vmul.f32 %v3223, 0.5
    %v3226 = vadd.f32 %v3224, 0.5
    %v3227 = vadd.f32 %v3225, 0.5
    %v3228 = vmul.f32 %v3216, %v3111
    %v3229 = vmul.f32 %v3217, %v3112
    %v3230 = vmul.f32 %v3208, %v3218
    %v3231 = vmul.f32 %v3209, %v3219
    %v3232 = vadd.f32 %v3228, %v3230
    %v3233 = vadd.f32 %v3229, %v3231
    %v3234 = vtanh.pop %v3232
    %v3235 = vtanh.pop %v3233
    %v3236 = vmul.f32 %v3226, %v3234
    %v3237 = vmul.f32 %v3227, %v3235
    %v3238 = vld [vmem:[%s1509] sm:$0xff]
    %v3239 = vld [vmem:[%s1509 + $0x8] sm:$0xff]
    %v3240 = vld [vmem:[%s1509 + $0x10] sm:$0xff]
    %v3241 = vld [vmem:[%s1509 + $0x18] sm:$0xff]
    %v3242 = vunpack.c.l.bf16 %v3238
    %v3243 = vunpack.c.h.bf16 %v3238
    %v3244 = vunpack.c.l.bf16 %v3239
    %v3245 = vunpack.c.h.bf16 %v3239
    %v3246 = vunpack.c.l.bf16 %v3240
    %v3247 = vunpack.c.h.bf16 %v3240
    %v3248 = vunpack.c.l.bf16 %v3241
    %v3249 = vunpack.c.h.bf16 %v3241
    %v3250 = vadd.f32 %v3242, %v2477
    %v3251 = vadd.f32 %v3243, %v2478
    %v3252 = vadd.f32 %v3244, %v2479
    %v3253 = vadd.f32 %v3245, %v2480
    %v3254 = vadd.f32 %v3246, %v2477
    %v3255 = vadd.f32 %v3247, %v2478
    %v3256 = vadd.f32 %v3248, %v2479
    %v3257 = vadd.f32 %v3249, %v2480
    %v3258 = vpack.c.bf16 %v3237, %v3236
    %3259 = vmatpush.bf16.msra.mxu0 %v2618
    %3260 = vmatpush.bf16.msra.mxu0 %v2614
    %3261 = vmatpush.bf16.msra.mxu0 %v2610
    %3262 = vmatpush.bf16.msra.mxu0 %v2606
    %3263 = vmatpush.bf16.msra.mxu0 %v2602
    %3264 = vmatpush.bf16.msra.mxu0 %v2598
    %3265 = vmatpush.bf16.msra.mxu0 %v2594
    %3266 = vmatpush.bf16.msra.mxu0 %v2590
    %3267 = vmatmul.bf16.gmra.mxu0 %v3258
    %v3268 = vpop.f32.mrf.mxu0
    %v3269 = vadd.f32 0.0, %v3268
    %v3270 = vpop.f32.mrf.mxu0
    %v3271 = vadd.f32 0.0, %v3270
    %3272 = vdwg.mxu0
    %3273 = vmatpush.bf16.msra.mxu0 %v2619
    %3274 = vmatpush.bf16.msra.mxu0 %v2615
    %3275 = vmatpush.bf16.msra.mxu0 %v2611
    %3276 = vmatpush.bf16.msra.mxu0 %v2607
    %3277 = vmatpush.bf16.msra.mxu0 %v2603
    %3278 = vmatpush.bf16.msra.mxu0 %v2599
    %3279 = vmatpush.bf16.msra.mxu0 %v2595
    %3280 = vmatpush.bf16.msra.mxu0 %v2591
    %3281 = vmatmul.bf16.gmra.mxu0 %v3258
    %v3282 = vpop.f32.mrf.mxu0
    %v3283 = vadd.f32 0.0, %v3282
    %v3284 = vpop.f32.mrf.mxu0
    %v3285 = vadd.f32 0.0, %v3284
    %3286 = vdwg.mxu0
    %3287 = vmatpush.bf16.msra.mxu0 %v2620
    %3288 = vmatpush.bf16.msra.mxu0 %v2616
    %3289 = vmatpush.bf16.msra.mxu0 %v2612
    %3290 = vmatpush.bf16.msra.mxu0 %v2608
    %3291 = vmatpush.bf16.msra.mxu0 %v2604
    %3292 = vmatpush.bf16.msra.mxu0 %v2600
    %3293 = vmatpush.bf16.msra.mxu0 %v2596
    %3294 = vmatpush.bf16.msra.mxu0 %v2592
    %3295 = vmatmul.bf16.gmra.mxu0 %v3258
    %v3296 = vpop.f32.mrf.mxu0
    %v3297 = vadd.f32 0.0, %v3296
    %v3298 = vpop.f32.mrf.mxu0
    %v3299 = vadd.f32 0.0, %v3298
    %3300 = vdwg.mxu0
    %3301 = vmatpush.bf16.msra.mxu0 %v2621
    %3302 = vmatpush.bf16.msra.mxu0 %v2617
    %3303 = vmatpush.bf16.msra.mxu0 %v2613
    %3304 = vmatpush.bf16.msra.mxu0 %v2609
    %3305 = vmatpush.bf16.msra.mxu0 %v2605
    %3306 = vmatpush.bf16.msra.mxu0 %v2601
    %3307 = vmatpush.bf16.msra.mxu0 %v2597
    %3308 = vmatpush.bf16.msra.mxu0 %v2593
    %3309 = vmatmul.bf16.gmra.mxu0 %v3258
    %v3310 = vpop.f32.mrf.mxu0
    %v3311 = vadd.f32 0.0, %v3310
    %v3312 = vpop.f32.mrf.mxu0
    %v3313 = vadd.f32 0.0, %v3312
    %3314 = vdwg.mxu0
    %v3315 = vadd.f32 %v3250, %v3269
    %v3316 = vadd.f32 %v3251, %v3283
    %v3317 = vadd.f32 %v3252, %v3297
    %v3318 = vadd.f32 %v3253, %v3311
    %v3319 = vadd.f32 %v3254, %v3271
    %v3320 = vadd.f32 %v3255, %v3285
    %v3321 = vadd.f32 %v3256, %v3299
    %v3322 = vadd.f32 %v3257, %v3313
    %v3323 = vmul.f32 %v3315, 0.5
    %v3324 = vmul.f32 %v3319, 0.5
    %v3325 = vtanh.pop %v3323
    %v3326 = vtanh.pop %v3324
    %v3327 = vmul.f32 %v3325, 0.5
    %v3328 = vmul.f32 %v3326, 0.5
    %v3329 = vadd.f32 %v3327, 0.5
    %v3330 = vadd.f32 %v3328, 0.5
    %v3331 = vmul.f32 %v3316, 0.5
    %v3332 = vmul.f32 %v3320, 0.5
    %v3333 = vtanh.pop %v3331
    %v3334 = vtanh.pop %v3332
    %v3335 = vmul.f32 %v3333, 0.5
    %v3336 = vmul.f32 %v3334, 0.5
    %v3337 = vadd.f32 %v3335, 0.5
    %v3338 = vadd.f32 %v3336, 0.5
    %v3339 = vtanh.pop %v3317
    %v3340 = vtanh.pop %v3321
    %v3341 = vmul.f32 %v3318, 0.5
    %v3342 = vmul.f32 %v3322, 0.5
    %v3343 = vtanh.pop %v3341
    %v3344 = vtanh.pop %v3342
    %v3345 = vmul.f32 %v3343, 0.5
    %v3346 = vmul.f32 %v3344, 0.5
    %v3347 = vadd.f32 %v3345, 0.5
    %v3348 = vadd.f32 %v3346, 0.5
    %v3349 = vmul.f32 %v3337, %v3232
    %v3350 = vmul.f32 %v3338, %v3233
    %v3351 = vmul.f32 %v3329, %v3339
    %v3352 = vmul.f32 %v3330, %v3340
    %v3353 = vadd.f32 %v3349, %v3351
    %v3354 = vadd.f32 %v3350, %v3352
    %v3355 = vtanh.pop %v3353
    %v3356 = vtanh.pop %v3354
    %v3357 = vmul.f32 %v3347, %v3355
    %v3358 = vmul.f32 %v3348, %v3356
    %v3359 = vld [vmem:[%s1641] sm:$0xff]
    %v3360 = vld [vmem:[%s1641 + $0x8] sm:$0xff]
    %v3361 = vld [vmem:[%s1641 + $0x10] sm:$0xff]
    %v3362 = vld [vmem:[%s1641 + $0x18] sm:$0xff]
    %v3363 = vunpack.c.l.bf16 %v3359
    %v3364 = vunpack.c.h.bf16 %v3359
    %v3365 = vunpack.c.l.bf16 %v3360
    %v3366 = vunpack.c.h.bf16 %v3360
    %v3367 = vunpack.c.l.bf16 %v3361
    %v3368 = vunpack.c.h.bf16 %v3361
    %v3369 = vunpack.c.l.bf16 %v3362
    %v3370 = vunpack.c.h.bf16 %v3362
    %v3371 = vadd.f32 %v3363, %v2477
    %v3372 = vadd.f32 %v3364, %v2478
    %v3373 = vadd.f32 %v3365, %v2479
    %v3374 = vadd.f32 %v3366, %v2480
    %v3375 = vadd.f32 %v3367, %v2477
    %v3376 = vadd.f32 %v3368, %v2478
    %v3377 = vadd.f32 %v3369, %v2479
    %v3378 = vadd.f32 %v3370, %v2480
    %v3379 = vpack.c.bf16 %v3358, %v3357
    %3380 = vmatpush.bf16.msra.mxu0 %v2618
    %3381 = vmatpush.bf16.msra.mxu0 %v2614
    %3382 = vmatpush.bf16.msra.mxu0 %v2610
    %3383 = vmatpush.bf16.msra.mxu0 %v2606
    %3384 = vmatpush.bf16.msra.mxu0 %v2602
    %3385 = vmatpush.bf16.msra.mxu0 %v2598
    %3386 = vmatpush.bf16.msra.mxu0 %v2594
    %3387 = vmatpush.bf16.msra.mxu0 %v2590
    %3388 = vmatmul.bf16.gmra.mxu0 %v3379
    %v3389 = vpop.f32.mrf.mxu0
    %v3390 = vadd.f32 0.0, %v3389
    %v3391 = vpop.f32.mrf.mxu0
    %v3392 = vadd.f32 0.0, %v3391
    %3393 = vdwg.mxu0
    %3394 = vmatpush.bf16.msra.mxu0 %v2619
    %3395 = vmatpush.bf16.msra.mxu0 %v2615
    %3396 = vmatpush.bf16.msra.mxu0 %v2611
    %3397 = vmatpush.bf16.msra.mxu0 %v2607
    %3398 = vmatpush.bf16.msra.mxu0 %v2603
    %3399 = vmatpush.bf16.msra.mxu0 %v2599
    %3400 = vmatpush.bf16.msra.mxu0 %v2595
    %3401 = vmatpush.bf16.msra.mxu0 %v2591
    %3402 = vmatmul.bf16.gmra.mxu0 %v3379
    %v3403 = vpop.f32.mrf.mxu0
    %v3404 = vadd.f32 0.0, %v3403
    %v3405 = vpop.f32.mrf.mxu0
    %v3406 = vadd.f32 0.0, %v3405
    %3407 = vdwg.mxu0
    %3408 = vmatpush.bf16.msra.mxu0 %v2620
    %3409 = vmatpush.bf16.msra.mxu0 %v2616
    %3410 = vmatpush.bf16.msra.mxu0 %v2612
    %3411 = vmatpush.bf16.msra.mxu0 %v2608
    %3412 = vmatpush.bf16.msra.mxu0 %v2604
    %3413 = vmatpush.bf16.msra.mxu0 %v2600
    %3414 = vmatpush.bf16.msra.mxu0 %v2596
    %3415 = vmatpush.bf16.msra.mxu0 %v2592
    %3416 = vmatmul.bf16.gmra.mxu0 %v3379
    %v3417 = vpop.f32.mrf.mxu0
    %v3418 = vadd.f32 0.0, %v3417
    %v3419 = vpop.f32.mrf.mxu0
    %v3420 = vadd.f32 0.0, %v3419
    %3421 = vdwg.mxu0
    %3422 = vmatpush.bf16.msra.mxu0 %v2621
    %3423 = vmatpush.bf16.msra.mxu0 %v2617
    %3424 = vmatpush.bf16.msra.mxu0 %v2613
    %3425 = vmatpush.bf16.msra.mxu0 %v2609
    %3426 = vmatpush.bf16.msra.mxu0 %v2605
    %3427 = vmatpush.bf16.msra.mxu0 %v2601
    %3428 = vmatpush.bf16.msra.mxu0 %v2597
    %3429 = vmatpush.bf16.msra.mxu0 %v2593
    %3430 = vmatmul.bf16.gmra.mxu0 %v3379
    %v3431 = vpop.f32.mrf.mxu0
    %v3432 = vadd.f32 0.0, %v3431
    %v3433 = vpop.f32.mrf.mxu0
    %v3434 = vadd.f32 0.0, %v3433
    %3435 = vdwg.mxu0
    %v3436 = vadd.f32 %v3371, %v3390
    %v3437 = vadd.f32 %v3372, %v3404
    %v3438 = vadd.f32 %v3373, %v3418
    %v3439 = vadd.f32 %v3374, %v3432
    %v3440 = vadd.f32 %v3375, %v3392
    %v3441 = vadd.f32 %v3376, %v3406
    %v3442 = vadd.f32 %v3377, %v3420
    %v3443 = vadd.f32 %v3378, %v3434
    %v3444 = vmul.f32 %v3436, 0.5
    %v3445 = vmul.f32 %v3440, 0.5
    %v3446 = vtanh.pop %v3444
    %v3447 = vtanh.pop %v3445
    %v3448 = vmul.f32 %v3446, 0.5
    %v3449 = vmul.f32 %v3447, 0.5
    %v3450 = vadd.f32 %v3448, 0.5
    %v3451 = vadd.f32 %v3449, 0.5
    %v3452 = vmul.f32 %v3437, 0.5
    %v3453 = vmul.f32 %v3441, 0.5
    %v3454 = vtanh.pop %v3452
    %v3455 = vtanh.pop %v3453
    %v3456 = vmul.f32 %v3454, 0.5
    %v3457 = vmul.f32 %v3455, 0.5
    %v3458 = vadd.f32 %v3456, 0.5
    %v3459 = vadd.f32 %v3457, 0.5
    %v3460 = vtanh.pop %v3438
    %v3461 = vtanh.pop %v3442
    %v3462 = vmul.f32 %v3439, 0.5
    %v3463 = vmul.f32 %v3443, 0.5
    %v3464 = vtanh.pop %v3462
    %v3465 = vtanh.pop %v3463
    %v3466 = vmul.f32 %v3464, 0.5
    %v3467 = vmul.f32 %v3465, 0.5
    %v3468 = vadd.f32 %v3466, 0.5
    %v3469 = vadd.f32 %v3467, 0.5
    %v3470 = vmul.f32 %v3458, %v3353
    %v3471 = vmul.f32 %v3459, %v3354
    %v3472 = vmul.f32 %v3450, %v3460
    %v3473 = vmul.f32 %v3451, %v3461
    %v3474 = vadd.f32 %v3470, %v3472
    %v3475 = vadd.f32 %v3471, %v3473
    %v3476 = vtanh.pop %v3474
    %v3477 = vtanh.pop %v3475
    %v3478 = vmul.f32 %v3468, %v3476
    %v3479 = vmul.f32 %v3469, %v3477
    %v3480 = vld [vmem:[%s1773] sm:$0xff]
    %v3481 = vld [vmem:[%s1773 + $0x8] sm:$0xff]
    %v3482 = vld [vmem:[%s1773 + $0x10] sm:$0xff]
    %v3483 = vld [vmem:[%s1773 + $0x18] sm:$0xff]
    %v3484 = vunpack.c.l.bf16 %v3480
    %v3485 = vunpack.c.h.bf16 %v3480
    %v3486 = vunpack.c.l.bf16 %v3481
    %v3487 = vunpack.c.h.bf16 %v3481
    %v3488 = vunpack.c.l.bf16 %v3482
    %v3489 = vunpack.c.h.bf16 %v3482
    %v3490 = vunpack.c.l.bf16 %v3483
    %v3491 = vunpack.c.h.bf16 %v3483
    %v3492 = vadd.f32 %v3484, %v2477
    %v3493 = vadd.f32 %v3485, %v2478
    %v3494 = vadd.f32 %v3486, %v2479
    %v3495 = vadd.f32 %v3487, %v2480
    %v3496 = vadd.f32 %v3488, %v2477
    %v3497 = vadd.f32 %v3489, %v2478
    %v3498 = vadd.f32 %v3490, %v2479
    %v3499 = vadd.f32 %v3491, %v2480
    %v3500 = vpack.c.bf16 %v3479, %v3478
    %3501 = vmatpush.bf16.msra.mxu0 %v2618
    %3502 = vmatpush.bf16.msra.mxu0 %v2614
    %3503 = vmatpush.bf16.msra.mxu0 %v2610
    %3504 = vmatpush.bf16.msra.mxu0 %v2606
    %3505 = vmatpush.bf16.msra.mxu0 %v2602
    %3506 = vmatpush.bf16.msra.mxu0 %v2598
    %3507 = vmatpush.bf16.msra.mxu0 %v2594
    %3508 = vmatpush.bf16.msra.mxu0 %v2590
    %3509 = vmatmul.bf16.gmra.mxu0 %v3500
    %v3510 = vpop.f32.mrf.mxu0
    %v3511 = vadd.f32 0.0, %v3510
    %v3512 = vpop.f32.mrf.mxu0
    %v3513 = vadd.f32 0.0, %v3512
    %3514 = vdwg.mxu0
    %3515 = vmatpush.bf16.msra.mxu0 %v2619
    %3516 = vmatpush.bf16.msra.mxu0 %v2615
    %3517 = vmatpush.bf16.msra.mxu0 %v2611
    %3518 = vmatpush.bf16.msra.mxu0 %v2607
    %3519 = vmatpush.bf16.msra.mxu0 %v2603
    %3520 = vmatpush.bf16.msra.mxu0 %v2599
    %3521 = vmatpush.bf16.msra.mxu0 %v2595
    %3522 = vmatpush.bf16.msra.mxu0 %v2591
    %3523 = vmatmul.bf16.gmra.mxu0 %v3500
    %v3524 = vpop.f32.mrf.mxu0
    %v3525 = vadd.f32 0.0, %v3524
    %v3526 = vpop.f32.mrf.mxu0
    %v3527 = vadd.f32 0.0, %v3526
    %3528 = vdwg.mxu0
    %3529 = vmatpush.bf16.msra.mxu0 %v2620
    %3530 = vmatpush.bf16.msra.mxu0 %v2616
    %3531 = vmatpush.bf16.msra.mxu0 %v2612
    %3532 = vmatpush.bf16.msra.mxu0 %v2608
    %3533 = vmatpush.bf16.msra.mxu0 %v2604
    %3534 = vmatpush.bf16.msra.mxu0 %v2600
    %3535 = vmatpush.bf16.msra.mxu0 %v2596
    %3536 = vmatpush.bf16.msra.mxu0 %v2592
    %3537 = vmatmul.bf16.gmra.mxu0 %v3500
    %v3538 = vpop.f32.mrf.mxu0
    %v3539 = vadd.f32 0.0, %v3538
    %v3540 = vpop.f32.mrf.mxu0
    %v3541 = vadd.f32 0.0, %v3540
    %3542 = vdwg.mxu0
    %3543 = vmatpush.bf16.msra.mxu0 %v2621
    %3544 = vmatpush.bf16.msra.mxu0 %v2617
    %3545 = vmatpush.bf16.msra.mxu0 %v2613
    %3546 = vmatpush.bf16.msra.mxu0 %v2609
    %3547 = vmatpush.bf16.msra.mxu0 %v2605
    %3548 = vmatpush.bf16.msra.mxu0 %v2601
    %3549 = vmatpush.bf16.msra.mxu0 %v2597
    %3550 = vmatpush.bf16.msra.mxu0 %v2593
    %3551 = vmatmul.bf16.gmra.mxu0 %v3500
    %v3552 = vpop.f32.mrf.mxu0
    %v3553 = vadd.f32 0.0, %v3552
    %v3554 = vpop.f32.mrf.mxu0
    %v3555 = vadd.f32 0.0, %v3554
    %3556 = vdwg.mxu0
    %v3557 = vadd.f32 %v3492, %v3511
    %v3558 = vadd.f32 %v3493, %v3525
    %v3559 = vadd.f32 %v3494, %v3539
    %v3560 = vadd.f32 %v3495, %v3553
    %v3561 = vadd.f32 %v3496, %v3513
    %v3562 = vadd.f32 %v3497, %v3527
    %v3563 = vadd.f32 %v3498, %v3541
    %v3564 = vadd.f32 %v3499, %v3555
    %v3565 = vmul.f32 %v3557, 0.5
    %v3566 = vmul.f32 %v3561, 0.5
    %v3567 = vtanh.pop %v3565
    %v3568 = vtanh.pop %v3566
    %v3569 = vmul.f32 %v3567, 0.5
    %v3570 = vmul.f32 %v3568, 0.5
    %v3571 = vadd.f32 %v3569, 0.5
    %v3572 = vadd.f32 %v3570, 0.5
    %v3573 = vmul.f32 %v3558, 0.5
    %v3574 = vmul.f32 %v3562, 0.5
    %v3575 = vtanh.pop %v3573
    %v3576 = vtanh.pop %v3574
    %v3577 = vmul.f32 %v3575, 0.5
    %v3578 = vmul.f32 %v3576, 0.5
    %v3579 = vadd.f32 %v3577, 0.5
    %v3580 = vadd.f32 %v3578, 0.5
    %v3581 = vtanh.pop %v3559
    %v3582 = vtanh.pop %v3563
    %v3583 = vmul.f32 %v3560, 0.5
    %v3584 = vmul.f32 %v3564, 0.5
    %v3585 = vtanh.pop %v3583
    %v3586 = vtanh.pop %v3584
    %v3587 = vmul.f32 %v3585, 0.5
    %v3588 = vmul.f32 %v3586, 0.5
    %v3589 = vadd.f32 %v3587, 0.5
    %v3590 = vadd.f32 %v3588, 0.5
    %v3591 = vmul.f32 %v3579, %v3474
    %v3592 = vmul.f32 %v3580, %v3475
    %v3593 = vmul.f32 %v3571, %v3581
    %v3594 = vmul.f32 %v3572, %v3582
    %v3595 = vadd.f32 %v3591, %v3593
    %v3596 = vadd.f32 %v3592, %v3594
    %v3597 = vtanh.pop %v3595
    %v3598 = vtanh.pop %v3596
    %v3599 = vmul.f32 %v3589, %v3597
    %v3600 = vmul.f32 %v3590, %v3598
    %3601 = vst [vmem:[%s2458] sm:$0xff] %v3599
    %3602 = vst [vmem:[%s2458 + $0x8] sm:$0xff] %v3600
    %3603 = vst [vmem:[%s2461] sm:$0xff] %v3595
    %3604 = vst [vmem:[%s2461 + $0x8] sm:$0xff] %v3596
    // Predicated region
    $region58: #{tpu_custom_call.1} parent=1 // pred_check
      _
    $region59: #{tpu_custom_call.1} parent=1 // pred_check_branch
      %3606 = sbr.rel (0) target = $region61
    $region60: #{tpu_custom_call.1} parent=1 // pred_region
      %3608 = vsyncadd [#allocation6], 0
      %s3609 = sshll.u32 [#allocation15], 4
      %s3610 = int_to_ptr.vmem [resolvable:$true] %s3609
      %s3611 = sshll.u32 %s7, 4
      %s3612 = int_to_ptr.hbm [resolvable:$true] %s3611
      %3617 = dma.vmem_to_hbm [thread:$0]  %s3610, 512, %s3612, [#allocation6], 128, 128, 8
    $region61: #{tpu_custom_call.1} parent=1 // pred_fallthru
      _
    // Predicated region
    $region62: #{tpu_custom_call.1} parent=1 // pred_check
      _
    $region63: #{tpu_custom_call.1} parent=1 // pred_check_branch
      %3619 = sbr.rel (0) target = $region65
    $region64: #{tpu_custom_call.1} parent=1 // pred_region
      %3621 = vsyncadd [#allocation17], 0
      %s3622 = sshll.u32 [#allocation16], 4
      %s3623 = int_to_ptr.vmem [resolvable:$true] %s3622
      %s3624 = sshll.u32 %s8, 4
      %s3625 = int_to_ptr.hbm [resolvable:$true] %s3624
      %3630 = dma.vmem_to_hbm [thread:$0]  %s3623, 512, %s3625, [#allocation17], 128, 128, 8
    $region65: #{tpu_custom_call.1} parent=1 // pred_fallthru
      _
    // Predicated region
    $region66: #{tpu_custom_call.1} parent=1 // pred_check
      _
    $region67: #{tpu_custom_call.1} parent=1 // pred_check_branch
      %3632 = sbr.rel (0) target = $region69
    $region68: #{tpu_custom_call.1} parent=1 // pred_region
      %3634 = dma.done [#allocation6], 512
    $region69: #{tpu_custom_call.1} parent=1 // pred_fallthru
      _
    // Predicated region
    $region70: #{tpu_custom_call.1} parent=1 // pred_check
      _
    $region71: #{tpu_custom_call.1} parent=1 // pred_check_branch
      %3636 = sbr.rel (0) target = $region73
    $region72: #{tpu_custom_call.1} parent=1 // pred_region
      %3638 = dma.done [#allocation17], 512
    $region73: #{tpu_custom_call.1} parent=1 // pred_fallthru
      _
    %3639 = vsyncpa [#allocation5], 1
    %3640 = vsyncpa [#allocation8], 1
    %3641 = vsyncpa [#allocation11], 1
    %3642 = vsyncpa [#allocation14], 1
    %3643 = vsyncpa [#allocation6], 1
    %3644 = vsyncpa [#allocation17], 1

</llo_original>
